<compile_context>
chip_gen: v6e
topology: v6e:2x2x1
jax: 0.10.0
libtpu: 0.0.40
codegen_flags: <defaults>
</compile_context>

<pallas_src>
import functools

import jax
import jax.numpy as jnp
from jax.experimental import pallas as pl
from jax.experimental.pallas import tpu as pltpu


def _round_up(x, m):
    return ((x + m - 1) // m) * m


# -----------------------------------------------------------------------------
# Pallas kernel: full fused forward pass for one batch tile (4 matmuls).
# Weights are VMEM-resident across the whole grid (constant block index).
# -----------------------------------------------------------------------------
def _make_kernel(d1, d2, d3, o1, o2, o3, oh):
    bf = jnp.bfloat16

    def kernel(s_ref, w1_ref, w23_ref, wh_ref, b_ref, out_ref):
        # Layer 1: l1 | l4 fused along the output dim, shared K. State is bf16.
        z = jnp.dot(s_ref[...], w1_ref[...], preferred_element_type=jnp.float32)
        z = jnp.tanh(z + b_ref[:, o1:o1 + d1])
        # Layer 2: l2 | l5 block-diagonal (rows [0, d1) of the w2|w3 buffer).
        z = jnp.dot(z.astype(bf), w23_ref[0:d1, :],
                    preferred_element_type=jnp.float32)
        z = jnp.tanh(z + b_ref[:, o2:o2 + d2])
        # Layer 3: l3 | l6 block-diagonal (rows [d1, d1 + d2)).
        z = jnp.dot(z.astype(bf), w23_ref[d1:d1 + d2, :],
                    preferred_element_type=jnp.float32)
        z = jnp.tanh(z + b_ref[:, o3:o3 + d3])
        # Heads: actor | critic block-diagonal, lane-padded to 128 so the
        # single combined output store is unmasked and lane-dense.
        out = jnp.dot(z.astype(bf), wh_ref[...],
                      preferred_element_type=jnp.float32)
        out_ref[...] = (out + b_ref[:, oh:]).astype(out_ref.dtype)

    return kernel


# -----------------------------------------------------------------------------
# Parameter packing (done once, outside the kernel)
# -----------------------------------------------------------------------------
def _block_diag(a, b):
    m1, n1 = a.shape
    m2, n2 = b.shape
    top = jnp.concatenate([a, jnp.zeros((m1, n2), a.dtype)], axis=1)
    bot = jnp.concatenate([jnp.zeros((m2, n1), b.dtype), b], axis=1)
    return jnp.concatenate([top, bot], axis=0)


def pack_params(p, action_num):
    """Fuse per-layer f32 params into the kernel's bf16 operands + packed biases."""
    S, h0 = p["w1"].shape
    h1 = p["w4"].shape[1]
    # Static in-kernel bias lane-slices and block-diagonal column boundaries are
    # only aligned if the hidden sizes are multiples of 128 (see review note).
    assert h0 % 128 == 0 and h1 % 128 == 0, "hidden sizes must be multiples of 128"

    d1, d2, d3 = h0 + h1, 2 * h1, 2 * h1
    k_pad = _round_up(S, 128)                                   # 2152 -> 2176

    w1 = jnp.concatenate([p["w1"], p["w4"]], axis=1)            # (S, d1)
    w1 = jnp.pad(w1, ((0, k_pad - S), (0, 0)))                  # zero K-pad rows
    b1 = jnp.concatenate([p["b1"], p["b4"]], axis=1)

    w2 = _block_diag(p["w2"], p["w5"])                          # (d1, d2)
    b2 = jnp.concatenate([p["b2"], p["b5"]], axis=1)
    w3 = _block_diag(p["w3"], p["w6"])                          # (d2, d3)
    b3 = jnp.concatenate([p["b3"], p["b6"]], axis=1)
    assert d2 == d3
    w23 = jnp.concatenate([w2, w3], axis=0)                     # (d1 + d2, d3)

    wh = _block_diag(p["wa"], p["wc"])                          # (d3, action_num + 1)
    bh = jnp.concatenate([p["ba"], p["bc"]], axis=1)
    n_head = action_num + 1
    n_head_pad = _round_up(n_head, 128)
    wh = jnp.pad(wh, ((0, 0), (0, n_head_pad - n_head)))
    bh = jnp.pad(bh, ((0, 0), (0, n_head_pad - n_head)))

    biases = jnp.concatenate([b1, b2, b3, bh], axis=1).astype(jnp.float32)

    packed = {
        "w1": w1.astype(jnp.bfloat16),
        "w23": w23.astype(jnp.bfloat16),
        "wh": wh.astype(jnp.bfloat16),
        "biases": biases,
    }
    dims = dict(d1=d1, d2=d2, d3=d3, k_pad=k_pad,
                n_head_pad=n_head_pad, action_num=action_num)
    return packed, dims


# -----------------------------------------------------------------------------
# Wrapper: batch-tiled grid, weights resident in VMEM across all tiles.
# -----------------------------------------------------------------------------
def actor_critic_forward(state, packed, dims, *, tb=128):
    """state: (B, state_dim).  Returns (logits (B, action_num), value (B, 1))."""
    B, K = state.shape
    k_pad = dims["k_pad"]
    d1, d2, d3 = dims["d1"], dims["d2"], dims["d3"]
    n_head_pad = dims["n_head_pad"]
    action_num = dims["action_num"]
    o1, o2, o3 = 0, d1, d1 + d2
    oh = d1 + d2 + d3
    n_bias = oh + n_head_pad

    # Batch tiling: pad rows to a bf16-sublane multiple (16) and tile at tb.
    tb_eff = tb if B >= tb else _round_up(max(B, 1), 16)
    b_pad = _round_up(B, tb_eff)

    # bf16 state + zero-pad to (b_pad, k_pad); padded rows/cols contribute nothing.
    s = jnp.pad(state.astype(jnp.bfloat16), ((0, b_pad - B), (0, k_pad - K)))

    kernel = _make_kernel(d1, d2, d3, o1, o2, o3, oh)
    const = lambda i: (0, 0)   # weight blocks never change -> fetched once

    out = pl.pallas_call(
        kernel,
        grid=(b_pad // tb_eff,),
        in_specs=[
            pl.BlockSpec((tb_eff, k_pad), lambda i: (i, 0)),    # state tile
            pl.BlockSpec((k_pad, d1), const),                   # w1 (resident)
            pl.BlockSpec((d1 + d2, d3), const),                 # w2|w3 (resident)
            pl.BlockSpec((d3, n_head_pad), const),              # heads (resident)
            pl.BlockSpec((1, n_bias), const),                   # packed biases
        ],
        out_specs=pl.BlockSpec((tb_eff, n_head_pad), lambda i: (i, 0)),
        out_shape=jax.ShapeDtypeStruct((b_pad, n_head_pad), jnp.float32),
        compiler_params=pltpu.CompilerParams(
            dimension_semantics=("arbitrary",),   # keep weight fetch single-core
            vmem_limit_bytes=16 << 20),
    )(s, packed["w1"], packed["w23"], packed["wh"], packed["biases"])

    logits = out[:B, :action_num]
    value = out[:B, action_num:action_num + 1]
    return logits, value


# -----------------------------------------------------------------------------
# Deterministic init (xavier-uniform weights, zero biases) like
# ActorCritic._initialize_weights. Weights stored pre-transposed as (in, out).
# -----------------------------------------------------------------------------
def xavier_uniform(key, fan_in, fan_out):
    a = jnp.sqrt(6.0 / (fan_in + fan_out))
    return jax.random.uniform(key, (fan_in, fan_out), jnp.float32, minval=-a, maxval=a)


def init_params(key, state_dim, hidden_sizes, action_num):
    h0, h1 = hidden_sizes
    layer_dims = {
        "1": (state_dim, h0), "2": (h0, h1), "3": (h1, h1), "a": (h1, action_num),
        "4": (state_dim, h1), "5": (h1, h1), "6": (h1, h1), "c": (h1, 1),
    }
    keys = jax.random.split(key, len(layer_dims))
    params = {}
    for k_rng, (name, (fi, fo)) in zip(keys, layer_dims.items()):
        params[f"w{name}"] = xavier_uniform(k_rng, fi, fo)
        params[f"b{name}"] = jnp.zeros((1, fo), jnp.float32)
    return params


# -----------------------------------------------------------------------------
# References
# -----------------------------------------------------------------------------
def reference_forward_f32(state, p):
    x = jnp.tanh(state @ p["w1"] + p["b1"])
    x = jnp.tanh(x @ p["w2"] + p["b2"])
    x = jnp.tanh(x @ p["w3"] + p["b3"])
    logits = x @ p["wa"] + p["ba"]
    y = jnp.tanh(state @ p["w4"] + p["b4"])
    y = jnp.tanh(y @ p["w5"] + p["b5"])
    y = jnp.tanh(y @ p["w6"] + p["b6"])
    value = y @ p["wc"] + p["bc"]
    return logits, value


def reference_forward_bf16(state, p):
    """Pure-JAX emulation of the kernel's numerics (bf16 weights/acts, f32 accum)."""
    bf = jnp.bfloat16

    def lin(x, w, b):
        return jnp.dot(x.astype(bf), w.astype(bf),
                       preferred_element_type=jnp.float32) + b

    x = jnp.tanh(lin(state, p["w1"], p["b1"]))
    x = jnp.tanh(lin(x, p["w2"], p["b2"]))
    x = jnp.tanh(lin(x, p["w3"], p["b3"]))
    logits = lin(x, p["wa"], p["ba"])
    y = jnp.tanh(lin(state, p["w4"], p["b4"]))
    y = jnp.tanh(lin(y, p["w5"], p["b5"]))
    y = jnp.tanh(lin(y, p["w6"], p["b6"]))
    value = lin(y, p["wc"], p["bc"])
    return logits, value


# -----------------------------------------------------------------------------
if __name__ == "__main__":
    # Module constraints: symptom_num == 717 -> state_dim = 717*3 + 1 = 2152,
    # action_num in {717, 815, 28}; pick the small configuration.
    symptom_num = 717
    state_dim = symptom_num * 3 + 1          # 2152
    action_num = 28
    hidden_sizes = (256, 128)

    key = jax.random.PRNGKey(0)
    k_params, k_bias, k_small, k_big = jax.random.split(key, 4)

    params = init_params(k_params, state_dim, hidden_sizes, action_num)
    # The module inits biases to zero; perturb them here (test-only) so the
    # self-test also exercises the packed-bias path. Forward semantics unchanged.
    bkeys = jax.random.split(k_bias, 8)
    for bk, name in zip(bkeys, ["1", "2", "3", "a", "4", "5", "6", "c"]):
        params[f"b{name}"] = 0.01 * jax.random.normal(
            bk, params[f"b{name}"].shape, jnp.float32)

    packed, dims = pack_params(params, action_num)
    fwd = jax.jit(functools.partial(actor_critic_forward, packed=packed, dims=dims))

    # Small batch exercises the sub-tile padding path; the larger batch
    # amortizes the single weight DMA across multiple grid tiles (grid=(2,)).
    for batch, k_state in ((8, k_small), (256, k_big)):
        state = jax.random.normal(k_state, (batch, state_dim), jnp.float32)
        logits, value = jax.block_until_ready(fwd(state))

        assert logits.shape == (batch, action_num)
        assert value.shape == (batch, 1)

        # Structural check: kernel vs pure-JAX emulation of the same bf16 numerics.
        ref_l, ref_v = reference_forward_bf16(state, params)
        assert jnp.allclose(logits, ref_l, atol=2e-2, rtol=2e-2)
        assert jnp.allclose(value, ref_v, atol=2e-2, rtol=2e-2)

        # Loose check vs the full-f32 reference (bounds bf16 quantization error).
        f32_l, f32_v = reference_forward_f32(state, params)
        assert jnp.allclose(logits, f32_l, atol=1.5e-1, rtol=1.5e-1)
        assert jnp.allclose(value, f32_v, atol=1.5e-1, rtol=1.5e-1)

    print("KERNEL_OK")
</pallas_src>

<mosaic_0001>
module attributes {stable_mosaic.version = 11 : i64} {
  func.func @kernel(%arg0: i32, %arg1: memref<16x2176xbf16, #tpu.memory_space<vmem>>, %arg2: memref<2176x384xbf16, #tpu.memory_space<vmem>>, %arg3: memref<640x256xbf16, #tpu.memory_space<vmem>>, %arg4: memref<256x128xbf16, #tpu.memory_space<vmem>>, %arg5: memref<1x1024xf32, #tpu.memory_space<vmem>>, %arg6: memref<16x128xf32, #tpu.memory_space<vmem>>) attributes {dimension_semantics = [#tpu.dimension_semantics<arbitrary>], iteration_bounds = array<i64: 1>, scalar_prefetch = 0 : i64, scratch_operands = 0 : i64, tpu.core_type = #tpu.core_type<tc>, window_params = [{transform_indices = @transform_0, window_bounds = array<i64: 16, 2176>}, {pipeline_mode = #tpu.pipeline_mode<synchronous>, transform_indices = @transform_1, window_bounds = array<i64: 2176, 384>}, {pipeline_mode = #tpu.pipeline_mode<synchronous>, transform_indices = @transform_2, window_bounds = array<i64: 640, 256>}, {pipeline_mode = #tpu.pipeline_mode<synchronous>, transform_indices = @transform_3, window_bounds = array<i64: 256, 128>}, {pipeline_mode = #tpu.pipeline_mode<synchronous>, transform_indices = @transform_4, window_bounds = array<i64: 1, 1024>}, {transform_indices = @transform_5, window_bounds = array<i64: 16, 128>}]} {
    %c0 = arith.constant 0 : index
    %c0_0 = arith.constant 0 : index
    %0 = vector.load %arg1[%c0, %c0_0] : memref<16x2176xbf16, #tpu.memory_space<vmem>>, vector<16x2176xbf16>
    %c0_1 = arith.constant 0 : index
    %c0_2 = arith.constant 0 : index
    %1 = vector.load %arg2[%c0_1, %c0_2] : memref<2176x384xbf16, #tpu.memory_space<vmem>>, vector<2176x384xbf16>
    %cst = arith.constant dense<0.000000e+00> : vector<16x384xf32>
    %2 = tpu.matmul %0, %1, %cst {dimension_numbers = #tpu.dot_dimension_numbers<[1], [0], [0], [1], [0, 0, 1, 1], [], []>} : vector<16x2176xbf16>, vector<2176x384xbf16>, vector<16x384xf32> -> vector<16x384xf32>
    %c0_3 = arith.constant 0 : index
    %c0_4 = arith.constant 0 : index
    %3 = vector.load %arg5[%c0_3, %c0_4] : memref<1x1024xf32, #tpu.memory_space<vmem>>, vector<1x384xf32>
    %4 = vector.broadcast %3 : vector<1x384xf32> to vector<16x384xf32>
    %5 = arith.addf %2, %4 : vector<16x384xf32>
    %6 = math.tanh %5 : vector<16x384xf32>
    %7 = arith.truncf %6 : vector<16x384xf32> to vector<16x384xbf16>
    %c0_5 = arith.constant 0 : index
    %c0_6 = arith.constant 0 : index
    %8 = vector.load %arg3[%c0_5, %c0_6] : memref<640x256xbf16, #tpu.memory_space<vmem>>, vector<384x256xbf16>
    %cst_7 = arith.constant dense<0.000000e+00> : vector<16x256xf32>
    %9 = tpu.matmul %7, %8, %cst_7 {dimension_numbers = #tpu.dot_dimension_numbers<[1], [0], [0], [1], [0, 0, 1, 1], [], []>} : vector<16x384xbf16>, vector<384x256xbf16>, vector<16x256xf32> -> vector<16x256xf32>
    %c0_8 = arith.constant 0 : index
    %c384 = arith.constant 384 : index
    %10 = vector.load %arg5[%c0_8, %c384] : memref<1x1024xf32, #tpu.memory_space<vmem>>, vector<1x256xf32>
    %11 = vector.broadcast %10 : vector<1x256xf32> to vector<16x256xf32>
    %12 = arith.addf %9, %11 : vector<16x256xf32>
    %13 = math.tanh %12 : vector<16x256xf32>
    %14 = arith.truncf %13 : vector<16x256xf32> to vector<16x256xbf16>
    %c384_9 = arith.constant 384 : index
    %c0_10 = arith.constant 0 : index
    %15 = vector.load %arg3[%c384_9, %c0_10] : memref<640x256xbf16, #tpu.memory_space<vmem>>, vector<256x256xbf16>
    %cst_11 = arith.constant dense<0.000000e+00> : vector<16x256xf32>
    %16 = tpu.matmul %14, %15, %cst_11 {dimension_numbers = #tpu.dot_dimension_numbers<[1], [0], [0], [1], [0, 0, 1, 1], [], []>} : vector<16x256xbf16>, vector<256x256xbf16>, vector<16x256xf32> -> vector<16x256xf32>
    %c0_12 = arith.constant 0 : index
    %c640 = arith.constant 640 : index
    %17 = vector.load %arg5[%c0_12, %c640] : memref<1x1024xf32, #tpu.memory_space<vmem>>, vector<1x256xf32>
    %18 = vector.broadcast %17 : vector<1x256xf32> to vector<16x256xf32>
    %19 = arith.addf %16, %18 : vector<16x256xf32>
    %20 = math.tanh %19 : vector<16x256xf32>
    %21 = arith.truncf %20 : vector<16x256xf32> to vector<16x256xbf16>
    %c0_13 = arith.constant 0 : index
    %c0_14 = arith.constant 0 : index
    %22 = vector.load %arg4[%c0_13, %c0_14] : memref<256x128xbf16, #tpu.memory_space<vmem>>, vector<256x128xbf16>
    %cst_15 = arith.constant dense<0.000000e+00> : vector<16x128xf32>
    %23 = tpu.matmul %21, %22, %cst_15 {dimension_numbers = #tpu.dot_dimension_numbers<[1], [0], [0], [1], [0, 0, 1, 1], [], []>} : vector<16x256xbf16>, vector<256x128xbf16>, vector<16x128xf32> -> vector<16x128xf32>
    %c0_16 = arith.constant 0 : index
    %c896 = arith.constant 896 : index
    %24 = vector.load %arg5[%c0_16, %c896] : memref<1x1024xf32, #tpu.memory_space<vmem>>, vector<1x128xf32>
    %25 = vector.broadcast %24 : vector<1x128xf32> to vector<16x128xf32>
    %26 = arith.addf %23, %25 : vector<16x128xf32>
    %c0_17 = arith.constant 0 : index
    %c0_18 = arith.constant 0 : index
    %27 = vector.load %arg6[%c0_17, %c0_18] : memref<16x128xf32, #tpu.memory_space<vmem>>, vector<16x128xf32>
    tpu.vector_store %arg6[%c0_17, %c0_18], %26 {strides = array<i32>} : memref<16x128xf32, #tpu.memory_space<vmem>>, vector<16x128xf32>,
    return
  }
  func.func @transform_0(%arg0: i32) -> (i32, i32) {
    %c0_i32 = arith.constant 0 : i32
    %c0_i32_0 = arith.constant 0 : i32
    return %arg0, %c0_i32 : i32, i32
  }
  func.func @transform_1(%arg0: i32) -> (i32, i32) {
    %c0_i32 = arith.constant 0 : i32
    %c0_i32_0 = arith.constant 0 : i32
    %c0_i32_1 = arith.constant 0 : i32
    return %c0_i32, %c0_i32_0 : i32, i32
  }
  func.func @transform_2(%arg0: i32) -> (i32, i32) {
    %c0_i32 = arith.constant 0 : i32
    %c0_i32_0 = arith.constant 0 : i32
    %c0_i32_1 = arith.constant 0 : i32
    return %c0_i32, %c0_i32_0 : i32, i32
  }
  func.func @transform_3(%arg0: i32) -> (i32, i32) {
    %c0_i32 = arith.constant 0 : i32
    %c0_i32_0 = arith.constant 0 : i32
    %c0_i32_1 = arith.constant 0 : i32
    return %c0_i32, %c0_i32_0 : i32, i32
  }
  func.func @transform_4(%arg0: i32) -> (i32, i32) {
    %c0_i32 = arith.constant 0 : i32
    %c0_i32_0 = arith.constant 0 : i32
    %c0_i32_1 = arith.constant 0 : i32
    return %c0_i32, %c0_i32_0 : i32, i32
  }
  func.func @transform_5(%arg0: i32) -> (i32, i32) {
    %c0_i32 = arith.constant 0 : i32
    %c0_i32_0 = arith.constant 0 : i32
    return %arg0, %c0_i32 : i32, i32
  }
}

</mosaic_0001>

<llo_original>
// kernel: actor_critic_forward.1
$region0: #{actor_critic_forward.1}
  #allocation0 [shape = 'u32[]', space=smem, size = 0x4, offset = 0x4, fixed_abs, tag = 'smem constant byte address 0x4 - core index']
  #allocation1 [shape = 'u32[144,128]{1,0:T(1,128)}', space=vmem, size = 0x12000, scoped, tag = 'internal scratch']
  %s0 = inlined_call_operand.vmem [shape: bf16[16,2176], index: 0, kind: input, shape index: {}]
  %s1 = inlined_call_operand.hbm [shape: bf16[2176,384], index: 1, kind: input, shape index: {}]
  %s2 = inlined_call_operand.hbm [shape: bf16[640,256], index: 2, kind: input, shape index: {}]
  %s3 = inlined_call_operand.hbm [shape: bf16[256,128], index: 3, kind: input, shape index: {}]
  %s4 = inlined_call_operand.hbm [shape: f32[1,1024], index: 4, kind: input, shape index: {}]
  %s5 = inlined_call_operand.vmem [shape: f32[16,128], index: 5, kind: output, shape index: {}]
  %s6 = sld [smem:[#allocation0]]
  $region46: #{actor_critic_forward.1} parent=0
    _
  %s8 = ssub.s32 1, %s6
  %s9 = scalar_select 0, %s8, %s6
  $region1: #{actor_critic_forward.1} parent=0
    #allocation2 [shape = 'u8[1671168]{0}', space=vmem, size = 0x198000, scoped, tag = 'input window, operand 1, single buffered']
    #allocation3 [shape = 's32[1]{0}', space=sflag, size = 0x4, scoped, tag = 'scoped memory for actor_critic_forward.1']
    #allocation4 [shape = 'u8[327680]{0}', space=vmem, size = 0x50000, scoped, tag = 'input window, operand 2, single buffered']
    #allocation5 [shape = 's32[1]{0}', space=sflag, size = 0x4, scoped, tag = 'scoped memory for actor_critic_forward.1']
    #allocation6 [shape = 'u8[65536]{0}', space=vmem, size = 0x10000, scoped, tag = 'input window, operand 3, single buffered']
    #allocation7 [shape = 'u8[4096]{0}', space=vmem, size = 0x1000, scoped, tag = 'input window, operand 4, single buffered']
    #allocation8 [shape = 's32[1]{0}', space=sflag, size = 0x4, scoped, tag = 'scoped memory for actor_critic_forward.1']
    %10 = vsyncpa [#allocation3], 0
    %11 = vsyncpa [#allocation5], 0
    %12 = vsyncpa [#allocation8], 0
    // Predicated region
    $region2: #{actor_critic_forward.1} parent=1 // pred_check
      _
    $region3: #{actor_critic_forward.1} parent=1 // pred_check_branch
      %14 = sbr.rel (0) target = $region5
    $region4: #{actor_critic_forward.1} parent=1 // pred_region
      _
    $region5: #{actor_critic_forward.1} parent=1 // pred_fallthru
      _
    // Predicated region
    $region6: #{actor_critic_forward.1} parent=1 // pred_check
      _
    $region7: #{actor_critic_forward.1} parent=1 // pred_check_branch
      %16 = sbr.rel (0) target = $region9
    $region8: #{actor_critic_forward.1} parent=1 // pred_region
      %s18 = ssub.s32 52224, 52224
      %19 = vsyncadd [#allocation3], %s18
      %s20 = sshll.u32 [#allocation2], 4
      %s21 = int_to_ptr.vmem [resolvable:$true] %s20
      %26 = dma.hbm_to_vmem [thread:$0]  %s1, 52224, %s21, [#allocation3], 192, 192, 12
    $region9: #{actor_critic_forward.1} parent=1 // pred_fallthru
      _
    // Predicated region
    $region10: #{actor_critic_forward.1} parent=1 // pred_check
      _
    $region11: #{actor_critic_forward.1} parent=1 // pred_check_branch
      %28 = sbr.rel (0) target = $region13
    $region12: #{actor_critic_forward.1} parent=1 // pred_region
      %s30 = ssub.s32 10240, 10240
      %31 = vsyncadd [#allocation5], %s30
      %s32 = sshll.u32 [#allocation4], 4
      %s33 = int_to_ptr.vmem [resolvable:$true] %s32
      %38 = dma.hbm_to_vmem [thread:$0]  %s2, 10240, %s33, [#allocation5], 128, 128, 8
    $region13: #{actor_critic_forward.1} parent=1 // pred_fallthru
      _
    // Predicated region
    $region14: #{actor_critic_forward.1} parent=1 // pred_check
      _
    $region15: #{actor_critic_forward.1} parent=1 // pred_check_branch
      %40 = sbr.rel (0) target = $region17
    $region16: #{actor_critic_forward.1} parent=1 // pred_region
      %s42 = ssub.s32 2048, 2048
      %43 = vsyncadd [#allocation5], %s42
      %s44 = sshll.u32 [#allocation6], 4
      %s45 = int_to_ptr.vmem [resolvable:$true] %s44
      %50 = dma.hbm_to_vmem [thread:$0]  %s3, 2048, %s45, [#allocation5], 64, 64, 4
    $region17: #{actor_critic_forward.1} parent=1 // pred_fallthru
      _
    // Predicated region
    $region18: #{actor_critic_forward.1} parent=1 // pred_check
      _
    $region19: #{actor_critic_forward.1} parent=1 // pred_check_branch
      %52 = sbr.rel (0) target = $region21
    $region20: #{actor_critic_forward.1} parent=1 // pred_region
      %s54 = ssub.s32 128, 128
      %55 = vsyncadd [#allocation8], %s54
      %s57 = sshll.u32 [#allocation7], 4
      %s58 = int_to_ptr.vmem [resolvable:$true] %s57
      %60 = dma.hbm_to_vmem [thread:$0]  %s4, 128, %s58, [#allocation8]
    $region21: #{actor_critic_forward.1} parent=1 // pred_fallthru
      _
    // Predicated region
    $region22: #{actor_critic_forward.1} parent=1 // pred_check
      _
    $region23: #{actor_critic_forward.1} parent=1 // pred_check_branch
      %62 = sbr.rel (0) target = $region25
    $region24: #{actor_critic_forward.1} parent=1 // pred_region
      %63 = dma.done [#allocation3], 52224
    $region25: #{actor_critic_forward.1} parent=1 // pred_fallthru
      _
    // Predicated region
    $region26: #{actor_critic_forward.1} parent=1 // pred_check
      _
    $region27: #{actor_critic_forward.1} parent=1 // pred_check_branch
      %65 = sbr.rel (0) target = $region29
    $region28: #{actor_critic_forward.1} parent=1 // pred_region
      %66 = dma.done [#allocation5], 10240
    $region29: #{actor_critic_forward.1} parent=1 // pred_fallthru
      _
    // Predicated region
    $region30: #{actor_critic_forward.1} parent=1 // pred_check
      _
    $region31: #{actor_critic_forward.1} parent=1 // pred_check_branch
      %68 = sbr.rel (0) target = $region33
    $region32: #{actor_critic_forward.1} parent=1 // pred_region
      %69 = dma.done [#allocation5], 2048
    $region33: #{actor_critic_forward.1} parent=1 // pred_fallthru
      _
    // Predicated region
    $region34: #{actor_critic_forward.1} parent=1 // pred_check
      _
    $region35: #{actor_critic_forward.1} parent=1 // pred_check_branch
      %71 = sbr.rel (0) target = $region37
    $region36: #{actor_critic_forward.1} parent=1 // pred_region
      %72 = dma.done [#allocation8], 128
    $region37: #{actor_critic_forward.1} parent=1 // pred_fallthru
      _
    %v74 = vld [vmem:[%s0] sm:$0xff]
    %v75 = vld [vmem:[%s0 + $0x8] sm:$0xff]
    %v76 = vld [vmem:[%s0 + $0x10] sm:$0xff]
    %v77 = vld [vmem:[%s0 + $0x18] sm:$0xff]
    %v78 = vld [vmem:[%s0 + $0x20] sm:$0xff]
    %v79 = vld [vmem:[%s0 + $0x28] sm:$0xff]
    %v80 = vld [vmem:[%s0 + $0x30] sm:$0xff]
    %v81 = vld [vmem:[%s0 + $0x38] sm:$0xff]
    %v82 = vld [vmem:[%s0 + $0x40] sm:$0xf]
    %v83 = vld [vmem:[%s0 + $0x44] sm:$0xff]
    %v84 = vld [vmem:[%s0 + $0x4c] sm:$0xff]
    %v85 = vld [vmem:[%s0 + $0x54] sm:$0xff]
    %v86 = vld [vmem:[%s0 + $0x5c] sm:$0xff]
    %v87 = vld [vmem:[%s0 + $0x64] sm:$0xff]
    %v88 = vld [vmem:[%s0 + $0x6c] sm:$0xff]
    %v89 = vld [vmem:[%s0 + $0x74] sm:$0xff]
    %v90 = vld [vmem:[%s0 + $0x7c] sm:$0xff]
    %v91 = vld [vmem:[%s0 + $0x84] sm:$0xf]
    %v92 = vld [vmem:[#allocation2] sm:$0xff]
    %v93 = vld [vmem:[#allocation2 + $0x8] sm:$0xf]
    %v94 = vld [vmem:[#allocation2 + $0xc] sm:$0xff]
    %v95 = vld [vmem:[#allocation2 + $0x14] sm:$0xf]
    %v96 = vld [vmem:[#allocation2 + $0x18] sm:$0xff]
    %v97 = vld [vmem:[#allocation2 + $0x20] sm:$0xf]
    %v98 = vld [vmem:[#allocation2 + $0x24] sm:$0xff]
    %v99 = vld [vmem:[#allocation2 + $0x2c] sm:$0xf]
    %v100 = vld [vmem:[#allocation2 + $0x30] sm:$0xff]
    %v101 = vld [vmem:[#allocation2 + $0x38] sm:$0xf]
    %v102 = vld [vmem:[#allocation2 + $0x3c] sm:$0xff]
    %v103 = vld [vmem:[#allocation2 + $0x44] sm:$0xf]
    %v104 = vld [vmem:[#allocation2 + $0x48] sm:$0xff]
    %v105 = vld [vmem:[#allocation2 + $0x50] sm:$0xf]
    %v106 = vld [vmem:[#allocation2 + $0x54] sm:$0xff]
    %v107 = vld [vmem:[#allocation2 + $0x5c] sm:$0xf]
    %v108 = vld [vmem:[#allocation2 + $0x60] sm:$0xff]
    %v109 = vld [vmem:[#allocation2 + $0x68] sm:$0xf]
    %v110 = vld [vmem:[#allocation2 + $0x6c] sm:$0xff]
    %v111 = vld [vmem:[#allocation2 + $0x74] sm:$0xf]
    %v112 = vld [vmem:[#allocation2 + $0x78] sm:$0xff]
    %v113 = vld [vmem:[#allocation2 + $0x80] sm:$0xf]
    %v114 = vld [vmem:[#allocation2 + $0x84] sm:$0xff]
    %v115 = vld [vmem:[#allocation2 + $0x8c] sm:$0xf]
    %v116 = vld [vmem:[#allocation2 + $0x90] sm:$0xff]
    %v117 = vld [vmem:[#allocation2 + $0x98] sm:$0xf]
    %v118 = vld [vmem:[#allocation2 + $0x9c] sm:$0xff]
    %v119 = vld [vmem:[#allocation2 + $0xa4] sm:$0xf]
    %v120 = vld [vmem:[#allocation2 + $0xa8] sm:$0xff]
    %v121 = vld [vmem:[#allocation2 + $0xb0] sm:$0xf]
    %v122 = vld [vmem:[#allocation2 + $0xb4] sm:$0xff]
    %v123 = vld [vmem:[#allocation2 + $0xbc] sm:$0xf]
    %v124 = vld [vmem:[#allocation2 + $0xc0] sm:$0xff]
    %v125 = vld [vmem:[#allocation2 + $0xc8] sm:$0xf]
    %v126 = vld [vmem:[#allocation2 + $0xcc] sm:$0xff]
    %v127 = vld [vmem:[#allocation2 + $0xd4] sm:$0xf]
    %v128 = vld [vmem:[#allocation2 + $0xd8] sm:$0xff]
    %v129 = vld [vmem:[#allocation2 + $0xe0] sm:$0xf]
    %v130 = vld [vmem:[#allocation2 + $0xe4] sm:$0xff]
    %v131 = vld [vmem:[#allocation2 + $0xec] sm:$0xf]
    %v132 = vld [vmem:[#allocation2 + $0xf0] sm:$0xff]
    %v133 = vld [vmem:[#allocation2 + $0xf8] sm:$0xf]
    %v134 = vld [vmem:[#allocation2 + $0xfc] sm:$0xff]
    %v135 = vld [vmem:[#allocation2 + $0x104] sm:$0xf]
    %v136 = vld [vmem:[#allocation2 + $0x108] sm:$0xff]
    %v137 = vld [vmem:[#allocation2 + $0x110] sm:$0xf]
    %v138 = vld [vmem:[#allocation2 + $0x114] sm:$0xff]
    %v139 = vld [vmem:[#allocation2 + $0x11c] sm:$0xf]
    %v140 = vld [vmem:[#allocation2 + $0x120] sm:$0xff]
    %v141 = vld [vmem:[#allocation2 + $0x128] sm:$0xf]
    %v142 = vld [vmem:[#allocation2 + $0x12c] sm:$0xff]
    %v143 = vld [vmem:[#allocation2 + $0x134] sm:$0xf]
    %v144 = vld [vmem:[#allocation2 + $0x138] sm:$0xff]
    %v145 = vld [vmem:[#allocation2 + $0x140] sm:$0xf]
    %v146 = vld [vmem:[#allocation2 + $0x144] sm:$0xff]
    %v147 = vld [vmem:[#allocation2 + $0x14c] sm:$0xf]
    %v148 = vld [vmem:[#allocation2 + $0x150] sm:$0xff]
    %v149 = vld [vmem:[#allocation2 + $0x158] sm:$0xf]
    %v150 = vld [vmem:[#allocation2 + $0x15c] sm:$0xff]
    %v151 = vld [vmem:[#allocation2 + $0x164] sm:$0xf]
    %v152 = vld [vmem:[#allocation2 + $0x168] sm:$0xff]
    %v153 = vld [vmem:[#allocation2 + $0x170] sm:$0xf]
    %v154 = vld [vmem:[#allocation2 + $0x174] sm:$0xff]
    %v155 = vld [vmem:[#allocation2 + $0x17c] sm:$0xf]
    %v156 = vld [vmem:[#allocation2 + $0x180] sm:$0xff]
    %v157 = vld [vmem:[#allocation2 + $0x188] sm:$0xf]
    %v158 = vld [vmem:[#allocation2 + $0x18c] sm:$0xff]
    %v159 = vld [vmem:[#allocation2 + $0x194] sm:$0xf]
    %v160 = vld [vmem:[#allocation2 + $0x198] sm:$0xff]
    %v161 = vld [vmem:[#allocation2 + $0x1a0] sm:$0xf]
    %v162 = vld [vmem:[#allocation2 + $0x1a4] sm:$0xff]
    %v163 = vld [vmem:[#allocation2 + $0x1ac] sm:$0xf]
    %v164 = vld [vmem:[#allocation2 + $0x1b0] sm:$0xff]
    %v165 = vld [vmem:[#allocation2 + $0x1b8] sm:$0xf]
    %v166 = vld [vmem:[#allocation2 + $0x1bc] sm:$0xff]
    %v167 = vld [vmem:[#allocation2 + $0x1c4] sm:$0xf]
    %v168 = vld [vmem:[#allocation2 + $0x1c8] sm:$0xff]
    %v169 = vld [vmem:[#allocation2 + $0x1d0] sm:$0xf]
    %v170 = vld [vmem:[#allocation2 + $0x1d4] sm:$0xff]
    %v171 = vld [vmem:[#allocation2 + $0x1dc] sm:$0xf]
    %v172 = vld [vmem:[#allocation2 + $0x1e0] sm:$0xff]
    %v173 = vld [vmem:[#allocation2 + $0x1e8] sm:$0xf]
    %v174 = vld [vmem:[#allocation2 + $0x1ec] sm:$0xff]
    %v175 = vld [vmem:[#allocation2 + $0x1f4] sm:$0xf]
    %v176 = vld [vmem:[#allocation2 + $0x1f8] sm:$0xff]
    %v177 = vld [vmem:[#allocation2 + $0x200] sm:$0xf]
    %v178 = vld [vmem:[#allocation2 + $0x204] sm:$0xff]
    %v179 = vld [vmem:[#allocation2 + $0x20c] sm:$0xf]
    %v180 = vld [vmem:[#allocation2 + $0x210] sm:$0xff]
    %v181 = vld [vmem:[#allocation2 + $0x218] sm:$0xf]
    %v182 = vld [vmem:[#allocation2 + $0x21c] sm:$0xff]
    %v183 = vld [vmem:[#allocation2 + $0x224] sm:$0xf]
    %v184 = vld [vmem:[#allocation2 + $0x228] sm:$0xff]
    %v185 = vld [vmem:[#allocation2 + $0x230] sm:$0xf]
    %v186 = vld [vmem:[#allocation2 + $0x234] sm:$0xff]
    %v187 = vld [vmem:[#allocation2 + $0x23c] sm:$0xf]
    %v188 = vld [vmem:[#allocation2 + $0x240] sm:$0xff]
    %v189 = vld [vmem:[#allocation2 + $0x248] sm:$0xf]
    %v190 = vld [vmem:[#allocation2 + $0x24c] sm:$0xff]
    %v191 = vld [vmem:[#allocation2 + $0x254] sm:$0xf]
    %v192 = vld [vmem:[#allocation2 + $0x258] sm:$0xff]
    %v193 = vld [vmem:[#allocation2 + $0x260] sm:$0xf]
    %v194 = vld [vmem:[#allocation2 + $0x264] sm:$0xff]
    %v195 = vld [vmem:[#allocation2 + $0x26c] sm:$0xf]
    %v196 = vld [vmem:[#allocation2 + $0x270] sm:$0xff]
    %v197 = vld [vmem:[#allocation2 + $0x278] sm:$0xf]
    %v198 = vld [vmem:[#allocation2 + $0x27c] sm:$0xff]
    %v199 = vld [vmem:[#allocation2 + $0x284] sm:$0xf]
    %v200 = vld [vmem:[#allocation2 + $0x288] sm:$0xff]
    %v201 = vld [vmem:[#allocation2 + $0x290] sm:$0xf]
    %v202 = vld [vmem:[#allocation2 + $0x294] sm:$0xff]
    %v203 = vld [vmem:[#allocation2 + $0x29c] sm:$0xf]
    %v204 = vld [vmem:[#allocation2 + $0x2a0] sm:$0xff]
    %v205 = vld [vmem:[#allocation2 + $0x2a8] sm:$0xf]
    %v206 = vld [vmem:[#allocation2 + $0x2ac] sm:$0xff]
    %v207 = vld [vmem:[#allocation2 + $0x2b4] sm:$0xf]
    %v208 = vld [vmem:[#allocation2 + $0x2b8] sm:$0xff]
    %v209 = vld [vmem:[#allocation2 + $0x2c0] sm:$0xf]
    %v210 = vld [vmem:[#allocation2 + $0x2c4] sm:$0xff]
    %v211 = vld [vmem:[#allocation2 + $0x2cc] sm:$0xf]
    %v212 = vld [vmem:[#allocation2 + $0x2d0] sm:$0xff]
    %v213 = vld [vmem:[#allocation2 + $0x2d8] sm:$0xf]
    %v214 = vld [vmem:[#allocation2 + $0x2dc] sm:$0xff]
    %v215 = vld [vmem:[#allocation2 + $0x2e4] sm:$0xf]
    %v216 = vld [vmem:[#allocation2 + $0x2e8] sm:$0xff]
    %v217 = vld [vmem:[#allocation2 + $0x2f0] sm:$0xf]
    %v218 = vld [vmem:[#allocation2 + $0x2f4] sm:$0xff]
    %v219 = vld [vmem:[#allocation2 + $0x2fc] sm:$0xf]
    %v220 = vld [vmem:[#allocation2 + $0x300] sm:$0xff]
    %v221 = vld [vmem:[#allocation2 + $0x308] sm:$0xf]
    %v222 = vld [vmem:[#allocation2 + $0x30c] sm:$0xff]
    %v223 = vld [vmem:[#allocation2 + $0x314] sm:$0xf]
    %v224 = vld [vmem:[#allocation2 + $0x318] sm:$0xff]
    %v225 = vld [vmem:[#allocation2 + $0x320] sm:$0xf]
    %v226 = vld [vmem:[#allocation2 + $0x324] sm:$0xff]
    %v227 = vld [vmem:[#allocation2 + $0x32c] sm:$0xf]
    %v228 = vld [vmem:[#allocation2 + $0x330] sm:$0xff]
    %v229 = vld [vmem:[#allocation2 + $0x338] sm:$0xf]
    %v230 = vld [vmem:[#allocation2 + $0x33c] sm:$0xff]
    %v231 = vld [vmem:[#allocation2 + $0x344] sm:$0xf]
    %v232 = vld [vmem:[#allocation2 + $0x348] sm:$0xff]
    %v233 = vld [vmem:[#allocation2 + $0x350] sm:$0xf]
    %v234 = vld [vmem:[#allocation2 + $0x354] sm:$0xff]
    %v235 = vld [vmem:[#allocation2 + $0x35c] sm:$0xf]
    %v236 = vld [vmem:[#allocation2 + $0x360] sm:$0xff]
    %v237 = vld [vmem:[#allocation2 + $0x368] sm:$0xf]
    %v238 = vld [vmem:[#allocation2 + $0x36c] sm:$0xff]
    %v239 = vld [vmem:[#allocation2 + $0x374] sm:$0xf]
    %v240 = vld [vmem:[#allocation2 + $0x378] sm:$0xff]
    %v241 = vld [vmem:[#allocation2 + $0x380] sm:$0xf]
    %v242 = vld [vmem:[#allocation2 + $0x384] sm:$0xff]
    %v243 = vld [vmem:[#allocation2 + $0x38c] sm:$0xf]
    %v244 = vld [vmem:[#allocation2 + $0x390] sm:$0xff]
    %v245 = vld [vmem:[#allocation2 + $0x398] sm:$0xf]
    %v246 = vld [vmem:[#allocation2 + $0x39c] sm:$0xff]
    %v247 = vld [vmem:[#allocation2 + $0x3a4] sm:$0xf]
    %v248 = vld [vmem:[#allocation2 + $0x3a8] sm:$0xff]
    %v249 = vld [vmem:[#allocation2 + $0x3b0] sm:$0xf]
    %v250 = vld [vmem:[#allocation2 + $0x3b4] sm:$0xff]
    %v251 = vld [vmem:[#allocation2 + $0x3bc] sm:$0xf]
    %v252 = vld [vmem:[#allocation2 + $0x3c0] sm:$0xff]
    %v253 = vld [vmem:[#allocation2 + $0x3c8] sm:$0xf]
    %v254 = vld [vmem:[#allocation2 + $0x3cc] sm:$0xff]
    %v255 = vld [vmem:[#allocation2 + $0x3d4] sm:$0xf]
    %v256 = vld [vmem:[#allocation2 + $0x3d8] sm:$0xff]
    %v257 = vld [vmem:[#allocation2 + $0x3e0] sm:$0xf]
    %v258 = vld [vmem:[#allocation2 + $0x3e4] sm:$0xff]
    %v259 = vld [vmem:[#allocation2 + $0x3ec] sm:$0xf]
    %v260 = vld [vmem:[#allocation2 + $0x3f0] sm:$0xff]
    %v261 = vld [vmem:[#allocation2 + $0x3f8] sm:$0xf]
    %v262 = vld [vmem:[#allocation2 + $0x3fc] sm:$0xff]
    %v263 = vld [vmem:[#allocation2 + $0x404] sm:$0xf]
    %v264 = vld [vmem:[#allocation2 + $0x408] sm:$0xff]
    %v265 = vld [vmem:[#allocation2 + $0x410] sm:$0xf]
    %v266 = vld [vmem:[#allocation2 + $0x414] sm:$0xff]
    %v267 = vld [vmem:[#allocation2 + $0x41c] sm:$0xf]
    %v268 = vld [vmem:[#allocation2 + $0x420] sm:$0xff]
    %v269 = vld [vmem:[#allocation2 + $0x428] sm:$0xf]
    %v270 = vld [vmem:[#allocation2 + $0x42c] sm:$0xff]
    %v271 = vld [vmem:[#allocation2 + $0x434] sm:$0xf]
    %v272 = vld [vmem:[#allocation2 + $0x438] sm:$0xff]
    %v273 = vld [vmem:[#allocation2 + $0x440] sm:$0xf]
    %v274 = vld [vmem:[#allocation2 + $0x444] sm:$0xff]
    %v275 = vld [vmem:[#allocation2 + $0x44c] sm:$0xf]
    %v276 = vld [vmem:[#allocation2 + $0x450] sm:$0xff]
    %v277 = vld [vmem:[#allocation2 + $0x458] sm:$0xf]
    %v278 = vld [vmem:[#allocation2 + $0x45c] sm:$0xff]
    %v279 = vld [vmem:[#allocation2 + $0x464] sm:$0xf]
    %v280 = vld [vmem:[#allocation2 + $0x468] sm:$0xff]
    %v281 = vld [vmem:[#allocation2 + $0x470] sm:$0xf]
    %v282 = vld [vmem:[#allocation2 + $0x474] sm:$0xff]
    %v283 = vld [vmem:[#allocation2 + $0x47c] sm:$0xf]
    %v284 = vld [vmem:[#allocation2 + $0x480] sm:$0xff]
    %v285 = vld [vmem:[#allocation2 + $0x488] sm:$0xf]
    %v286 = vld [vmem:[#allocation2 + $0x48c] sm:$0xff]
    %v287 = vld [vmem:[#allocation2 + $0x494] sm:$0xf]
    %v288 = vld [vmem:[#allocation2 + $0x498] sm:$0xff]
    %v289 = vld [vmem:[#allocation2 + $0x4a0] sm:$0xf]
    %v290 = vld [vmem:[#allocation2 + $0x4a4] sm:$0xff]
    %v291 = vld [vmem:[#allocation2 + $0x4ac] sm:$0xf]
    %v292 = vld [vmem:[#allocation2 + $0x4b0] sm:$0xff]
    %v293 = vld [vmem:[#allocation2 + $0x4b8] sm:$0xf]
    %v294 = vld [vmem:[#allocation2 + $0x4bc] sm:$0xff]
    %v295 = vld [vmem:[#allocation2 + $0x4c4] sm:$0xf]
    %v296 = vld [vmem:[#allocation2 + $0x4c8] sm:$0xff]
    %v297 = vld [vmem:[#allocation2 + $0x4d0] sm:$0xf]
    %v298 = vld [vmem:[#allocation2 + $0x4d4] sm:$0xff]
    %v299 = vld [vmem:[#allocation2 + $0x4dc] sm:$0xf]
    %v300 = vld [vmem:[#allocation2 + $0x4e0] sm:$0xff]
    %v301 = vld [vmem:[#allocation2 + $0x4e8] sm:$0xf]
    %v302 = vld [vmem:[#allocation2 + $0x4ec] sm:$0xff]
    %v303 = vld [vmem:[#allocation2 + $0x4f4] sm:$0xf]
    %v304 = vld [vmem:[#allocation2 + $0x4f8] sm:$0xff]
    %v305 = vld [vmem:[#allocation2 + $0x500] sm:$0xf]
    %v306 = vld [vmem:[#allocation2 + $0x504] sm:$0xff]
    %v307 = vld [vmem:[#allocation2 + $0x50c] sm:$0xf]
    %v308 = vld [vmem:[#allocation2 + $0x510] sm:$0xff]
    %v309 = vld [vmem:[#allocation2 + $0x518] sm:$0xf]
    %v310 = vld [vmem:[#allocation2 + $0x51c] sm:$0xff]
    %v311 = vld [vmem:[#allocation2 + $0x524] sm:$0xf]
    %v312 = vld [vmem:[#allocation2 + $0x528] sm:$0xff]
    %v313 = vld [vmem:[#allocation2 + $0x530] sm:$0xf]
    %v314 = vld [vmem:[#allocation2 + $0x534] sm:$0xff]
    %v315 = vld [vmem:[#allocation2 + $0x53c] sm:$0xf]
    %v316 = vld [vmem:[#allocation2 + $0x540] sm:$0xff]
    %v317 = vld [vmem:[#allocation2 + $0x548] sm:$0xf]
    %v318 = vld [vmem:[#allocation2 + $0x54c] sm:$0xff]
    %v319 = vld [vmem:[#allocation2 + $0x554] sm:$0xf]
    %v320 = vld [vmem:[#allocation2 + $0x558] sm:$0xff]
    %v321 = vld [vmem:[#allocation2 + $0x560] sm:$0xf]
    %v322 = vld [vmem:[#allocation2 + $0x564] sm:$0xff]
    %v323 = vld [vmem:[#allocation2 + $0x56c] sm:$0xf]
    %v324 = vld [vmem:[#allocation2 + $0x570] sm:$0xff]
    %v325 = vld [vmem:[#allocation2 + $0x578] sm:$0xf]
    %v326 = vld [vmem:[#allocation2 + $0x57c] sm:$0xff]
    %v327 = vld [vmem:[#allocation2 + $0x584] sm:$0xf]
    %v328 = vld [vmem:[#allocation2 + $0x588] sm:$0xff]
    %v329 = vld [vmem:[#allocation2 + $0x590] sm:$0xf]
    %v330 = vld [vmem:[#allocation2 + $0x594] sm:$0xff]
    %v331 = vld [vmem:[#allocation2 + $0x59c] sm:$0xf]
    %v332 = vld [vmem:[#allocation2 + $0x5a0] sm:$0xff]
    %v333 = vld [vmem:[#allocation2 + $0x5a8] sm:$0xf]
    %v334 = vld [vmem:[#allocation2 + $0x5ac] sm:$0xff]
    %v335 = vld [vmem:[#allocation2 + $0x5b4] sm:$0xf]
    %v336 = vld [vmem:[#allocation2 + $0x5b8] sm:$0xff]
    %v337 = vld [vmem:[#allocation2 + $0x5c0] sm:$0xf]
    %v338 = vld [vmem:[#allocation2 + $0x5c4] sm:$0xff]
    %v339 = vld [vmem:[#allocation2 + $0x5cc] sm:$0xf]
    %v340 = vld [vmem:[#allocation2 + $0x5d0] sm:$0xff]
    %v341 = vld [vmem:[#allocation2 + $0x5d8] sm:$0xf]
    %v342 = vld [vmem:[#allocation2 + $0x5dc] sm:$0xff]
    %v343 = vld [vmem:[#allocation2 + $0x5e4] sm:$0xf]
    %v344 = vld [vmem:[#allocation2 + $0x5e8] sm:$0xff]
    %v345 = vld [vmem:[#allocation2 + $0x5f0] sm:$0xf]
    %v346 = vld [vmem:[#allocation2 + $0x5f4] sm:$0xff]
    %v347 = vld [vmem:[#allocation2 + $0x5fc] sm:$0xf]
    %v348 = vld [vmem:[#allocation2 + $0x600] sm:$0xff]
    %v349 = vld [vmem:[#allocation2 + $0x608] sm:$0xf]
    %v350 = vld [vmem:[#allocation2 + $0x60c] sm:$0xff]
    %v351 = vld [vmem:[#allocation2 + $0x614] sm:$0xf]
    %v352 = vld [vmem:[#allocation2 + $0x618] sm:$0xff]
    %v353 = vld [vmem:[#allocation2 + $0x620] sm:$0xf]
    %v354 = vld [vmem:[#allocation2 + $0x624] sm:$0xff]
    %v355 = vld [vmem:[#allocation2 + $0x62c] sm:$0xf]
    %v356 = vld [vmem:[#allocation2 + $0x630] sm:$0xff]
    %v357 = vld [vmem:[#allocation2 + $0x638] sm:$0xf]
    %v358 = vld [vmem:[#allocation2 + $0x63c] sm:$0xff]
    %v359 = vld [vmem:[#allocation2 + $0x644] sm:$0xf]
    %v360 = vld [vmem:[#allocation2 + $0x648] sm:$0xff]
    %v361 = vld [vmem:[#allocation2 + $0x650] sm:$0xf]
    %v362 = vld [vmem:[#allocation2 + $0x654] sm:$0xff]
    %v363 = vld [vmem:[#allocation2 + $0x65c] sm:$0xf]
    %v364 = vld [vmem:[#allocation2 + $0x660] sm:$0xff]
    %v365 = vld [vmem:[#allocation2 + $0x668] sm:$0xf]
    %v366 = vld [vmem:[#allocation2 + $0x66c] sm:$0xff]
    %v367 = vld [vmem:[#allocation2 + $0x674] sm:$0xf]
    %v368 = vld [vmem:[#allocation2 + $0x678] sm:$0xff]
    %v369 = vld [vmem:[#allocation2 + $0x680] sm:$0xf]
    %v370 = vld [vmem:[#allocation2 + $0x684] sm:$0xff]
    %v371 = vld [vmem:[#allocation2 + $0x68c] sm:$0xf]
    %v372 = vld [vmem:[#allocation2 + $0x690] sm:$0xff]
    %v373 = vld [vmem:[#allocation2 + $0x698] sm:$0xf]
    %v374 = vld [vmem:[#allocation2 + $0x69c] sm:$0xff]
    %v375 = vld [vmem:[#allocation2 + $0x6a4] sm:$0xf]
    %v376 = vld [vmem:[#allocation2 + $0x6a8] sm:$0xff]
    %v377 = vld [vmem:[#allocation2 + $0x6b0] sm:$0xf]
    %v378 = vld [vmem:[#allocation2 + $0x6b4] sm:$0xff]
    %v379 = vld [vmem:[#allocation2 + $0x6bc] sm:$0xf]
    %v380 = vld [vmem:[#allocation2 + $0x6c0] sm:$0xff]
    %v381 = vld [vmem:[#allocation2 + $0x6c8] sm:$0xf]
    %v382 = vld [vmem:[#allocation2 + $0x6cc] sm:$0xff]
    %v383 = vld [vmem:[#allocation2 + $0x6d4] sm:$0xf]
    %v384 = vld [vmem:[#allocation2 + $0x6d8] sm:$0xff]
    %v385 = vld [vmem:[#allocation2 + $0x6e0] sm:$0xf]
    %v386 = vld [vmem:[#allocation2 + $0x6e4] sm:$0xff]
    %v387 = vld [vmem:[#allocation2 + $0x6ec] sm:$0xf]
    %v388 = vld [vmem:[#allocation2 + $0x6f0] sm:$0xff]
    %v389 = vld [vmem:[#allocation2 + $0x6f8] sm:$0xf]
    %v390 = vld [vmem:[#allocation2 + $0x6fc] sm:$0xff]
    %v391 = vld [vmem:[#allocation2 + $0x704] sm:$0xf]
    %v392 = vld [vmem:[#allocation2 + $0x708] sm:$0xff]
    %v393 = vld [vmem:[#allocation2 + $0x710] sm:$0xf]
    %v394 = vld [vmem:[#allocation2 + $0x714] sm:$0xff]
    %v395 = vld [vmem:[#allocation2 + $0x71c] sm:$0xf]
    %v396 = vld [vmem:[#allocation2 + $0x720] sm:$0xff]
    %v397 = vld [vmem:[#allocation2 + $0x728] sm:$0xf]
    %v398 = vld [vmem:[#allocation2 + $0x72c] sm:$0xff]
    %v399 = vld [vmem:[#allocation2 + $0x734] sm:$0xf]
    %v400 = vld [vmem:[#allocation2 + $0x738] sm:$0xff]
    %v401 = vld [vmem:[#allocation2 + $0x740] sm:$0xf]
    %v402 = vld [vmem:[#allocation2 + $0x744] sm:$0xff]
    %v403 = vld [vmem:[#allocation2 + $0x74c] sm:$0xf]
    %v404 = vld [vmem:[#allocation2 + $0x750] sm:$0xff]
    %v405 = vld [vmem:[#allocation2 + $0x758] sm:$0xf]
    %v406 = vld [vmem:[#allocation2 + $0x75c] sm:$0xff]
    %v407 = vld [vmem:[#allocation2 + $0x764] sm:$0xf]
    %v408 = vld [vmem:[#allocation2 + $0x768] sm:$0xff]
    %v409 = vld [vmem:[#allocation2 + $0x770] sm:$0xf]
    %v410 = vld [vmem:[#allocation2 + $0x774] sm:$0xff]
    %v411 = vld [vmem:[#allocation2 + $0x77c] sm:$0xf]
    %v412 = vld [vmem:[#allocation2 + $0x780] sm:$0xff]
    %v413 = vld [vmem:[#allocation2 + $0x788] sm:$0xf]
    %v414 = vld [vmem:[#allocation2 + $0x78c] sm:$0xff]
    %v415 = vld [vmem:[#allocation2 + $0x794] sm:$0xf]
    %v416 = vld [vmem:[#allocation2 + $0x798] sm:$0xff]
    %v417 = vld [vmem:[#allocation2 + $0x7a0] sm:$0xf]
    %v418 = vld [vmem:[#allocation2 + $0x7a4] sm:$0xff]
    %v419 = vld [vmem:[#allocation2 + $0x7ac] sm:$0xf]
    %v420 = vld [vmem:[#allocation2 + $0x7b0] sm:$0xff]
    %v421 = vld [vmem:[#allocation2 + $0x7b8] sm:$0xf]
    %v422 = vld [vmem:[#allocation2 + $0x7bc] sm:$0xff]
    %v423 = vld [vmem:[#allocation2 + $0x7c4] sm:$0xf]
    %v424 = vld [vmem:[#allocation2 + $0x7c8] sm:$0xff]
    %v425 = vld [vmem:[#allocation2 + $0x7d0] sm:$0xf]
    %v426 = vld [vmem:[#allocation2 + $0x7d4] sm:$0xff]
    %v427 = vld [vmem:[#allocation2 + $0x7dc] sm:$0xf]
    %v428 = vld [vmem:[#allocation2 + $0x7e0] sm:$0xff]
    %v429 = vld [vmem:[#allocation2 + $0x7e8] sm:$0xf]
    %v430 = vld [vmem:[#allocation2 + $0x7ec] sm:$0xff]
    %v431 = vld [vmem:[#allocation2 + $0x7f4] sm:$0xf]
    %v432 = vld [vmem:[#allocation2 + $0x7f8] sm:$0xff]
    %v433 = vld [vmem:[#allocation2 + $0x800] sm:$0xf]
    %v434 = vld [vmem:[#allocation2 + $0x804] sm:$0xff]
    %v435 = vld [vmem:[#allocation2 + $0x80c] sm:$0xf]
    %v436 = vld [vmem:[#allocation2 + $0x810] sm:$0xff]
    %v437 = vld [vmem:[#allocation2 + $0x818] sm:$0xf]
    %v438 = vld [vmem:[#allocation2 + $0x81c] sm:$0xff]
    %v439 = vld [vmem:[#allocation2 + $0x824] sm:$0xf]
    %v440 = vld [vmem:[#allocation2 + $0x828] sm:$0xff]
    %v441 = vld [vmem:[#allocation2 + $0x830] sm:$0xf]
    %v442 = vld [vmem:[#allocation2 + $0x834] sm:$0xff]
    %v443 = vld [vmem:[#allocation2 + $0x83c] sm:$0xf]
    %v444 = vld [vmem:[#allocation2 + $0x840] sm:$0xff]
    %v445 = vld [vmem:[#allocation2 + $0x848] sm:$0xf]
    %v446 = vld [vmem:[#allocation2 + $0x84c] sm:$0xff]
    %v447 = vld [vmem:[#allocation2 + $0x854] sm:$0xf]
    %v448 = vld [vmem:[#allocation2 + $0x858] sm:$0xff]
    %v449 = vld [vmem:[#allocation2 + $0x860] sm:$0xf]
    %v450 = vld [vmem:[#allocation2 + $0x864] sm:$0xff]
    %v451 = vld [vmem:[#allocation2 + $0x86c] sm:$0xf]
    %v452 = vld [vmem:[#allocation2 + $0x870] sm:$0xff]
    %v453 = vld [vmem:[#allocation2 + $0x878] sm:$0xf]
    %v454 = vld [vmem:[#allocation2 + $0x87c] sm:$0xff]
    %v455 = vld [vmem:[#allocation2 + $0x884] sm:$0xf]
    %v456 = vld [vmem:[#allocation2 + $0x888] sm:$0xff]
    %v457 = vld [vmem:[#allocation2 + $0x890] sm:$0xf]
    %v458 = vld [vmem:[#allocation2 + $0x894] sm:$0xff]
    %v459 = vld [vmem:[#allocation2 + $0x89c] sm:$0xf]
    %v460 = vld [vmem:[#allocation2 + $0x8a0] sm:$0xff]
    %v461 = vld [vmem:[#allocation2 + $0x8a8] sm:$0xf]
    %v462 = vld [vmem:[#allocation2 + $0x8ac] sm:$0xff]
    %v463 = vld [vmem:[#allocation2 + $0x8b4] sm:$0xf]
    %v464 = vld [vmem:[#allocation2 + $0x8b8] sm:$0xff]
    %v465 = vld [vmem:[#allocation2 + $0x8c0] sm:$0xf]
    %v466 = vld [vmem:[#allocation2 + $0x8c4] sm:$0xff]
    %v467 = vld [vmem:[#allocation2 + $0x8cc] sm:$0xf]
    %v468 = vld [vmem:[#allocation2 + $0x8d0] sm:$0xff]
    %v469 = vld [vmem:[#allocation2 + $0x8d8] sm:$0xf]
    %v470 = vld [vmem:[#allocation2 + $0x8dc] sm:$0xff]
    %v471 = vld [vmem:[#allocation2 + $0x8e4] sm:$0xf]
    %v472 = vld [vmem:[#allocation2 + $0x8e8] sm:$0xff]
    %v473 = vld [vmem:[#allocation2 + $0x8f0] sm:$0xf]
    %v474 = vld [vmem:[#allocation2 + $0x8f4] sm:$0xff]
    %v475 = vld [vmem:[#allocation2 + $0x8fc] sm:$0xf]
    %v476 = vld [vmem:[#allocation2 + $0x900] sm:$0xff]
    %v477 = vld [vmem:[#allocation2 + $0x908] sm:$0xf]
    %v478 = vld [vmem:[#allocation2 + $0x90c] sm:$0xff]
    %v479 = vld [vmem:[#allocation2 + $0x914] sm:$0xf]
    %v480 = vld [vmem:[#allocation2 + $0x918] sm:$0xff]
    %v481 = vld [vmem:[#allocation2 + $0x920] sm:$0xf]
    %v482 = vld [vmem:[#allocation2 + $0x924] sm:$0xff]
    %v483 = vld [vmem:[#allocation2 + $0x92c] sm:$0xf]
    %v484 = vld [vmem:[#allocation2 + $0x930] sm:$0xff]
    %v485 = vld [vmem:[#allocation2 + $0x938] sm:$0xf]
    %v486 = vld [vmem:[#allocation2 + $0x93c] sm:$0xff]
    %v487 = vld [vmem:[#allocation2 + $0x944] sm:$0xf]
    %v488 = vld [vmem:[#allocation2 + $0x948] sm:$0xff]
    %v489 = vld [vmem:[#allocation2 + $0x950] sm:$0xf]
    %v490 = vld [vmem:[#allocation2 + $0x954] sm:$0xff]
    %v491 = vld [vmem:[#allocation2 + $0x95c] sm:$0xf]
    %v492 = vld [vmem:[#allocation2 + $0x960] sm:$0xff]
    %v493 = vld [vmem:[#allocation2 + $0x968] sm:$0xf]
    %v494 = vld [vmem:[#allocation2 + $0x96c] sm:$0xff]
    %v495 = vld [vmem:[#allocation2 + $0x974] sm:$0xf]
    %v496 = vld [vmem:[#allocation2 + $0x978] sm:$0xff]
    %v497 = vld [vmem:[#allocation2 + $0x980] sm:$0xf]
    %v498 = vld [vmem:[#allocation2 + $0x984] sm:$0xff]
    %v499 = vld [vmem:[#allocation2 + $0x98c] sm:$0xf]
    %v500 = vld [vmem:[#allocation2 + $0x990] sm:$0xff]
    %v501 = vld [vmem:[#allocation2 + $0x998] sm:$0xf]
    %v502 = vld [vmem:[#allocation2 + $0x99c] sm:$0xff]
    %v503 = vld [vmem:[#allocation2 + $0x9a4] sm:$0xf]
    %v504 = vld [vmem:[#allocation2 + $0x9a8] sm:$0xff]
    %v505 = vld [vmem:[#allocation2 + $0x9b0] sm:$0xf]
    %v506 = vld [vmem:[#allocation2 + $0x9b4] sm:$0xff]
    %v507 = vld [vmem:[#allocation2 + $0x9bc] sm:$0xf]
    %v508 = vld [vmem:[#allocation2 + $0x9c0] sm:$0xff]
    %v509 = vld [vmem:[#allocation2 + $0x9c8] sm:$0xf]
    %v510 = vld [vmem:[#allocation2 + $0x9cc] sm:$0xff]
    %v511 = vld [vmem:[#allocation2 + $0x9d4] sm:$0xf]
    %v512 = vld [vmem:[#allocation2 + $0x9d8] sm:$0xff]
    %v513 = vld [vmem:[#allocation2 + $0x9e0] sm:$0xf]
    %v514 = vld [vmem:[#allocation2 + $0x9e4] sm:$0xff]
    %v515 = vld [vmem:[#allocation2 + $0x9ec] sm:$0xf]
    %v516 = vld [vmem:[#allocation2 + $0x9f0] sm:$0xff]
    %v517 = vld [vmem:[#allocation2 + $0x9f8] sm:$0xf]
    %v518 = vld [vmem:[#allocation2 + $0x9fc] sm:$0xff]
    %v519 = vld [vmem:[#allocation2 + $0xa04] sm:$0xf]
    %v520 = vld [vmem:[#allocation2 + $0xa08] sm:$0xff]
    %v521 = vld [vmem:[#allocation2 + $0xa10] sm:$0xf]
    %v522 = vld [vmem:[#allocation2 + $0xa14] sm:$0xff]
    %v523 = vld [vmem:[#allocation2 + $0xa1c] sm:$0xf]
    %v524 = vld [vmem:[#allocation2 + $0xa20] sm:$0xff]
    %v525 = vld [vmem:[#allocation2 + $0xa28] sm:$0xf]
    %v526 = vld [vmem:[#allocation2 + $0xa2c] sm:$0xff]
    %v527 = vld [vmem:[#allocation2 + $0xa34] sm:$0xf]
    %v528 = vld [vmem:[#allocation2 + $0xa38] sm:$0xff]
    %v529 = vld [vmem:[#allocation2 + $0xa40] sm:$0xf]
    %v530 = vld [vmem:[#allocation2 + $0xa44] sm:$0xff]
    %v531 = vld [vmem:[#allocation2 + $0xa4c] sm:$0xf]
    %v532 = vld [vmem:[#allocation2 + $0xa50] sm:$0xff]
    %v533 = vld [vmem:[#allocation2 + $0xa58] sm:$0xf]
    %v534 = vld [vmem:[#allocation2 + $0xa5c] sm:$0xff]
    %v535 = vld [vmem:[#allocation2 + $0xa64] sm:$0xf]
    %v536 = vld [vmem:[#allocation2 + $0xa68] sm:$0xff]
    %v537 = vld [vmem:[#allocation2 + $0xa70] sm:$0xf]
    %v538 = vld [vmem:[#allocation2 + $0xa74] sm:$0xff]
    %v539 = vld [vmem:[#allocation2 + $0xa7c] sm:$0xf]
    %v540 = vld [vmem:[#allocation2 + $0xa80] sm:$0xff]
    %v541 = vld [vmem:[#allocation2 + $0xa88] sm:$0xf]
    %v542 = vld [vmem:[#allocation2 + $0xa8c] sm:$0xff]
    %v543 = vld [vmem:[#allocation2 + $0xa94] sm:$0xf]
    %v544 = vld [vmem:[#allocation2 + $0xa98] sm:$0xff]
    %v545 = vld [vmem:[#allocation2 + $0xaa0] sm:$0xf]
    %v546 = vld [vmem:[#allocation2 + $0xaa4] sm:$0xff]
    %v547 = vld [vmem:[#allocation2 + $0xaac] sm:$0xf]
    %v548 = vld [vmem:[#allocation2 + $0xab0] sm:$0xff]
    %v549 = vld [vmem:[#allocation2 + $0xab8] sm:$0xf]
    %v550 = vld [vmem:[#allocation2 + $0xabc] sm:$0xff]
    %v551 = vld [vmem:[#allocation2 + $0xac4] sm:$0xf]
    %v552 = vld [vmem:[#allocation2 + $0xac8] sm:$0xff]
    %v553 = vld [vmem:[#allocation2 + $0xad0] sm:$0xf]
    %v554 = vld [vmem:[#allocation2 + $0xad4] sm:$0xff]
    %v555 = vld [vmem:[#allocation2 + $0xadc] sm:$0xf]
    %v556 = vld [vmem:[#allocation2 + $0xae0] sm:$0xff]
    %v557 = vld [vmem:[#allocation2 + $0xae8] sm:$0xf]
    %v558 = vld [vmem:[#allocation2 + $0xaec] sm:$0xff]
    %v559 = vld [vmem:[#allocation2 + $0xaf4] sm:$0xf]
    %v560 = vld [vmem:[#allocation2 + $0xaf8] sm:$0xff]
    %v561 = vld [vmem:[#allocation2 + $0xb00] sm:$0xf]
    %v562 = vld [vmem:[#allocation2 + $0xb04] sm:$0xff]
    %v563 = vld [vmem:[#allocation2 + $0xb0c] sm:$0xf]
    %v564 = vld [vmem:[#allocation2 + $0xb10] sm:$0xff]
    %v565 = vld [vmem:[#allocation2 + $0xb18] sm:$0xf]
    %v566 = vld [vmem:[#allocation2 + $0xb1c] sm:$0xff]
    %v567 = vld [vmem:[#allocation2 + $0xb24] sm:$0xf]
    %v568 = vld [vmem:[#allocation2 + $0xb28] sm:$0xff]
    %v569 = vld [vmem:[#allocation2 + $0xb30] sm:$0xf]
    %v570 = vld [vmem:[#allocation2 + $0xb34] sm:$0xff]
    %v571 = vld [vmem:[#allocation2 + $0xb3c] sm:$0xf]
    %v572 = vld [vmem:[#allocation2 + $0xb40] sm:$0xff]
    %v573 = vld [vmem:[#allocation2 + $0xb48] sm:$0xf]
    %v574 = vld [vmem:[#allocation2 + $0xb4c] sm:$0xff]
    %v575 = vld [vmem:[#allocation2 + $0xb54] sm:$0xf]
    %v576 = vld [vmem:[#allocation2 + $0xb58] sm:$0xff]
    %v577 = vld [vmem:[#allocation2 + $0xb60] sm:$0xf]
    %v578 = vld [vmem:[#allocation2 + $0xb64] sm:$0xff]
    %v579 = vld [vmem:[#allocation2 + $0xb6c] sm:$0xf]
    %v580 = vld [vmem:[#allocation2 + $0xb70] sm:$0xff]
    %v581 = vld [vmem:[#allocation2 + $0xb78] sm:$0xf]
    %v582 = vld [vmem:[#allocation2 + $0xb7c] sm:$0xff]
    %v583 = vld [vmem:[#allocation2 + $0xb84] sm:$0xf]
    %v584 = vld [vmem:[#allocation2 + $0xb88] sm:$0xff]
    %v585 = vld [vmem:[#allocation2 + $0xb90] sm:$0xf]
    %v586 = vld [vmem:[#allocation2 + $0xb94] sm:$0xff]
    %v587 = vld [vmem:[#allocation2 + $0xb9c] sm:$0xf]
    %v588 = vld [vmem:[#allocation2 + $0xba0] sm:$0xff]
    %v589 = vld [vmem:[#allocation2 + $0xba8] sm:$0xf]
    %v590 = vld [vmem:[#allocation2 + $0xbac] sm:$0xff]
    %v591 = vld [vmem:[#allocation2 + $0xbb4] sm:$0xf]
    %v592 = vld [vmem:[#allocation2 + $0xbb8] sm:$0xff]
    %v593 = vld [vmem:[#allocation2 + $0xbc0] sm:$0xf]
    %v594 = vld [vmem:[#allocation2 + $0xbc4] sm:$0xff]
    %v595 = vld [vmem:[#allocation2 + $0xbcc] sm:$0xf]
    %v596 = vld [vmem:[#allocation2 + $0xbd0] sm:$0xff]
    %v597 = vld [vmem:[#allocation2 + $0xbd8] sm:$0xf]
    %v598 = vld [vmem:[#allocation2 + $0xbdc] sm:$0xff]
    %v599 = vld [vmem:[#allocation2 + $0xbe4] sm:$0xf]
    %v600 = vld [vmem:[#allocation2 + $0xbe8] sm:$0xff]
    %v601 = vld [vmem:[#allocation2 + $0xbf0] sm:$0xf]
    %v602 = vld [vmem:[#allocation2 + $0xbf4] sm:$0xff]
    %v603 = vld [vmem:[#allocation2 + $0xbfc] sm:$0xf]
    %v604 = vld [vmem:[#allocation2 + $0xc00] sm:$0xff]
    %v605 = vld [vmem:[#allocation2 + $0xc08] sm:$0xf]
    %v606 = vld [vmem:[#allocation2 + $0xc0c] sm:$0xff]
    %v607 = vld [vmem:[#allocation2 + $0xc14] sm:$0xf]
    %v608 = vld [vmem:[#allocation2 + $0xc18] sm:$0xff]
    %v609 = vld [vmem:[#allocation2 + $0xc20] sm:$0xf]
    %v610 = vld [vmem:[#allocation2 + $0xc24] sm:$0xff]
    %v611 = vld [vmem:[#allocation2 + $0xc2c] sm:$0xf]
    %v612 = vld [vmem:[#allocation2 + $0xc30] sm:$0xff]
    %v613 = vld [vmem:[#allocation2 + $0xc38] sm:$0xf]
    %v614 = vld [vmem:[#allocation2 + $0xc3c] sm:$0xff]
    %v615 = vld [vmem:[#allocation2 + $0xc44] sm:$0xf]
    %v616 = vld [vmem:[#allocation2 + $0xc48] sm:$0xff]
    %v617 = vld [vmem:[#allocation2 + $0xc50] sm:$0xf]
    %v618 = vld [vmem:[#allocation2 + $0xc54] sm:$0xff]
    %v619 = vld [vmem:[#allocation2 + $0xc5c] sm:$0xf]
    %v620 = vld [vmem:[#allocation2 + $0xc60] sm:$0xff]
    %v621 = vld [vmem:[#allocation2 + $0xc68] sm:$0xf]
    %v622 = vld [vmem:[#allocation2 + $0xc6c] sm:$0xff]
    %v623 = vld [vmem:[#allocation2 + $0xc74] sm:$0xf]
    %v624 = vld [vmem:[#allocation2 + $0xc78] sm:$0xff]
    %v625 = vld [vmem:[#allocation2 + $0xc80] sm:$0xf]
    %v626 = vld [vmem:[#allocation2 + $0xc84] sm:$0xff]
    %v627 = vld [vmem:[#allocation2 + $0xc8c] sm:$0xf]
    %v628 = vld [vmem:[#allocation2 + $0xc90] sm:$0xff]
    %v629 = vld [vmem:[#allocation2 + $0xc98] sm:$0xf]
    %v630 = vld [vmem:[#allocation2 + $0xc9c] sm:$0xff]
    %v631 = vld [vmem:[#allocation2 + $0xca4] sm:$0xf]
    %v632 = vld [vmem:[#allocation2 + $0xca8] sm:$0xff]
    %v633 = vld [vmem:[#allocation2 + $0xcb0] sm:$0xf]
    %v634 = vld [vmem:[#allocation2 + $0xcb4] sm:$0xff]
    %v635 = vld [vmem:[#allocation2 + $0xcbc] sm:$0xf]
    %v636 = vld [vmem:[#allocation7] sm:$0x7]
    %v638 = vlaneseq
    %v639 = vshrl.u32 %v638, 7
    %v640 = vsub.s32 0, %v639
    %v641 = vrot.slane %v636, %v640
    %v642 = vlaneseq
    %v643 = vshrl.u32 %v642, 7
    %v644 = vsub.s32 1, %v643
    %v645 = vrot.slane %v636, %v644
    %v646 = vlaneseq
    %v647 = vshrl.u32 %v646, 7
    %v648 = vsub.s32 2, %v647
    %v649 = vrot.slane %v636, %v648
    %v671 = vunpack.c.l.b16 %v74
    %v672 = vunpack.c.h.b16 %v74
    %v673 = vunpack.c.l.b16 %v75
    %v674 = vunpack.c.h.b16 %v75
    %v675 = vunpack.c.l.b16 %v76
    %v676 = vunpack.c.h.b16 %v76
    %v677 = vunpack.c.l.b16 %v77
    %v678 = vunpack.c.h.b16 %v77
    %v679 = vunpack.c.l.b16 %v78
    %v680 = vunpack.c.h.b16 %v78
    %v681 = vunpack.c.l.b16 %v79
    %v682 = vunpack.c.h.b16 %v79
    %v683 = vunpack.c.l.b16 %v80
    %v684 = vunpack.c.h.b16 %v80
    %v685 = vunpack.c.l.b16 %v81
    %v686 = vunpack.c.h.b16 %v81
    %v687 = vunpack.c.l.b16 %v82
    %v688 = vunpack.c.l.b16 %v83
    %v689 = vunpack.c.h.b16 %v83
    %v690 = vunpack.c.l.b16 %v84
    %v691 = vunpack.c.h.b16 %v84
    %v692 = vunpack.c.l.b16 %v85
    %v693 = vunpack.c.h.b16 %v85
    %v694 = vunpack.c.l.b16 %v86
    %v695 = vunpack.c.h.b16 %v86
    %v696 = vunpack.c.l.b16 %v87
    %v697 = vunpack.c.h.b16 %v87
    %v698 = vunpack.c.l.b16 %v88
    %v699 = vunpack.c.h.b16 %v88
    %v700 = vunpack.c.l.b16 %v89
    %v701 = vunpack.c.h.b16 %v89
    %v702 = vunpack.c.l.b16 %v90
    %v703 = vunpack.c.h.b16 %v90
    %v704 = vunpack.c.l.b16 %v91
    %v705 = vpack.c.b16 %v688, %v671
    %v706 = vpack.c.b16 %v689, %v672
    %v707 = vpack.c.b16 %v690, %v673
    %v708 = vpack.c.b16 %v691, %v674
    %v709 = vpack.c.b16 %v692, %v675
    %v710 = vpack.c.b16 %v693, %v676
    %v711 = vpack.c.b16 %v694, %v677
    %v712 = vpack.c.b16 %v695, %v678
    %v713 = vpack.c.b16 %v696, %v679
    %v714 = vpack.c.b16 %v697, %v680
    %v715 = vpack.c.b16 %v698, %v681
    %v716 = vpack.c.b16 %v699, %v682
    %v717 = vpack.c.b16 %v700, %v683
    %v718 = vpack.c.b16 %v701, %v684
    %v719 = vpack.c.b16 %v702, %v685
    %v720 = vpack.c.b16 %v703, %v686
    %v721 = vpack.c.b16 %v704, %v687
    %v1283 = vunpack.c.l.b16 %v92
    %v1284 = vunpack.c.h.b16 %v92
    %v1285 = vunpack.c.l.b16 %v93
    %v1286 = vunpack.c.l.b16 %v94
    %v1287 = vunpack.c.h.b16 %v94
    %v1288 = vunpack.c.l.b16 %v95
    %v1289 = vunpack.c.l.b16 %v96
    %v1290 = vunpack.c.h.b16 %v96
    %v1291 = vunpack.c.l.b16 %v97
    %v1292 = vunpack.c.l.b16 %v98
    %v1293 = vunpack.c.h.b16 %v98
    %v1294 = vunpack.c.l.b16 %v99
    %v1295 = vunpack.c.l.b16 %v100
    %v1296 = vunpack.c.h.b16 %v100
    %v1297 = vunpack.c.l.b16 %v101
    %v1298 = vunpack.c.l.b16 %v102
    %v1299 = vunpack.c.h.b16 %v102
    %v1300 = vunpack.c.l.b16 %v103
    %v1301 = vunpack.c.l.b16 %v104
    %v1302 = vunpack.c.h.b16 %v104
    %v1303 = vunpack.c.l.b16 %v105
    %v1304 = vunpack.c.l.b16 %v106
    %v1305 = vunpack.c.h.b16 %v106
    %v1306 = vunpack.c.l.b16 %v107
    %v1307 = vunpack.c.l.b16 %v108
    %v1308 = vunpack.c.h.b16 %v108
    %v1309 = vunpack.c.l.b16 %v109
    %v1310 = vunpack.c.l.b16 %v110
    %v1311 = vunpack.c.h.b16 %v110
    %v1312 = vunpack.c.l.b16 %v111
    %v1313 = vunpack.c.l.b16 %v112
    %v1314 = vunpack.c.h.b16 %v112
    %v1315 = vunpack.c.l.b16 %v113
    %v1316 = vunpack.c.l.b16 %v114
    %v1317 = vunpack.c.h.b16 %v114
    %v1318 = vunpack.c.l.b16 %v115
    %v1319 = vunpack.c.l.b16 %v116
    %v1320 = vunpack.c.h.b16 %v116
    %v1321 = vunpack.c.l.b16 %v117
    %v1322 = vunpack.c.l.b16 %v118
    %v1323 = vunpack.c.h.b16 %v118
    %v1324 = vunpack.c.l.b16 %v119
    %v1325 = vunpack.c.l.b16 %v120
    %v1326 = vunpack.c.h.b16 %v120
    %v1327 = vunpack.c.l.b16 %v121
    %v1328 = vunpack.c.l.b16 %v122
    %v1329 = vunpack.c.h.b16 %v122
    %v1330 = vunpack.c.l.b16 %v123
    %v1331 = vunpack.c.l.b16 %v124
    %v1332 = vunpack.c.h.b16 %v124
    %v1333 = vunpack.c.l.b16 %v125
    %v1334 = vunpack.c.l.b16 %v126
    %v1335 = vunpack.c.h.b16 %v126
    %v1336 = vunpack.c.l.b16 %v127
    %v1337 = vunpack.c.l.b16 %v128
    %v1338 = vunpack.c.h.b16 %v128
    %v1339 = vunpack.c.l.b16 %v129
    %v1340 = vunpack.c.l.b16 %v130
    %v1341 = vunpack.c.h.b16 %v130
    %v1342 = vunpack.c.l.b16 %v131
    %v1343 = vunpack.c.l.b16 %v132
    %v1344 = vunpack.c.h.b16 %v132
    %v1345 = vunpack.c.l.b16 %v133
    %v1346 = vunpack.c.l.b16 %v134
    %v1347 = vunpack.c.h.b16 %v134
    %v1348 = vunpack.c.l.b16 %v135
    %v1349 = vunpack.c.l.b16 %v136
    %v1350 = vunpack.c.h.b16 %v136
    %v1351 = vunpack.c.l.b16 %v137
    %v1352 = vunpack.c.l.b16 %v138
    %v1353 = vunpack.c.h.b16 %v138
    %v1354 = vunpack.c.l.b16 %v139
    %v1355 = vunpack.c.l.b16 %v140
    %v1356 = vunpack.c.h.b16 %v140
    %v1357 = vunpack.c.l.b16 %v141
    %v1358 = vunpack.c.l.b16 %v142
    %v1359 = vunpack.c.h.b16 %v142
    %v1360 = vunpack.c.l.b16 %v143
    %v1361 = vunpack.c.l.b16 %v144
    %v1362 = vunpack.c.h.b16 %v144
    %v1363 = vunpack.c.l.b16 %v145
    %v1364 = vunpack.c.l.b16 %v146
    %v1365 = vunpack.c.h.b16 %v146
    %v1366 = vunpack.c.l.b16 %v147
    %v1367 = vunpack.c.l.b16 %v148
    %v1368 = vunpack.c.h.b16 %v148
    %v1369 = vunpack.c.l.b16 %v149
    %v1370 = vunpack.c.l.b16 %v150
    %v1371 = vunpack.c.h.b16 %v150
    %v1372 = vunpack.c.l.b16 %v151
    %v1373 = vunpack.c.l.b16 %v152
    %v1374 = vunpack.c.h.b16 %v152
    %v1375 = vunpack.c.l.b16 %v153
    %v1376 = vunpack.c.l.b16 %v154
    %v1377 = vunpack.c.h.b16 %v154
    %v1378 = vunpack.c.l.b16 %v155
    %v1379 = vunpack.c.l.b16 %v156
    %v1380 = vunpack.c.h.b16 %v156
    %v1381 = vunpack.c.l.b16 %v157
    %v1382 = vunpack.c.l.b16 %v158
    %v1383 = vunpack.c.h.b16 %v158
    %v1384 = vunpack.c.l.b16 %v159
    %v1385 = vunpack.c.l.b16 %v160
    %v1386 = vunpack.c.h.b16 %v160
    %v1387 = vunpack.c.l.b16 %v161
    %v1388 = vunpack.c.l.b16 %v162
    %v1389 = vunpack.c.h.b16 %v162
    %v1390 = vunpack.c.l.b16 %v163
    %v1391 = vunpack.c.l.b16 %v164
    %v1392 = vunpack.c.h.b16 %v164
    %v1393 = vunpack.c.l.b16 %v165
    %v1394 = vunpack.c.l.b16 %v166
    %v1395 = vunpack.c.h.b16 %v166
    %v1396 = vunpack.c.l.b16 %v167
    %v1397 = vunpack.c.l.b16 %v168
    %v1398 = vunpack.c.h.b16 %v168
    %v1399 = vunpack.c.l.b16 %v169
    %v1400 = vunpack.c.l.b16 %v170
    %v1401 = vunpack.c.h.b16 %v170
    %v1402 = vunpack.c.l.b16 %v171
    %v1403 = vunpack.c.l.b16 %v172
    %v1404 = vunpack.c.h.b16 %v172
    %v1405 = vunpack.c.l.b16 %v173
    %v1406 = vunpack.c.l.b16 %v174
    %v1407 = vunpack.c.h.b16 %v174
    %v1408 = vunpack.c.l.b16 %v175
    %v1409 = vunpack.c.l.b16 %v176
    %v1410 = vunpack.c.h.b16 %v176
    %v1411 = vunpack.c.l.b16 %v177
    %v1412 = vunpack.c.l.b16 %v178
    %v1413 = vunpack.c.h.b16 %v178
    %v1414 = vunpack.c.l.b16 %v179
    %v1415 = vunpack.c.l.b16 %v180
    %v1416 = vunpack.c.h.b16 %v180
    %v1417 = vunpack.c.l.b16 %v181
    %v1418 = vunpack.c.l.b16 %v182
    %v1419 = vunpack.c.h.b16 %v182
    %v1420 = vunpack.c.l.b16 %v183
    %v1421 = vunpack.c.l.b16 %v184
    %v1422 = vunpack.c.h.b16 %v184
    %v1423 = vunpack.c.l.b16 %v185
    %v1424 = vunpack.c.l.b16 %v186
    %v1425 = vunpack.c.h.b16 %v186
    %v1426 = vunpack.c.l.b16 %v187
    %v1427 = vunpack.c.l.b16 %v188
    %v1428 = vunpack.c.h.b16 %v188
    %v1429 = vunpack.c.l.b16 %v189
    %v1430 = vunpack.c.l.b16 %v190
    %v1431 = vunpack.c.h.b16 %v190
    %v1432 = vunpack.c.l.b16 %v191
    %v1433 = vunpack.c.l.b16 %v192
    %v1434 = vunpack.c.h.b16 %v192
    %v1435 = vunpack.c.l.b16 %v193
    %v1436 = vunpack.c.l.b16 %v194
    %v1437 = vunpack.c.h.b16 %v194
    %v1438 = vunpack.c.l.b16 %v195
    %v1439 = vunpack.c.l.b16 %v196
    %v1440 = vunpack.c.h.b16 %v196
    %v1441 = vunpack.c.l.b16 %v197
    %v1442 = vunpack.c.l.b16 %v198
    %v1443 = vunpack.c.h.b16 %v198
    %v1444 = vunpack.c.l.b16 %v199
    %v1445 = vunpack.c.l.b16 %v200
    %v1446 = vunpack.c.h.b16 %v200
    %v1447 = vunpack.c.l.b16 %v201
    %v1448 = vunpack.c.l.b16 %v202
    %v1449 = vunpack.c.h.b16 %v202
    %v1450 = vunpack.c.l.b16 %v203
    %v1451 = vunpack.c.l.b16 %v204
    %v1452 = vunpack.c.h.b16 %v204
    %v1453 = vunpack.c.l.b16 %v205
    %v1454 = vunpack.c.l.b16 %v206
    %v1455 = vunpack.c.h.b16 %v206
    %v1456 = vunpack.c.l.b16 %v207
    %v1457 = vunpack.c.l.b16 %v208
    %v1458 = vunpack.c.h.b16 %v208
    %v1459 = vunpack.c.l.b16 %v209
    %v1460 = vunpack.c.l.b16 %v210
    %v1461 = vunpack.c.h.b16 %v210
    %v1462 = vunpack.c.l.b16 %v211
    %v1463 = vunpack.c.l.b16 %v212
    %v1464 = vunpack.c.h.b16 %v212
    %v1465 = vunpack.c.l.b16 %v213
    %v1466 = vunpack.c.l.b16 %v214
    %v1467 = vunpack.c.h.b16 %v214
    %v1468 = vunpack.c.l.b16 %v215
    %v1469 = vunpack.c.l.b16 %v216
    %v1470 = vunpack.c.h.b16 %v216
    %v1471 = vunpack.c.l.b16 %v217
    %v1472 = vunpack.c.l.b16 %v218
    %v1473 = vunpack.c.h.b16 %v218
    %v1474 = vunpack.c.l.b16 %v219
    %v1475 = vunpack.c.l.b16 %v220
    %v1476 = vunpack.c.h.b16 %v220
    %v1477 = vunpack.c.l.b16 %v221
    %v1478 = vunpack.c.l.b16 %v222
    %v1479 = vunpack.c.h.b16 %v222
    %v1480 = vunpack.c.l.b16 %v223
    %v1481 = vunpack.c.l.b16 %v224
    %v1482 = vunpack.c.h.b16 %v224
    %v1483 = vunpack.c.l.b16 %v225
    %v1484 = vunpack.c.l.b16 %v226
    %v1485 = vunpack.c.h.b16 %v226
    %v1486 = vunpack.c.l.b16 %v227
    %v1487 = vunpack.c.l.b16 %v228
    %v1488 = vunpack.c.h.b16 %v228
    %v1489 = vunpack.c.l.b16 %v229
    %v1490 = vunpack.c.l.b16 %v230
    %v1491 = vunpack.c.h.b16 %v230
    %v1492 = vunpack.c.l.b16 %v231
    %v1493 = vunpack.c.l.b16 %v232
    %v1494 = vunpack.c.h.b16 %v232
    %v1495 = vunpack.c.l.b16 %v233
    %v1496 = vunpack.c.l.b16 %v234
    %v1497 = vunpack.c.h.b16 %v234
    %v1498 = vunpack.c.l.b16 %v235
    %v1499 = vunpack.c.l.b16 %v236
    %v1500 = vunpack.c.h.b16 %v236
    %v1501 = vunpack.c.l.b16 %v237
    %v1502 = vunpack.c.l.b16 %v238
    %v1503 = vunpack.c.h.b16 %v238
    %v1504 = vunpack.c.l.b16 %v239
    %v1505 = vunpack.c.l.b16 %v240
    %v1506 = vunpack.c.h.b16 %v240
    %v1507 = vunpack.c.l.b16 %v241
    %v1508 = vunpack.c.l.b16 %v242
    %v1509 = vunpack.c.h.b16 %v242
    %v1510 = vunpack.c.l.b16 %v243
    %v1511 = vunpack.c.l.b16 %v244
    %v1512 = vunpack.c.h.b16 %v244
    %v1513 = vunpack.c.l.b16 %v245
    %v1514 = vunpack.c.l.b16 %v246
    %v1515 = vunpack.c.h.b16 %v246
    %v1516 = vunpack.c.l.b16 %v247
    %v1517 = vunpack.c.l.b16 %v248
    %v1518 = vunpack.c.h.b16 %v248
    %v1519 = vunpack.c.l.b16 %v249
    %v1520 = vunpack.c.l.b16 %v250
    %v1521 = vunpack.c.h.b16 %v250
    %v1522 = vunpack.c.l.b16 %v251
    %v1523 = vunpack.c.l.b16 %v252
    %v1524 = vunpack.c.h.b16 %v252
    %v1525 = vunpack.c.l.b16 %v253
    %v1526 = vunpack.c.l.b16 %v254
    %v1527 = vunpack.c.h.b16 %v254
    %v1528 = vunpack.c.l.b16 %v255
    %v1529 = vunpack.c.l.b16 %v256
    %v1530 = vunpack.c.h.b16 %v256
    %v1531 = vunpack.c.l.b16 %v257
    %v1532 = vunpack.c.l.b16 %v258
    %v1533 = vunpack.c.h.b16 %v258
    %v1534 = vunpack.c.l.b16 %v259
    %v1535 = vunpack.c.l.b16 %v260
    %v1536 = vunpack.c.h.b16 %v260
    %v1537 = vunpack.c.l.b16 %v261
    %v1538 = vunpack.c.l.b16 %v262
    %v1539 = vunpack.c.h.b16 %v262
    %v1540 = vunpack.c.l.b16 %v263
    %v1541 = vunpack.c.l.b16 %v264
    %v1542 = vunpack.c.h.b16 %v264
    %v1543 = vunpack.c.l.b16 %v265
    %v1544 = vunpack.c.l.b16 %v266
    %v1545 = vunpack.c.h.b16 %v266
    %v1546 = vunpack.c.l.b16 %v267
    %v1547 = vunpack.c.l.b16 %v268
    %v1548 = vunpack.c.h.b16 %v268
    %v1549 = vunpack.c.l.b16 %v269
    %v1550 = vunpack.c.l.b16 %v270
    %v1551 = vunpack.c.h.b16 %v270
    %v1552 = vunpack.c.l.b16 %v271
    %v1553 = vunpack.c.l.b16 %v272
    %v1554 = vunpack.c.h.b16 %v272
    %v1555 = vunpack.c.l.b16 %v273
    %v1556 = vunpack.c.l.b16 %v274
    %v1557 = vunpack.c.h.b16 %v274
    %v1558 = vunpack.c.l.b16 %v275
    %v1559 = vunpack.c.l.b16 %v276
    %v1560 = vunpack.c.h.b16 %v276
    %v1561 = vunpack.c.l.b16 %v277
    %v1562 = vunpack.c.l.b16 %v278
    %v1563 = vunpack.c.h.b16 %v278
    %v1564 = vunpack.c.l.b16 %v279
    %v1565 = vunpack.c.l.b16 %v280
    %v1566 = vunpack.c.h.b16 %v280
    %v1567 = vunpack.c.l.b16 %v281
    %v1568 = vunpack.c.l.b16 %v282
    %v1569 = vunpack.c.h.b16 %v282
    %v1570 = vunpack.c.l.b16 %v283
    %v1571 = vunpack.c.l.b16 %v284
    %v1572 = vunpack.c.h.b16 %v284
    %v1573 = vunpack.c.l.b16 %v285
    %v1574 = vunpack.c.l.b16 %v286
    %v1575 = vunpack.c.h.b16 %v286
    %v1576 = vunpack.c.l.b16 %v287
    %v1577 = vunpack.c.l.b16 %v288
    %v1578 = vunpack.c.h.b16 %v288
    %v1579 = vunpack.c.l.b16 %v289
    %v1580 = vunpack.c.l.b16 %v290
    %v1581 = vunpack.c.h.b16 %v290
    %v1582 = vunpack.c.l.b16 %v291
    %v1583 = vunpack.c.l.b16 %v292
    %v1584 = vunpack.c.h.b16 %v292
    %v1585 = vunpack.c.l.b16 %v293
    %v1586 = vunpack.c.l.b16 %v294
    %v1587 = vunpack.c.h.b16 %v294
    %v1588 = vunpack.c.l.b16 %v295
    %v1589 = vunpack.c.l.b16 %v296
    %v1590 = vunpack.c.h.b16 %v296
    %v1591 = vunpack.c.l.b16 %v297
    %v1592 = vunpack.c.l.b16 %v298
    %v1593 = vunpack.c.h.b16 %v298
    %v1594 = vunpack.c.l.b16 %v299
    %v1595 = vunpack.c.l.b16 %v300
    %v1596 = vunpack.c.h.b16 %v300
    %v1597 = vunpack.c.l.b16 %v301
    %v1598 = vunpack.c.l.b16 %v302
    %v1599 = vunpack.c.h.b16 %v302
    %v1600 = vunpack.c.l.b16 %v303
    %v1601 = vunpack.c.l.b16 %v304
    %v1602 = vunpack.c.h.b16 %v304
    %v1603 = vunpack.c.l.b16 %v305
    %v1604 = vunpack.c.l.b16 %v306
    %v1605 = vunpack.c.h.b16 %v306
    %v1606 = vunpack.c.l.b16 %v307
    %v1607 = vunpack.c.l.b16 %v308
    %v1608 = vunpack.c.h.b16 %v308
    %v1609 = vunpack.c.l.b16 %v309
    %v1610 = vunpack.c.l.b16 %v310
    %v1611 = vunpack.c.h.b16 %v310
    %v1612 = vunpack.c.l.b16 %v311
    %v1613 = vunpack.c.l.b16 %v312
    %v1614 = vunpack.c.h.b16 %v312
    %v1615 = vunpack.c.l.b16 %v313
    %v1616 = vunpack.c.l.b16 %v314
    %v1617 = vunpack.c.h.b16 %v314
    %v1618 = vunpack.c.l.b16 %v315
    %v1619 = vunpack.c.l.b16 %v316
    %v1620 = vunpack.c.h.b16 %v316
    %v1621 = vunpack.c.l.b16 %v317
    %v1622 = vunpack.c.l.b16 %v318
    %v1623 = vunpack.c.h.b16 %v318
    %v1624 = vunpack.c.l.b16 %v319
    %v1625 = vunpack.c.l.b16 %v320
    %v1626 = vunpack.c.h.b16 %v320
    %v1627 = vunpack.c.l.b16 %v321
    %v1628 = vunpack.c.l.b16 %v322
    %v1629 = vunpack.c.h.b16 %v322
    %v1630 = vunpack.c.l.b16 %v323
    %v1631 = vunpack.c.l.b16 %v324
    %v1632 = vunpack.c.h.b16 %v324
    %v1633 = vunpack.c.l.b16 %v325
    %v1634 = vunpack.c.l.b16 %v326
    %v1635 = vunpack.c.h.b16 %v326
    %v1636 = vunpack.c.l.b16 %v327
    %v1637 = vunpack.c.l.b16 %v328
    %v1638 = vunpack.c.h.b16 %v328
    %v1639 = vunpack.c.l.b16 %v329
    %v1640 = vunpack.c.l.b16 %v330
    %v1641 = vunpack.c.h.b16 %v330
    %v1642 = vunpack.c.l.b16 %v331
    %v1643 = vunpack.c.l.b16 %v332
    %v1644 = vunpack.c.h.b16 %v332
    %v1645 = vunpack.c.l.b16 %v333
    %v1646 = vunpack.c.l.b16 %v334
    %v1647 = vunpack.c.h.b16 %v334
    %v1648 = vunpack.c.l.b16 %v335
    %v1649 = vunpack.c.l.b16 %v336
    %v1650 = vunpack.c.h.b16 %v336
    %v1651 = vunpack.c.l.b16 %v337
    %v1652 = vunpack.c.l.b16 %v338
    %v1653 = vunpack.c.h.b16 %v338
    %v1654 = vunpack.c.l.b16 %v339
    %v1655 = vunpack.c.l.b16 %v340
    %v1656 = vunpack.c.h.b16 %v340
    %v1657 = vunpack.c.l.b16 %v341
    %v1658 = vunpack.c.l.b16 %v342
    %v1659 = vunpack.c.h.b16 %v342
    %v1660 = vunpack.c.l.b16 %v343
    %v1661 = vunpack.c.l.b16 %v344
    %v1662 = vunpack.c.h.b16 %v344
    %v1663 = vunpack.c.l.b16 %v345
    %v1664 = vunpack.c.l.b16 %v346
    %v1665 = vunpack.c.h.b16 %v346
    %v1666 = vunpack.c.l.b16 %v347
    %v1667 = vunpack.c.l.b16 %v348
    %v1668 = vunpack.c.h.b16 %v348
    %v1669 = vunpack.c.l.b16 %v349
    %v1670 = vunpack.c.l.b16 %v350
    %v1671 = vunpack.c.h.b16 %v350
    %v1672 = vunpack.c.l.b16 %v351
    %v1673 = vunpack.c.l.b16 %v352
    %v1674 = vunpack.c.h.b16 %v352
    %v1675 = vunpack.c.l.b16 %v353
    %v1676 = vunpack.c.l.b16 %v354
    %v1677 = vunpack.c.h.b16 %v354
    %v1678 = vunpack.c.l.b16 %v355
    %v1679 = vunpack.c.l.b16 %v356
    %v1680 = vunpack.c.h.b16 %v356
    %v1681 = vunpack.c.l.b16 %v357
    %v1682 = vunpack.c.l.b16 %v358
    %v1683 = vunpack.c.h.b16 %v358
    %v1684 = vunpack.c.l.b16 %v359
    %v1685 = vunpack.c.l.b16 %v360
    %v1686 = vunpack.c.h.b16 %v360
    %v1687 = vunpack.c.l.b16 %v361
    %v1688 = vunpack.c.l.b16 %v362
    %v1689 = vunpack.c.h.b16 %v362
    %v1690 = vunpack.c.l.b16 %v363
    %v1691 = vunpack.c.l.b16 %v364
    %v1692 = vunpack.c.h.b16 %v364
    %v1693 = vunpack.c.l.b16 %v365
    %v1694 = vunpack.c.l.b16 %v366
    %v1695 = vunpack.c.h.b16 %v366
    %v1696 = vunpack.c.l.b16 %v367
    %v1697 = vunpack.c.l.b16 %v368
    %v1698 = vunpack.c.h.b16 %v368
    %v1699 = vunpack.c.l.b16 %v369
    %v1700 = vunpack.c.l.b16 %v370
    %v1701 = vunpack.c.h.b16 %v370
    %v1702 = vunpack.c.l.b16 %v371
    %v1703 = vunpack.c.l.b16 %v372
    %v1704 = vunpack.c.h.b16 %v372
    %v1705 = vunpack.c.l.b16 %v373
    %v1706 = vunpack.c.l.b16 %v374
    %v1707 = vunpack.c.h.b16 %v374
    %v1708 = vunpack.c.l.b16 %v375
    %v1709 = vunpack.c.l.b16 %v376
    %v1710 = vunpack.c.h.b16 %v376
    %v1711 = vunpack.c.l.b16 %v377
    %v1712 = vunpack.c.l.b16 %v378
    %v1713 = vunpack.c.h.b16 %v378
    %v1714 = vunpack.c.l.b16 %v379
    %v1715 = vunpack.c.l.b16 %v380
    %v1716 = vunpack.c.h.b16 %v380
    %v1717 = vunpack.c.l.b16 %v381
    %v1718 = vunpack.c.l.b16 %v382
    %v1719 = vunpack.c.h.b16 %v382
    %v1720 = vunpack.c.l.b16 %v383
    %v1721 = vunpack.c.l.b16 %v384
    %v1722 = vunpack.c.h.b16 %v384
    %v1723 = vunpack.c.l.b16 %v385
    %v1724 = vunpack.c.l.b16 %v386
    %v1725 = vunpack.c.h.b16 %v386
    %v1726 = vunpack.c.l.b16 %v387
    %v1727 = vunpack.c.l.b16 %v388
    %v1728 = vunpack.c.h.b16 %v388
    %v1729 = vunpack.c.l.b16 %v389
    %v1730 = vunpack.c.l.b16 %v390
    %v1731 = vunpack.c.h.b16 %v390
    %v1732 = vunpack.c.l.b16 %v391
    %v1733 = vunpack.c.l.b16 %v392
    %v1734 = vunpack.c.h.b16 %v392
    %v1735 = vunpack.c.l.b16 %v393
    %v1736 = vunpack.c.l.b16 %v394
    %v1737 = vunpack.c.h.b16 %v394
    %v1738 = vunpack.c.l.b16 %v395
    %v1739 = vunpack.c.l.b16 %v396
    %v1740 = vunpack.c.h.b16 %v396
    %v1741 = vunpack.c.l.b16 %v397
    %v1742 = vunpack.c.l.b16 %v398
    %v1743 = vunpack.c.h.b16 %v398
    %v1744 = vunpack.c.l.b16 %v399
    %v1745 = vunpack.c.l.b16 %v400
    %v1746 = vunpack.c.h.b16 %v400
    %v1747 = vunpack.c.l.b16 %v401
    %v1748 = vunpack.c.l.b16 %v402
    %v1749 = vunpack.c.h.b16 %v402
    %v1750 = vunpack.c.l.b16 %v403
    %v1751 = vunpack.c.l.b16 %v404
    %v1752 = vunpack.c.h.b16 %v404
    %v1753 = vunpack.c.l.b16 %v405
    %v1754 = vunpack.c.l.b16 %v406
    %v1755 = vunpack.c.h.b16 %v406
    %v1756 = vunpack.c.l.b16 %v407
    %v1757 = vunpack.c.l.b16 %v408
    %v1758 = vunpack.c.h.b16 %v408
    %v1759 = vunpack.c.l.b16 %v409
    %v1760 = vunpack.c.l.b16 %v410
    %v1761 = vunpack.c.h.b16 %v410
    %v1762 = vunpack.c.l.b16 %v411
    %v1763 = vunpack.c.l.b16 %v412
    %v1764 = vunpack.c.h.b16 %v412
    %v1765 = vunpack.c.l.b16 %v413
    %v1766 = vunpack.c.l.b16 %v414
    %v1767 = vunpack.c.h.b16 %v414
    %v1768 = vunpack.c.l.b16 %v415
    %v1769 = vunpack.c.l.b16 %v416
    %v1770 = vunpack.c.h.b16 %v416
    %v1771 = vunpack.c.l.b16 %v417
    %v1772 = vunpack.c.l.b16 %v418
    %v1773 = vunpack.c.h.b16 %v418
    %v1774 = vunpack.c.l.b16 %v419
    %v1775 = vunpack.c.l.b16 %v420
    %v1776 = vunpack.c.h.b16 %v420
    %v1777 = vunpack.c.l.b16 %v421
    %v1778 = vunpack.c.l.b16 %v422
    %v1779 = vunpack.c.h.b16 %v422
    %v1780 = vunpack.c.l.b16 %v423
    %v1781 = vunpack.c.l.b16 %v424
    %v1782 = vunpack.c.h.b16 %v424
    %v1783 = vunpack.c.l.b16 %v425
    %v1784 = vunpack.c.l.b16 %v426
    %v1785 = vunpack.c.h.b16 %v426
    %v1786 = vunpack.c.l.b16 %v427
    %v1787 = vunpack.c.l.b16 %v428
    %v1788 = vunpack.c.h.b16 %v428
    %v1789 = vunpack.c.l.b16 %v429
    %v1790 = vunpack.c.l.b16 %v430
    %v1791 = vunpack.c.h.b16 %v430
    %v1792 = vunpack.c.l.b16 %v431
    %v1793 = vunpack.c.l.b16 %v432
    %v1794 = vunpack.c.h.b16 %v432
    %v1795 = vunpack.c.l.b16 %v433
    %v1796 = vunpack.c.l.b16 %v434
    %v1797 = vunpack.c.h.b16 %v434
    %v1798 = vunpack.c.l.b16 %v435
    %v1799 = vunpack.c.l.b16 %v436
    %v1800 = vunpack.c.h.b16 %v436
    %v1801 = vunpack.c.l.b16 %v437
    %v1802 = vunpack.c.l.b16 %v438
    %v1803 = vunpack.c.h.b16 %v438
    %v1804 = vunpack.c.l.b16 %v439
    %v1805 = vunpack.c.l.b16 %v440
    %v1806 = vunpack.c.h.b16 %v440
    %v1807 = vunpack.c.l.b16 %v441
    %v1808 = vunpack.c.l.b16 %v442
    %v1809 = vunpack.c.h.b16 %v442
    %v1810 = vunpack.c.l.b16 %v443
    %v1811 = vunpack.c.l.b16 %v444
    %v1812 = vunpack.c.h.b16 %v444
    %v1813 = vunpack.c.l.b16 %v445
    %v1814 = vunpack.c.l.b16 %v446
    %v1815 = vunpack.c.h.b16 %v446
    %v1816 = vunpack.c.l.b16 %v447
    %v1817 = vunpack.c.l.b16 %v448
    %v1818 = vunpack.c.h.b16 %v448
    %v1819 = vunpack.c.l.b16 %v449
    %v1820 = vunpack.c.l.b16 %v450
    %v1821 = vunpack.c.h.b16 %v450
    %v1822 = vunpack.c.l.b16 %v451
    %v1823 = vunpack.c.l.b16 %v452
    %v1824 = vunpack.c.h.b16 %v452
    %v1825 = vunpack.c.l.b16 %v453
    %v1826 = vunpack.c.l.b16 %v454
    %v1827 = vunpack.c.h.b16 %v454
    %v1828 = vunpack.c.l.b16 %v455
    %v1829 = vunpack.c.l.b16 %v456
    %v1830 = vunpack.c.h.b16 %v456
    %v1831 = vunpack.c.l.b16 %v457
    %v1832 = vunpack.c.l.b16 %v458
    %v1833 = vunpack.c.h.b16 %v458
    %v1834 = vunpack.c.l.b16 %v459
    %v1835 = vunpack.c.l.b16 %v460
    %v1836 = vunpack.c.h.b16 %v460
    %v1837 = vunpack.c.l.b16 %v461
    %v1838 = vunpack.c.l.b16 %v462
    %v1839 = vunpack.c.h.b16 %v462
    %v1840 = vunpack.c.l.b16 %v463
    %v1841 = vunpack.c.l.b16 %v464
    %v1842 = vunpack.c.h.b16 %v464
    %v1843 = vunpack.c.l.b16 %v465
    %v1844 = vunpack.c.l.b16 %v466
    %v1845 = vunpack.c.h.b16 %v466
    %v1846 = vunpack.c.l.b16 %v467
    %v1847 = vunpack.c.l.b16 %v468
    %v1848 = vunpack.c.h.b16 %v468
    %v1849 = vunpack.c.l.b16 %v469
    %v1850 = vunpack.c.l.b16 %v470
    %v1851 = vunpack.c.h.b16 %v470
    %v1852 = vunpack.c.l.b16 %v471
    %v1853 = vunpack.c.l.b16 %v472
    %v1854 = vunpack.c.h.b16 %v472
    %v1855 = vunpack.c.l.b16 %v473
    %v1856 = vunpack.c.l.b16 %v474
    %v1857 = vunpack.c.h.b16 %v474
    %v1858 = vunpack.c.l.b16 %v475
    %v1859 = vunpack.c.l.b16 %v476
    %v1860 = vunpack.c.h.b16 %v476
    %v1861 = vunpack.c.l.b16 %v477
    %v1862 = vunpack.c.l.b16 %v478
    %v1863 = vunpack.c.h.b16 %v478
    %v1864 = vunpack.c.l.b16 %v479
    %v1865 = vunpack.c.l.b16 %v480
    %v1866 = vunpack.c.h.b16 %v480
    %v1867 = vunpack.c.l.b16 %v481
    %v1868 = vunpack.c.l.b16 %v482
    %v1869 = vunpack.c.h.b16 %v482
    %v1870 = vunpack.c.l.b16 %v483
    %v1871 = vunpack.c.l.b16 %v484
    %v1872 = vunpack.c.h.b16 %v484
    %v1873 = vunpack.c.l.b16 %v485
    %v1874 = vunpack.c.l.b16 %v486
    %v1875 = vunpack.c.h.b16 %v486
    %v1876 = vunpack.c.l.b16 %v487
    %v1877 = vunpack.c.l.b16 %v488
    %v1878 = vunpack.c.h.b16 %v488
    %v1879 = vunpack.c.l.b16 %v489
    %v1880 = vunpack.c.l.b16 %v490
    %v1881 = vunpack.c.h.b16 %v490
    %v1882 = vunpack.c.l.b16 %v491
    %v1883 = vunpack.c.l.b16 %v492
    %v1884 = vunpack.c.h.b16 %v492
    %v1885 = vunpack.c.l.b16 %v493
    %v1886 = vunpack.c.l.b16 %v494
    %v1887 = vunpack.c.h.b16 %v494
    %v1888 = vunpack.c.l.b16 %v495
    %v1889 = vunpack.c.l.b16 %v496
    %v1890 = vunpack.c.h.b16 %v496
    %v1891 = vunpack.c.l.b16 %v497
    %v1892 = vunpack.c.l.b16 %v498
    %v1893 = vunpack.c.h.b16 %v498
    %v1894 = vunpack.c.l.b16 %v499
    %v1895 = vunpack.c.l.b16 %v500
    %v1896 = vunpack.c.h.b16 %v500
    %v1897 = vunpack.c.l.b16 %v501
    %v1898 = vunpack.c.l.b16 %v502
    %v1899 = vunpack.c.h.b16 %v502
    %v1900 = vunpack.c.l.b16 %v503
    %v1901 = vunpack.c.l.b16 %v504
    %v1902 = vunpack.c.h.b16 %v504
    %v1903 = vunpack.c.l.b16 %v505
    %v1904 = vunpack.c.l.b16 %v506
    %v1905 = vunpack.c.h.b16 %v506
    %v1906 = vunpack.c.l.b16 %v507
    %v1907 = vunpack.c.l.b16 %v508
    %v1908 = vunpack.c.h.b16 %v508
    %v1909 = vunpack.c.l.b16 %v509
    %v1910 = vunpack.c.l.b16 %v510
    %v1911 = vunpack.c.h.b16 %v510
    %v1912 = vunpack.c.l.b16 %v511
    %v1913 = vunpack.c.l.b16 %v512
    %v1914 = vunpack.c.h.b16 %v512
    %v1915 = vunpack.c.l.b16 %v513
    %v1916 = vunpack.c.l.b16 %v514
    %v1917 = vunpack.c.h.b16 %v514
    %v1918 = vunpack.c.l.b16 %v515
    %v1919 = vunpack.c.l.b16 %v516
    %v1920 = vunpack.c.h.b16 %v516
    %v1921 = vunpack.c.l.b16 %v517
    %v1922 = vunpack.c.l.b16 %v518
    %v1923 = vunpack.c.h.b16 %v518
    %v1924 = vunpack.c.l.b16 %v519
    %v1925 = vunpack.c.l.b16 %v520
    %v1926 = vunpack.c.h.b16 %v520
    %v1927 = vunpack.c.l.b16 %v521
    %v1928 = vunpack.c.l.b16 %v522
    %v1929 = vunpack.c.h.b16 %v522
    %v1930 = vunpack.c.l.b16 %v523
    %v1931 = vunpack.c.l.b16 %v524
    %v1932 = vunpack.c.h.b16 %v524
    %v1933 = vunpack.c.l.b16 %v525
    %v1934 = vunpack.c.l.b16 %v526
    %v1935 = vunpack.c.h.b16 %v526
    %v1936 = vunpack.c.l.b16 %v527
    %v1937 = vunpack.c.l.b16 %v528
    %v1938 = vunpack.c.h.b16 %v528
    %v1939 = vunpack.c.l.b16 %v529
    %v1940 = vunpack.c.l.b16 %v530
    %v1941 = vunpack.c.h.b16 %v530
    %v1942 = vunpack.c.l.b16 %v531
    %v1943 = vunpack.c.l.b16 %v532
    %v1944 = vunpack.c.h.b16 %v532
    %v1945 = vunpack.c.l.b16 %v533
    %v1946 = vunpack.c.l.b16 %v534
    %v1947 = vunpack.c.h.b16 %v534
    %v1948 = vunpack.c.l.b16 %v535
    %v1949 = vunpack.c.l.b16 %v536
    %v1950 = vunpack.c.h.b16 %v536
    %v1951 = vunpack.c.l.b16 %v537
    %v1952 = vunpack.c.l.b16 %v538
    %v1953 = vunpack.c.h.b16 %v538
    %v1954 = vunpack.c.l.b16 %v539
    %v1955 = vunpack.c.l.b16 %v540
    %v1956 = vunpack.c.h.b16 %v540
    %v1957 = vunpack.c.l.b16 %v541
    %v1958 = vunpack.c.l.b16 %v542
    %v1959 = vunpack.c.h.b16 %v542
    %v1960 = vunpack.c.l.b16 %v543
    %v1961 = vunpack.c.l.b16 %v544
    %v1962 = vunpack.c.h.b16 %v544
    %v1963 = vunpack.c.l.b16 %v545
    %v1964 = vunpack.c.l.b16 %v546
    %v1965 = vunpack.c.h.b16 %v546
    %v1966 = vunpack.c.l.b16 %v547
    %v1967 = vunpack.c.l.b16 %v548
    %v1968 = vunpack.c.h.b16 %v548
    %v1969 = vunpack.c.l.b16 %v549
    %v1970 = vunpack.c.l.b16 %v550
    %v1971 = vunpack.c.h.b16 %v550
    %v1972 = vunpack.c.l.b16 %v551
    %v1973 = vunpack.c.l.b16 %v552
    %v1974 = vunpack.c.h.b16 %v552
    %v1975 = vunpack.c.l.b16 %v553
    %v1976 = vunpack.c.l.b16 %v554
    %v1977 = vunpack.c.h.b16 %v554
    %v1978 = vunpack.c.l.b16 %v555
    %v1979 = vunpack.c.l.b16 %v556
    %v1980 = vunpack.c.h.b16 %v556
    %v1981 = vunpack.c.l.b16 %v557
    %v1982 = vunpack.c.l.b16 %v558
    %v1983 = vunpack.c.h.b16 %v558
    %v1984 = vunpack.c.l.b16 %v559
    %v1985 = vunpack.c.l.b16 %v560
    %v1986 = vunpack.c.h.b16 %v560
    %v1987 = vunpack.c.l.b16 %v561
    %v1988 = vunpack.c.l.b16 %v562
    %v1989 = vunpack.c.h.b16 %v562
    %v1990 = vunpack.c.l.b16 %v563
    %v1991 = vunpack.c.l.b16 %v564
    %v1992 = vunpack.c.h.b16 %v564
    %v1993 = vunpack.c.l.b16 %v565
    %v1994 = vunpack.c.l.b16 %v566
    %v1995 = vunpack.c.h.b16 %v566
    %v1996 = vunpack.c.l.b16 %v567
    %v1997 = vunpack.c.l.b16 %v568
    %v1998 = vunpack.c.h.b16 %v568
    %v1999 = vunpack.c.l.b16 %v569
    %v2000 = vunpack.c.l.b16 %v570
    %v2001 = vunpack.c.h.b16 %v570
    %v2002 = vunpack.c.l.b16 %v571
    %v2003 = vunpack.c.l.b16 %v572
    %v2004 = vunpack.c.h.b16 %v572
    %v2005 = vunpack.c.l.b16 %v573
    %v2006 = vunpack.c.l.b16 %v574
    %v2007 = vunpack.c.h.b16 %v574
    %v2008 = vunpack.c.l.b16 %v575
    %v2009 = vunpack.c.l.b16 %v576
    %v2010 = vunpack.c.h.b16 %v576
    %v2011 = vunpack.c.l.b16 %v577
    %v2012 = vunpack.c.l.b16 %v578
    %v2013 = vunpack.c.h.b16 %v578
    %v2014 = vunpack.c.l.b16 %v579
    %v2015 = vunpack.c.l.b16 %v580
    %v2016 = vunpack.c.h.b16 %v580
    %v2017 = vunpack.c.l.b16 %v581
    %v2018 = vunpack.c.l.b16 %v582
    %v2019 = vunpack.c.h.b16 %v582
    %v2020 = vunpack.c.l.b16 %v583
    %v2021 = vunpack.c.l.b16 %v584
    %v2022 = vunpack.c.h.b16 %v584
    %v2023 = vunpack.c.l.b16 %v585
    %v2024 = vunpack.c.l.b16 %v586
    %v2025 = vunpack.c.h.b16 %v586
    %v2026 = vunpack.c.l.b16 %v587
    %v2027 = vunpack.c.l.b16 %v588
    %v2028 = vunpack.c.h.b16 %v588
    %v2029 = vunpack.c.l.b16 %v589
    %v2030 = vunpack.c.l.b16 %v590
    %v2031 = vunpack.c.h.b16 %v590
    %v2032 = vunpack.c.l.b16 %v591
    %v2033 = vunpack.c.l.b16 %v592
    %v2034 = vunpack.c.h.b16 %v592
    %v2035 = vunpack.c.l.b16 %v593
    %v2036 = vunpack.c.l.b16 %v594
    %v2037 = vunpack.c.h.b16 %v594
    %v2038 = vunpack.c.l.b16 %v595
    %v2039 = vunpack.c.l.b16 %v596
    %v2040 = vunpack.c.h.b16 %v596
    %v2041 = vunpack.c.l.b16 %v597
    %v2042 = vunpack.c.l.b16 %v598
    %v2043 = vunpack.c.h.b16 %v598
    %v2044 = vunpack.c.l.b16 %v599
    %v2045 = vunpack.c.l.b16 %v600
    %v2046 = vunpack.c.h.b16 %v600
    %v2047 = vunpack.c.l.b16 %v601
    %v2048 = vunpack.c.l.b16 %v602
    %v2049 = vunpack.c.h.b16 %v602
    %v2050 = vunpack.c.l.b16 %v603
    %v2051 = vunpack.c.l.b16 %v604
    %v2052 = vunpack.c.h.b16 %v604
    %v2053 = vunpack.c.l.b16 %v605
    %v2054 = vunpack.c.l.b16 %v606
    %v2055 = vunpack.c.h.b16 %v606
    %v2056 = vunpack.c.l.b16 %v607
    %v2057 = vunpack.c.l.b16 %v608
    %v2058 = vunpack.c.h.b16 %v608
    %v2059 = vunpack.c.l.b16 %v609
    %v2060 = vunpack.c.l.b16 %v610
    %v2061 = vunpack.c.h.b16 %v610
    %v2062 = vunpack.c.l.b16 %v611
    %v2063 = vunpack.c.l.b16 %v612
    %v2064 = vunpack.c.h.b16 %v612
    %v2065 = vunpack.c.l.b16 %v613
    %v2066 = vunpack.c.l.b16 %v614
    %v2067 = vunpack.c.h.b16 %v614
    %v2068 = vunpack.c.l.b16 %v615
    %v2069 = vunpack.c.l.b16 %v616
    %v2070 = vunpack.c.h.b16 %v616
    %v2071 = vunpack.c.l.b16 %v617
    %v2072 = vunpack.c.l.b16 %v618
    %v2073 = vunpack.c.h.b16 %v618
    %v2074 = vunpack.c.l.b16 %v619
    %v2075 = vunpack.c.l.b16 %v620
    %v2076 = vunpack.c.h.b16 %v620
    %v2077 = vunpack.c.l.b16 %v621
    %v2078 = vunpack.c.l.b16 %v622
    %v2079 = vunpack.c.h.b16 %v622
    %v2080 = vunpack.c.l.b16 %v623
    %v2081 = vunpack.c.l.b16 %v624
    %v2082 = vunpack.c.h.b16 %v624
    %v2083 = vunpack.c.l.b16 %v625
    %v2084 = vunpack.c.l.b16 %v626
    %v2085 = vunpack.c.h.b16 %v626
    %v2086 = vunpack.c.l.b16 %v627
    %v2087 = vunpack.c.l.b16 %v628
    %v2088 = vunpack.c.h.b16 %v628
    %v2089 = vunpack.c.l.b16 %v629
    %v2090 = vunpack.c.l.b16 %v630
    %v2091 = vunpack.c.h.b16 %v630
    %v2092 = vunpack.c.l.b16 %v631
    %v2093 = vunpack.c.l.b16 %v632
    %v2094 = vunpack.c.h.b16 %v632
    %v2095 = vunpack.c.l.b16 %v633
    %v2096 = vunpack.c.l.b16 %v634
    %v2097 = vunpack.c.h.b16 %v634
    %v2098 = vunpack.c.l.b16 %v635
    %v2099 = vpack.c.b16 %v1286, %v1283
    %v2100 = vpack.c.b16 %v1287, %v1284
    %v2101 = vpack.c.b16 %v1288, %v1285
    %v2102 = vpack.c.b16 %v1292, %v1289
    %v2103 = vpack.c.b16 %v1293, %v1290
    %v2104 = vpack.c.b16 %v1294, %v1291
    %v2105 = vpack.c.b16 %v1298, %v1295
    %v2106 = vpack.c.b16 %v1299, %v1296
    %v2107 = vpack.c.b16 %v1300, %v1297
    %v2108 = vpack.c.b16 %v1304, %v1301
    %v2109 = vpack.c.b16 %v1305, %v1302
    %v2110 = vpack.c.b16 %v1306, %v1303
    %v2111 = vpack.c.b16 %v1310, %v1307
    %v2112 = vpack.c.b16 %v1311, %v1308
    %v2113 = vpack.c.b16 %v1312, %v1309
    %v2114 = vpack.c.b16 %v1316, %v1313
    %v2115 = vpack.c.b16 %v1317, %v1314
    %v2116 = vpack.c.b16 %v1318, %v1315
    %v2117 = vpack.c.b16 %v1322, %v1319
    %v2118 = vpack.c.b16 %v1323, %v1320
    %v2119 = vpack.c.b16 %v1324, %v1321
    %v2120 = vpack.c.b16 %v1328, %v1325
    %v2121 = vpack.c.b16 %v1329, %v1326
    %v2122 = vpack.c.b16 %v1330, %v1327
    %v2123 = vpack.c.b16 %v1334, %v1331
    %v2124 = vpack.c.b16 %v1335, %v1332
    %v2125 = vpack.c.b16 %v1336, %v1333
    %v2126 = vpack.c.b16 %v1340, %v1337
    %v2127 = vpack.c.b16 %v1341, %v1338
    %v2128 = vpack.c.b16 %v1342, %v1339
    %v2129 = vpack.c.b16 %v1346, %v1343
    %v2130 = vpack.c.b16 %v1347, %v1344
    %v2131 = vpack.c.b16 %v1348, %v1345
    %v2132 = vpack.c.b16 %v1352, %v1349
    %v2133 = vpack.c.b16 %v1353, %v1350
    %v2134 = vpack.c.b16 %v1354, %v1351
    %v2135 = vpack.c.b16 %v1358, %v1355
    %v2136 = vpack.c.b16 %v1359, %v1356
    %v2137 = vpack.c.b16 %v1360, %v1357
    %v2138 = vpack.c.b16 %v1364, %v1361
    %v2139 = vpack.c.b16 %v1365, %v1362
    %v2140 = vpack.c.b16 %v1366, %v1363
    %v2141 = vpack.c.b16 %v1370, %v1367
    %v2142 = vpack.c.b16 %v1371, %v1368
    %v2143 = vpack.c.b16 %v1372, %v1369
    %v2144 = vpack.c.b16 %v1376, %v1373
    %v2145 = vpack.c.b16 %v1377, %v1374
    %v2146 = vpack.c.b16 %v1378, %v1375
    %v2147 = vpack.c.b16 %v1382, %v1379
    %v2148 = vpack.c.b16 %v1383, %v1380
    %v2149 = vpack.c.b16 %v1384, %v1381
    %v2150 = vpack.c.b16 %v1388, %v1385
    %v2151 = vpack.c.b16 %v1389, %v1386
    %v2152 = vpack.c.b16 %v1390, %v1387
    %v2153 = vpack.c.b16 %v1394, %v1391
    %v2154 = vpack.c.b16 %v1395, %v1392
    %v2155 = vpack.c.b16 %v1396, %v1393
    %v2156 = vpack.c.b16 %v1400, %v1397
    %v2157 = vpack.c.b16 %v1401, %v1398
    %v2158 = vpack.c.b16 %v1402, %v1399
    %v2159 = vpack.c.b16 %v1406, %v1403
    %v2160 = vpack.c.b16 %v1407, %v1404
    %v2161 = vpack.c.b16 %v1408, %v1405
    %v2162 = vpack.c.b16 %v1412, %v1409
    %v2163 = vpack.c.b16 %v1413, %v1410
    %v2164 = vpack.c.b16 %v1414, %v1411
    %v2165 = vpack.c.b16 %v1418, %v1415
    %v2166 = vpack.c.b16 %v1419, %v1416
    %v2167 = vpack.c.b16 %v1420, %v1417
    %v2168 = vpack.c.b16 %v1424, %v1421
    %v2169 = vpack.c.b16 %v1425, %v1422
    %v2170 = vpack.c.b16 %v1426, %v1423
    %v2171 = vpack.c.b16 %v1430, %v1427
    %v2172 = vpack.c.b16 %v1431, %v1428
    %v2173 = vpack.c.b16 %v1432, %v1429
    %v2174 = vpack.c.b16 %v1436, %v1433
    %v2175 = vpack.c.b16 %v1437, %v1434
    %v2176 = vpack.c.b16 %v1438, %v1435
    %v2177 = vpack.c.b16 %v1442, %v1439
    %v2178 = vpack.c.b16 %v1443, %v1440
    %v2179 = vpack.c.b16 %v1444, %v1441
    %v2180 = vpack.c.b16 %v1448, %v1445
    %v2181 = vpack.c.b16 %v1449, %v1446
    %v2182 = vpack.c.b16 %v1450, %v1447
    %v2183 = vpack.c.b16 %v1454, %v1451
    %v2184 = vpack.c.b16 %v1455, %v1452
    %v2185 = vpack.c.b16 %v1456, %v1453
    %v2186 = vpack.c.b16 %v1460, %v1457
    %v2187 = vpack.c.b16 %v1461, %v1458
    %v2188 = vpack.c.b16 %v1462, %v1459
    %v2189 = vpack.c.b16 %v1466, %v1463
    %v2190 = vpack.c.b16 %v1467, %v1464
    %v2191 = vpack.c.b16 %v1468, %v1465
    %v2192 = vpack.c.b16 %v1472, %v1469
    %v2193 = vpack.c.b16 %v1473, %v1470
    %v2194 = vpack.c.b16 %v1474, %v1471
    %v2195 = vpack.c.b16 %v1478, %v1475
    %v2196 = vpack.c.b16 %v1479, %v1476
    %v2197 = vpack.c.b16 %v1480, %v1477
    %v2198 = vpack.c.b16 %v1484, %v1481
    %v2199 = vpack.c.b16 %v1485, %v1482
    %v2200 = vpack.c.b16 %v1486, %v1483
    %v2201 = vpack.c.b16 %v1490, %v1487
    %v2202 = vpack.c.b16 %v1491, %v1488
    %v2203 = vpack.c.b16 %v1492, %v1489
    %v2204 = vpack.c.b16 %v1496, %v1493
    %v2205 = vpack.c.b16 %v1497, %v1494
    %v2206 = vpack.c.b16 %v1498, %v1495
    %v2207 = vpack.c.b16 %v1502, %v1499
    %v2208 = vpack.c.b16 %v1503, %v1500
    %v2209 = vpack.c.b16 %v1504, %v1501
    %v2210 = vpack.c.b16 %v1508, %v1505
    %v2211 = vpack.c.b16 %v1509, %v1506
    %v2212 = vpack.c.b16 %v1510, %v1507
    %v2213 = vpack.c.b16 %v1514, %v1511
    %v2214 = vpack.c.b16 %v1515, %v1512
    %v2215 = vpack.c.b16 %v1516, %v1513
    %v2216 = vpack.c.b16 %v1520, %v1517
    %v2217 = vpack.c.b16 %v1521, %v1518
    %v2218 = vpack.c.b16 %v1522, %v1519
    %v2219 = vpack.c.b16 %v1526, %v1523
    %v2220 = vpack.c.b16 %v1527, %v1524
    %v2221 = vpack.c.b16 %v1528, %v1525
    %v2222 = vpack.c.b16 %v1532, %v1529
    %v2223 = vpack.c.b16 %v1533, %v1530
    %v2224 = vpack.c.b16 %v1534, %v1531
    %v2225 = vpack.c.b16 %v1538, %v1535
    %v2226 = vpack.c.b16 %v1539, %v1536
    %v2227 = vpack.c.b16 %v1540, %v1537
    %v2228 = vpack.c.b16 %v1544, %v1541
    %v2229 = vpack.c.b16 %v1545, %v1542
    %v2230 = vpack.c.b16 %v1546, %v1543
    %v2231 = vpack.c.b16 %v1550, %v1547
    %v2232 = vpack.c.b16 %v1551, %v1548
    %v2233 = vpack.c.b16 %v1552, %v1549
    %v2234 = vpack.c.b16 %v1556, %v1553
    %v2235 = vpack.c.b16 %v1557, %v1554
    %v2236 = vpack.c.b16 %v1558, %v1555
    %v2237 = vpack.c.b16 %v1562, %v1559
    %v2238 = vpack.c.b16 %v1563, %v1560
    %v2239 = vpack.c.b16 %v1564, %v1561
    %v2240 = vpack.c.b16 %v1568, %v1565
    %v2241 = vpack.c.b16 %v1569, %v1566
    %v2242 = vpack.c.b16 %v1570, %v1567
    %v2243 = vpack.c.b16 %v1574, %v1571
    %v2244 = vpack.c.b16 %v1575, %v1572
    %v2245 = vpack.c.b16 %v1576, %v1573
    %v2246 = vpack.c.b16 %v1580, %v1577
    %v2247 = vpack.c.b16 %v1581, %v1578
    %v2248 = vpack.c.b16 %v1582, %v1579
    %v2249 = vpack.c.b16 %v1586, %v1583
    %v2250 = vpack.c.b16 %v1587, %v1584
    %v2251 = vpack.c.b16 %v1588, %v1585
    %v2252 = vpack.c.b16 %v1592, %v1589
    %v2253 = vpack.c.b16 %v1593, %v1590
    %v2254 = vpack.c.b16 %v1594, %v1591
    %v2255 = vpack.c.b16 %v1598, %v1595
    %v2256 = vpack.c.b16 %v1599, %v1596
    %v2257 = vpack.c.b16 %v1600, %v1597
    %v2258 = vpack.c.b16 %v1604, %v1601
    %v2259 = vpack.c.b16 %v1605, %v1602
    %v2260 = vpack.c.b16 %v1606, %v1603
    %v2261 = vpack.c.b16 %v1610, %v1607
    %v2262 = vpack.c.b16 %v1611, %v1608
    %v2263 = vpack.c.b16 %v1612, %v1609
    %v2264 = vpack.c.b16 %v1616, %v1613
    %v2265 = vpack.c.b16 %v1617, %v1614
    %v2266 = vpack.c.b16 %v1618, %v1615
    %v2267 = vpack.c.b16 %v1622, %v1619
    %v2268 = vpack.c.b16 %v1623, %v1620
    %v2269 = vpack.c.b16 %v1624, %v1621
    %v2270 = vpack.c.b16 %v1628, %v1625
    %v2271 = vpack.c.b16 %v1629, %v1626
    %v2272 = vpack.c.b16 %v1630, %v1627
    %v2273 = vpack.c.b16 %v1634, %v1631
    %v2274 = vpack.c.b16 %v1635, %v1632
    %v2275 = vpack.c.b16 %v1636, %v1633
    %v2276 = vpack.c.b16 %v1640, %v1637
    %v2277 = vpack.c.b16 %v1641, %v1638
    %v2278 = vpack.c.b16 %v1642, %v1639
    %v2279 = vpack.c.b16 %v1646, %v1643
    %v2280 = vpack.c.b16 %v1647, %v1644
    %v2281 = vpack.c.b16 %v1648, %v1645
    %v2282 = vpack.c.b16 %v1652, %v1649
    %v2283 = vpack.c.b16 %v1653, %v1650
    %v2284 = vpack.c.b16 %v1654, %v1651
    %v2285 = vpack.c.b16 %v1658, %v1655
    %v2286 = vpack.c.b16 %v1659, %v1656
    %v2287 = vpack.c.b16 %v1660, %v1657
    %v2288 = vpack.c.b16 %v1664, %v1661
    %v2289 = vpack.c.b16 %v1665, %v1662
    %v2290 = vpack.c.b16 %v1666, %v1663
    %v2291 = vpack.c.b16 %v1670, %v1667
    %v2292 = vpack.c.b16 %v1671, %v1668
    %v2293 = vpack.c.b16 %v1672, %v1669
    %v2294 = vpack.c.b16 %v1676, %v1673
    %v2295 = vpack.c.b16 %v1677, %v1674
    %v2296 = vpack.c.b16 %v1678, %v1675
    %v2297 = vpack.c.b16 %v1682, %v1679
    %v2298 = vpack.c.b16 %v1683, %v1680
    %v2299 = vpack.c.b16 %v1684, %v1681
    %v2300 = vpack.c.b16 %v1688, %v1685
    %v2301 = vpack.c.b16 %v1689, %v1686
    %v2302 = vpack.c.b16 %v1690, %v1687
    %v2303 = vpack.c.b16 %v1694, %v1691
    %v2304 = vpack.c.b16 %v1695, %v1692
    %v2305 = vpack.c.b16 %v1696, %v1693
    %v2306 = vpack.c.b16 %v1700, %v1697
    %v2307 = vpack.c.b16 %v1701, %v1698
    %v2308 = vpack.c.b16 %v1702, %v1699
    %v2309 = vpack.c.b16 %v1706, %v1703
    %v2310 = vpack.c.b16 %v1707, %v1704
    %v2311 = vpack.c.b16 %v1708, %v1705
    %v2312 = vpack.c.b16 %v1712, %v1709
    %v2313 = vpack.c.b16 %v1713, %v1710
    %v2314 = vpack.c.b16 %v1714, %v1711
    %v2315 = vpack.c.b16 %v1718, %v1715
    %v2316 = vpack.c.b16 %v1719, %v1716
    %v2317 = vpack.c.b16 %v1720, %v1717
    %v2318 = vpack.c.b16 %v1724, %v1721
    %v2319 = vpack.c.b16 %v1725, %v1722
    %v2320 = vpack.c.b16 %v1726, %v1723
    %v2321 = vpack.c.b16 %v1730, %v1727
    %v2322 = vpack.c.b16 %v1731, %v1728
    %v2323 = vpack.c.b16 %v1732, %v1729
    %v2324 = vpack.c.b16 %v1736, %v1733
    %v2325 = vpack.c.b16 %v1737, %v1734
    %v2326 = vpack.c.b16 %v1738, %v1735
    %v2327 = vpack.c.b16 %v1742, %v1739
    %v2328 = vpack.c.b16 %v1743, %v1740
    %v2329 = vpack.c.b16 %v1744, %v1741
    %v2330 = vpack.c.b16 %v1748, %v1745
    %v2331 = vpack.c.b16 %v1749, %v1746
    %v2332 = vpack.c.b16 %v1750, %v1747
    %v2333 = vpack.c.b16 %v1754, %v1751
    %v2334 = vpack.c.b16 %v1755, %v1752
    %v2335 = vpack.c.b16 %v1756, %v1753
    %v2336 = vpack.c.b16 %v1760, %v1757
    %v2337 = vpack.c.b16 %v1761, %v1758
    %v2338 = vpack.c.b16 %v1762, %v1759
    %v2339 = vpack.c.b16 %v1766, %v1763
    %v2340 = vpack.c.b16 %v1767, %v1764
    %v2341 = vpack.c.b16 %v1768, %v1765
    %v2342 = vpack.c.b16 %v1772, %v1769
    %v2343 = vpack.c.b16 %v1773, %v1770
    %v2344 = vpack.c.b16 %v1774, %v1771
    %v2345 = vpack.c.b16 %v1778, %v1775
    %v2346 = vpack.c.b16 %v1779, %v1776
    %v2347 = vpack.c.b16 %v1780, %v1777
    %v2348 = vpack.c.b16 %v1784, %v1781
    %v2349 = vpack.c.b16 %v1785, %v1782
    %v2350 = vpack.c.b16 %v1786, %v1783
    %v2351 = vpack.c.b16 %v1790, %v1787
    %v2352 = vpack.c.b16 %v1791, %v1788
    %v2353 = vpack.c.b16 %v1792, %v1789
    %v2354 = vpack.c.b16 %v1796, %v1793
    %v2355 = vpack.c.b16 %v1797, %v1794
    %v2356 = vpack.c.b16 %v1798, %v1795
    %v2357 = vpack.c.b16 %v1802, %v1799
    %v2358 = vpack.c.b16 %v1803, %v1800
    %v2359 = vpack.c.b16 %v1804, %v1801
    %v2360 = vpack.c.b16 %v1808, %v1805
    %v2361 = vpack.c.b16 %v1809, %v1806
    %v2362 = vpack.c.b16 %v1810, %v1807
    %v2363 = vpack.c.b16 %v1814, %v1811
    %v2364 = vpack.c.b16 %v1815, %v1812
    %v2365 = vpack.c.b16 %v1816, %v1813
    %v2366 = vpack.c.b16 %v1820, %v1817
    %v2367 = vpack.c.b16 %v1821, %v1818
    %v2368 = vpack.c.b16 %v1822, %v1819
    %v2369 = vpack.c.b16 %v1826, %v1823
    %v2370 = vpack.c.b16 %v1827, %v1824
    %v2371 = vpack.c.b16 %v1828, %v1825
    %v2372 = vpack.c.b16 %v1832, %v1829
    %v2373 = vpack.c.b16 %v1833, %v1830
    %v2374 = vpack.c.b16 %v1834, %v1831
    %v2375 = vpack.c.b16 %v1838, %v1835
    %v2376 = vpack.c.b16 %v1839, %v1836
    %v2377 = vpack.c.b16 %v1840, %v1837
    %v2378 = vpack.c.b16 %v1844, %v1841
    %v2379 = vpack.c.b16 %v1845, %v1842
    %v2380 = vpack.c.b16 %v1846, %v1843
    %v2381 = vpack.c.b16 %v1850, %v1847
    %v2382 = vpack.c.b16 %v1851, %v1848
    %v2383 = vpack.c.b16 %v1852, %v1849
    %v2384 = vpack.c.b16 %v1856, %v1853
    %v2385 = vpack.c.b16 %v1857, %v1854
    %v2386 = vpack.c.b16 %v1858, %v1855
    %v2387 = vpack.c.b16 %v1862, %v1859
    %v2388 = vpack.c.b16 %v1863, %v1860
    %v2389 = vpack.c.b16 %v1864, %v1861
    %v2390 = vpack.c.b16 %v1868, %v1865
    %v2391 = vpack.c.b16 %v1869, %v1866
    %v2392 = vpack.c.b16 %v1870, %v1867
    %v2393 = vpack.c.b16 %v1874, %v1871
    %v2394 = vpack.c.b16 %v1875, %v1872
    %v2395 = vpack.c.b16 %v1876, %v1873
    %v2396 = vpack.c.b16 %v1880, %v1877
    %v2397 = vpack.c.b16 %v1881, %v1878
    %v2398 = vpack.c.b16 %v1882, %v1879
    %v2399 = vpack.c.b16 %v1886, %v1883
    %v2400 = vpack.c.b16 %v1887, %v1884
    %v2401 = vpack.c.b16 %v1888, %v1885
    %v2402 = vpack.c.b16 %v1892, %v1889
    %v2403 = vpack.c.b16 %v1893, %v1890
    %v2404 = vpack.c.b16 %v1894, %v1891
    %v2405 = vpack.c.b16 %v1898, %v1895
    %v2406 = vpack.c.b16 %v1899, %v1896
    %v2407 = vpack.c.b16 %v1900, %v1897
    %v2408 = vpack.c.b16 %v1904, %v1901
    %v2409 = vpack.c.b16 %v1905, %v1902
    %v2410 = vpack.c.b16 %v1906, %v1903
    %v2411 = vpack.c.b16 %v1910, %v1907
    %v2412 = vpack.c.b16 %v1911, %v1908
    %v2413 = vpack.c.b16 %v1912, %v1909
    %v2414 = vpack.c.b16 %v1916, %v1913
    %v2415 = vpack.c.b16 %v1917, %v1914
    %v2416 = vpack.c.b16 %v1918, %v1915
    %v2417 = vpack.c.b16 %v1922, %v1919
    %v2418 = vpack.c.b16 %v1923, %v1920
    %v2419 = vpack.c.b16 %v1924, %v1921
    %v2420 = vpack.c.b16 %v1928, %v1925
    %v2421 = vpack.c.b16 %v1929, %v1926
    %v2422 = vpack.c.b16 %v1930, %v1927
    %v2423 = vpack.c.b16 %v1934, %v1931
    %v2424 = vpack.c.b16 %v1935, %v1932
    %v2425 = vpack.c.b16 %v1936, %v1933
    %v2426 = vpack.c.b16 %v1940, %v1937
    %v2427 = vpack.c.b16 %v1941, %v1938
    %v2428 = vpack.c.b16 %v1942, %v1939
    %v2429 = vpack.c.b16 %v1946, %v1943
    %v2430 = vpack.c.b16 %v1947, %v1944
    %v2431 = vpack.c.b16 %v1948, %v1945
    %v2432 = vpack.c.b16 %v1952, %v1949
    %v2433 = vpack.c.b16 %v1953, %v1950
    %v2434 = vpack.c.b16 %v1954, %v1951
    %v2435 = vpack.c.b16 %v1958, %v1955
    %v2436 = vpack.c.b16 %v1959, %v1956
    %v2437 = vpack.c.b16 %v1960, %v1957
    %v2438 = vpack.c.b16 %v1964, %v1961
    %v2439 = vpack.c.b16 %v1965, %v1962
    %v2440 = vpack.c.b16 %v1966, %v1963
    %v2441 = vpack.c.b16 %v1970, %v1967
    %v2442 = vpack.c.b16 %v1971, %v1968
    %v2443 = vpack.c.b16 %v1972, %v1969
    %v2444 = vpack.c.b16 %v1976, %v1973
    %v2445 = vpack.c.b16 %v1977, %v1974
    %v2446 = vpack.c.b16 %v1978, %v1975
    %v2447 = vpack.c.b16 %v1982, %v1979
    %v2448 = vpack.c.b16 %v1983, %v1980
    %v2449 = vpack.c.b16 %v1984, %v1981
    %v2450 = vpack.c.b16 %v1988, %v1985
    %v2451 = vpack.c.b16 %v1989, %v1986
    %v2452 = vpack.c.b16 %v1990, %v1987
    %v2453 = vpack.c.b16 %v1994, %v1991
    %v2454 = vpack.c.b16 %v1995, %v1992
    %v2455 = vpack.c.b16 %v1996, %v1993
    %v2456 = vpack.c.b16 %v2000, %v1997
    %v2457 = vpack.c.b16 %v2001, %v1998
    %v2458 = vpack.c.b16 %v2002, %v1999
    %v2459 = vpack.c.b16 %v2006, %v2003
    %v2460 = vpack.c.b16 %v2007, %v2004
    %v2461 = vpack.c.b16 %v2008, %v2005
    %v2462 = vpack.c.b16 %v2012, %v2009
    %v2463 = vpack.c.b16 %v2013, %v2010
    %v2464 = vpack.c.b16 %v2014, %v2011
    %v2465 = vpack.c.b16 %v2018, %v2015
    %v2466 = vpack.c.b16 %v2019, %v2016
    %v2467 = vpack.c.b16 %v2020, %v2017
    %v2468 = vpack.c.b16 %v2024, %v2021
    %v2469 = vpack.c.b16 %v2025, %v2022
    %v2470 = vpack.c.b16 %v2026, %v2023
    %v2471 = vpack.c.b16 %v2030, %v2027
    %v2472 = vpack.c.b16 %v2031, %v2028
    %v2473 = vpack.c.b16 %v2032, %v2029
    %v2474 = vpack.c.b16 %v2036, %v2033
    %v2475 = vpack.c.b16 %v2037, %v2034
    %v2476 = vpack.c.b16 %v2038, %v2035
    %v2477 = vpack.c.b16 %v2042, %v2039
    %v2478 = vpack.c.b16 %v2043, %v2040
    %v2479 = vpack.c.b16 %v2044, %v2041
    %v2480 = vpack.c.b16 %v2048, %v2045
    %v2481 = vpack.c.b16 %v2049, %v2046
    %v2482 = vpack.c.b16 %v2050, %v2047
    %v2483 = vpack.c.b16 %v2054, %v2051
    %v2484 = vpack.c.b16 %v2055, %v2052
    %v2485 = vpack.c.b16 %v2056, %v2053
    %v2486 = vpack.c.b16 %v2060, %v2057
    %v2487 = vpack.c.b16 %v2061, %v2058
    %v2488 = vpack.c.b16 %v2062, %v2059
    %v2489 = vpack.c.b16 %v2066, %v2063
    %v2490 = vpack.c.b16 %v2067, %v2064
    %v2491 = vpack.c.b16 %v2068, %v2065
    %v2492 = vpack.c.b16 %v2072, %v2069
    %v2493 = vpack.c.b16 %v2073, %v2070
    %v2494 = vpack.c.b16 %v2074, %v2071
    %v2495 = vpack.c.b16 %v2078, %v2075
    %v2496 = vpack.c.b16 %v2079, %v2076
    %v2497 = vpack.c.b16 %v2080, %v2077
    %v2498 = vpack.c.b16 %v2084, %v2081
    %v2499 = vpack.c.b16 %v2085, %v2082
    %v2500 = vpack.c.b16 %v2086, %v2083
    %v2501 = vpack.c.b16 %v2090, %v2087
    %v2502 = vpack.c.b16 %v2091, %v2088
    %v2503 = vpack.c.b16 %v2092, %v2089
    %v2504 = vpack.c.b16 %v2096, %v2093
    %v2505 = vpack.c.b16 %v2097, %v2094
    %v2506 = vpack.c.b16 %v2098, %v2095
    %2915 = vmatprep.subr.bf16.mxu0 %v2121
    %2916 = vmatpush1.bf16.msra.mxu0 %v2120
    %2917 = vmatprep.subr.bf16.mxu0 %v2118
    %2918 = vmatpush1.bf16.msra.mxu0 %v2117
    %2919 = vmatprep.subr.bf16.mxu0 %v2115
    %2920 = vmatpush1.bf16.msra.mxu0 %v2114
    %2921 = vmatprep.subr.bf16.mxu0 %v2112
    %2922 = vmatpush1.bf16.msra.mxu0 %v2111
    %2923 = vmatprep.subr.bf16.mxu0 %v2109
    %2924 = vmatpush1.bf16.msra.mxu0 %v2108
    %2925 = vmatprep.subr.bf16.mxu0 %v2106
    %2926 = vmatpush1.bf16.msra.mxu0 %v2105
    %2927 = vmatprep.subr.bf16.mxu0 %v2103
    %2928 = vmatpush1.bf16.msra.mxu0 %v2102
    %2929 = vmatprep.subr.bf16.mxu0 %v2100
    %2930 = vmatpush1.bf16.msra.mxu0 %v2099
    %2931 = vmatprep.subr.bf16.mxu0 %v2145
    %2932 = vmatpush2.bf16.msra.mxu0 %v2144
    %2933 = vmatprep.subr.bf16.mxu0 %v2142
    %2934 = vmatpush2.bf16.msra.mxu0 %v2141
    %2935 = vmatprep.subr.bf16.mxu0 %v2139
    %2936 = vmatpush2.bf16.msra.mxu0 %v2138
    %2937 = vmatprep.subr.bf16.mxu0 %v2136
    %2938 = vmatpush2.bf16.msra.mxu0 %v2135
    %2939 = vmatprep.subr.bf16.mxu0 %v2133
    %2940 = vmatpush2.bf16.msra.mxu0 %v2132
    %2941 = vmatprep.subr.bf16.mxu0 %v2130
    %2942 = vmatpush2.bf16.msra.mxu0 %v2129
    %2943 = vmatprep.subr.bf16.mxu0 %v2127
    %2944 = vmatpush2.bf16.msra.mxu0 %v2126
    %2945 = vmatprep.subr.bf16.mxu0 %v2124
    %2946 = vmatpush2.bf16.msra.mxu0 %v2123
    %2947 = vmatprep.mubr.bf16.mxu0 %v706
    %2948 = vmatmul.mubr.bf16.gmra.mxu0 %v705
    %v2949 = vpop.f32.mrf.mxu0
    %v2950 = vadd.f32 %v641, %v2949
    %v2951 = vpop.f32.mrf.mxu0
    %v2952 = vadd.f32 %v645, %v2951
    %v2953 = vpop.f32.mrf.mxu0
    %v2954 = vadd.f32 %v641, %v2953
    %v2955 = vpop.f32.mrf.mxu0
    %v2956 = vadd.f32 %v645, %v2955
    %2957 = vdwg.mxu0
    %2958 = vmatprep.subr.bf16.mxu0 %v2169
    %2959 = vmatpush1.bf16.msra.mxu0 %v2168
    %2960 = vmatprep.subr.bf16.mxu0 %v2166
    %2961 = vmatpush1.bf16.msra.mxu0 %v2165
    %2962 = vmatprep.subr.bf16.mxu0 %v2163
    %2963 = vmatpush1.bf16.msra.mxu0 %v2162
    %2964 = vmatprep.subr.bf16.mxu0 %v2160
    %2965 = vmatpush1.bf16.msra.mxu0 %v2159
    %2966 = vmatprep.subr.bf16.mxu0 %v2157
    %2967 = vmatpush1.bf16.msra.mxu0 %v2156
    %2968 = vmatprep.subr.bf16.mxu0 %v2154
    %2969 = vmatpush1.bf16.msra.mxu0 %v2153
    %2970 = vmatprep.subr.bf16.mxu0 %v2151
    %2971 = vmatpush1.bf16.msra.mxu0 %v2150
    %2972 = vmatprep.subr.bf16.mxu0 %v2148
    %2973 = vmatpush1.bf16.msra.mxu0 %v2147
    %2974 = vmatprep.subr.bf16.mxu0 %v2193
    %2975 = vmatpush2.bf16.msra.mxu0 %v2192
    %2976 = vmatprep.subr.bf16.mxu0 %v2190
    %2977 = vmatpush2.bf16.msra.mxu0 %v2189
    %2978 = vmatprep.subr.bf16.mxu0 %v2187
    %2979 = vmatpush2.bf16.msra.mxu0 %v2186
    %2980 = vmatprep.subr.bf16.mxu0 %v2184
    %2981 = vmatpush2.bf16.msra.mxu0 %v2183
    %2982 = vmatprep.subr.bf16.mxu0 %v2181
    %2983 = vmatpush2.bf16.msra.mxu0 %v2180
    %2984 = vmatprep.subr.bf16.mxu0 %v2178
    %2985 = vmatpush2.bf16.msra.mxu0 %v2177
    %2986 = vmatprep.subr.bf16.mxu0 %v2175
    %2987 = vmatpush2.bf16.msra.mxu0 %v2174
    %2988 = vmatprep.subr.bf16.mxu0 %v2172
    %2989 = vmatpush2.bf16.msra.mxu0 %v2171
    %2990 = vmatprep.mubr.bf16.mxu0 %v708
    %2991 = vmatmul.mubr.bf16.gmra.mxu0 %v707
    %v2992 = vpop.f32.mrf.mxu0
    %v2993 = vadd.f32 %v2950, %v2992
    %v2994 = vpop.f32.mrf.mxu0
    %v2995 = vadd.f32 %v2952, %v2994
    %v2996 = vpop.f32.mrf.mxu0
    %v2997 = vadd.f32 %v2954, %v2996
    %v2998 = vpop.f32.mrf.mxu0
    %v2999 = vadd.f32 %v2956, %v2998
    %3000 = vdwg.mxu0
    %3001 = vmatprep.subr.bf16.mxu0 %v2217
    %3002 = vmatpush1.bf16.msra.mxu0 %v2216
    %3003 = vmatprep.subr.bf16.mxu0 %v2214
    %3004 = vmatpush1.bf16.msra.mxu0 %v2213
    %3005 = vmatprep.subr.bf16.mxu0 %v2211
    %3006 = vmatpush1.bf16.msra.mxu0 %v2210
    %3007 = vmatprep.subr.bf16.mxu0 %v2208
    %3008 = vmatpush1.bf16.msra.mxu0 %v2207
    %3009 = vmatprep.subr.bf16.mxu0 %v2205
    %3010 = vmatpush1.bf16.msra.mxu0 %v2204
    %3011 = vmatprep.subr.bf16.mxu0 %v2202
    %3012 = vmatpush1.bf16.msra.mxu0 %v2201
    %3013 = vmatprep.subr.bf16.mxu0 %v2199
    %3014 = vmatpush1.bf16.msra.mxu0 %v2198
    %3015 = vmatprep.subr.bf16.mxu0 %v2196
    %3016 = vmatpush1.bf16.msra.mxu0 %v2195
    %3017 = vmatprep.subr.bf16.mxu0 %v2241
    %3018 = vmatpush2.bf16.msra.mxu0 %v2240
    %3019 = vmatprep.subr.bf16.mxu0 %v2238
    %3020 = vmatpush2.bf16.msra.mxu0 %v2237
    %3021 = vmatprep.subr.bf16.mxu0 %v2235
    %3022 = vmatpush2.bf16.msra.mxu0 %v2234
    %3023 = vmatprep.subr.bf16.mxu0 %v2232
    %3024 = vmatpush2.bf16.msra.mxu0 %v2231
    %3025 = vmatprep.subr.bf16.mxu0 %v2229
    %3026 = vmatpush2.bf16.msra.mxu0 %v2228
    %3027 = vmatprep.subr.bf16.mxu0 %v2226
    %3028 = vmatpush2.bf16.msra.mxu0 %v2225
    %3029 = vmatprep.subr.bf16.mxu0 %v2223
    %3030 = vmatpush2.bf16.msra.mxu0 %v2222
    %3031 = vmatprep.subr.bf16.mxu0 %v2220
    %3032 = vmatpush2.bf16.msra.mxu0 %v2219
    %3033 = vmatprep.mubr.bf16.mxu0 %v710
    %3034 = vmatmul.mubr.bf16.gmra.mxu0 %v709
    %v3035 = vpop.f32.mrf.mxu0
    %v3036 = vadd.f32 %v2993, %v3035
    %v3037 = vpop.f32.mrf.mxu0
    %v3038 = vadd.f32 %v2995, %v3037
    %v3039 = vpop.f32.mrf.mxu0
    %v3040 = vadd.f32 %v2997, %v3039
    %v3041 = vpop.f32.mrf.mxu0
    %v3042 = vadd.f32 %v2999, %v3041
    %3043 = vdwg.mxu0
    %3044 = vmatprep.subr.bf16.mxu0 %v2265
    %3045 = vmatpush1.bf16.msra.mxu0 %v2264
    %3046 = vmatprep.subr.bf16.mxu0 %v2262
    %3047 = vmatpush1.bf16.msra.mxu0 %v2261
    %3048 = vmatprep.subr.bf16.mxu0 %v2259
    %3049 = vmatpush1.bf16.msra.mxu0 %v2258
    %3050 = vmatprep.subr.bf16.mxu0 %v2256
    %3051 = vmatpush1.bf16.msra.mxu0 %v2255
    %3052 = vmatprep.subr.bf16.mxu0 %v2253
    %3053 = vmatpush1.bf16.msra.mxu0 %v2252
    %3054 = vmatprep.subr.bf16.mxu0 %v2250
    %3055 = vmatpush1.bf16.msra.mxu0 %v2249
    %3056 = vmatprep.subr.bf16.mxu0 %v2247
    %3057 = vmatpush1.bf16.msra.mxu0 %v2246
    %3058 = vmatprep.subr.bf16.mxu0 %v2244
    %3059 = vmatpush1.bf16.msra.mxu0 %v2243
    %3060 = vmatprep.subr.bf16.mxu0 %v2289
    %3061 = vmatpush2.bf16.msra.mxu0 %v2288
    %3062 = vmatprep.subr.bf16.mxu0 %v2286
    %3063 = vmatpush2.bf16.msra.mxu0 %v2285
    %3064 = vmatprep.subr.bf16.mxu0 %v2283
    %3065 = vmatpush2.bf16.msra.mxu0 %v2282
    %3066 = vmatprep.subr.bf16.mxu0 %v2280
    %3067 = vmatpush2.bf16.msra.mxu0 %v2279
    %3068 = vmatprep.subr.bf16.mxu0 %v2277
    %3069 = vmatpush2.bf16.msra.mxu0 %v2276
    %3070 = vmatprep.subr.bf16.mxu0 %v2274
    %3071 = vmatpush2.bf16.msra.mxu0 %v2273
    %3072 = vmatprep.subr.bf16.mxu0 %v2271
    %3073 = vmatpush2.bf16.msra.mxu0 %v2270
    %3074 = vmatprep.subr.bf16.mxu0 %v2268
    %3075 = vmatpush2.bf16.msra.mxu0 %v2267
    %3076 = vmatprep.mubr.bf16.mxu0 %v712
    %3077 = vmatmul.mubr.bf16.gmra.mxu0 %v711
    %v3078 = vpop.f32.mrf.mxu0
    %v3079 = vadd.f32 %v3036, %v3078
    %v3080 = vpop.f32.mrf.mxu0
    %v3081 = vadd.f32 %v3038, %v3080
    %v3082 = vpop.f32.mrf.mxu0
    %v3083 = vadd.f32 %v3040, %v3082
    %v3084 = vpop.f32.mrf.mxu0
    %v3085 = vadd.f32 %v3042, %v3084
    %3086 = vdwg.mxu0
    %3087 = vmatprep.subr.bf16.mxu0 %v2313
    %3088 = vmatpush1.bf16.msra.mxu0 %v2312
    %3089 = vmatprep.subr.bf16.mxu0 %v2310
    %3090 = vmatpush1.bf16.msra.mxu0 %v2309
    %3091 = vmatprep.subr.bf16.mxu0 %v2307
    %3092 = vmatpush1.bf16.msra.mxu0 %v2306
    %3093 = vmatprep.subr.bf16.mxu0 %v2304
    %3094 = vmatpush1.bf16.msra.mxu0 %v2303
    %3095 = vmatprep.subr.bf16.mxu0 %v2301
    %3096 = vmatpush1.bf16.msra.mxu0 %v2300
    %3097 = vmatprep.subr.bf16.mxu0 %v2298
    %3098 = vmatpush1.bf16.msra.mxu0 %v2297
    %3099 = vmatprep.subr.bf16.mxu0 %v2295
    %3100 = vmatpush1.bf16.msra.mxu0 %v2294
    %3101 = vmatprep.subr.bf16.mxu0 %v2292
    %3102 = vmatpush1.bf16.msra.mxu0 %v2291
    %3103 = vmatprep.subr.bf16.mxu0 %v2337
    %3104 = vmatpush2.bf16.msra.mxu0 %v2336
    %3105 = vmatprep.subr.bf16.mxu0 %v2334
    %3106 = vmatpush2.bf16.msra.mxu0 %v2333
    %3107 = vmatprep.subr.bf16.mxu0 %v2331
    %3108 = vmatpush2.bf16.msra.mxu0 %v2330
    %3109 = vmatprep.subr.bf16.mxu0 %v2328
    %3110 = vmatpush2.bf16.msra.mxu0 %v2327
    %3111 = vmatprep.subr.bf16.mxu0 %v2325
    %3112 = vmatpush2.bf16.msra.mxu0 %v2324
    %3113 = vmatprep.subr.bf16.mxu0 %v2322
    %3114 = vmatpush2.bf16.msra.mxu0 %v2321
    %3115 = vmatprep.subr.bf16.mxu0 %v2319
    %3116 = vmatpush2.bf16.msra.mxu0 %v2318
    %3117 = vmatprep.subr.bf16.mxu0 %v2316
    %3118 = vmatpush2.bf16.msra.mxu0 %v2315
    %3119 = vmatprep.mubr.bf16.mxu0 %v714
    %3120 = vmatmul.mubr.bf16.gmra.mxu0 %v713
    %v3121 = vpop.f32.mrf.mxu0
    %v3122 = vadd.f32 %v3079, %v3121
    %v3123 = vpop.f32.mrf.mxu0
    %v3124 = vadd.f32 %v3081, %v3123
    %v3125 = vpop.f32.mrf.mxu0
    %v3126 = vadd.f32 %v3083, %v3125
    %v3127 = vpop.f32.mrf.mxu0
    %v3128 = vadd.f32 %v3085, %v3127
    %3129 = vdwg.mxu0
    %3130 = vmatprep.subr.bf16.mxu0 %v2361
    %3131 = vmatpush1.bf16.msra.mxu0 %v2360
    %3132 = vmatprep.subr.bf16.mxu0 %v2358
    %3133 = vmatpush1.bf16.msra.mxu0 %v2357
    %3134 = vmatprep.subr.bf16.mxu0 %v2355
    %3135 = vmatpush1.bf16.msra.mxu0 %v2354
    %3136 = vmatprep.subr.bf16.mxu0 %v2352
    %3137 = vmatpush1.bf16.msra.mxu0 %v2351
    %3138 = vmatprep.subr.bf16.mxu0 %v2349
    %3139 = vmatpush1.bf16.msra.mxu0 %v2348
    %3140 = vmatprep.subr.bf16.mxu0 %v2346
    %3141 = vmatpush1.bf16.msra.mxu0 %v2345
    %3142 = vmatprep.subr.bf16.mxu0 %v2343
    %3143 = vmatpush1.bf16.msra.mxu0 %v2342
    %3144 = vmatprep.subr.bf16.mxu0 %v2340
    %3145 = vmatpush1.bf16.msra.mxu0 %v2339
    %3146 = vmatprep.subr.bf16.mxu0 %v2385
    %3147 = vmatpush2.bf16.msra.mxu0 %v2384
    %3148 = vmatprep.subr.bf16.mxu0 %v2382
    %3149 = vmatpush2.bf16.msra.mxu0 %v2381
    %3150 = vmatprep.subr.bf16.mxu0 %v2379
    %3151 = vmatpush2.bf16.msra.mxu0 %v2378
    %3152 = vmatprep.subr.bf16.mxu0 %v2376
    %3153 = vmatpush2.bf16.msra.mxu0 %v2375
    %3154 = vmatprep.subr.bf16.mxu0 %v2373
    %3155 = vmatpush2.bf16.msra.mxu0 %v2372
    %3156 = vmatprep.subr.bf16.mxu0 %v2370
    %3157 = vmatpush2.bf16.msra.mxu0 %v2369
    %3158 = vmatprep.subr.bf16.mxu0 %v2367
    %3159 = vmatpush2.bf16.msra.mxu0 %v2366
    %3160 = vmatprep.subr.bf16.mxu0 %v2364
    %3161 = vmatpush2.bf16.msra.mxu0 %v2363
    %3162 = vmatprep.mubr.bf16.mxu0 %v716
    %3163 = vmatmul.mubr.bf16.gmra.mxu0 %v715
    %v3164 = vpop.f32.mrf.mxu0
    %v3165 = vadd.f32 %v3122, %v3164
    %v3166 = vpop.f32.mrf.mxu0
    %v3167 = vadd.f32 %v3124, %v3166
    %v3168 = vpop.f32.mrf.mxu0
    %v3169 = vadd.f32 %v3126, %v3168
    %v3170 = vpop.f32.mrf.mxu0
    %v3171 = vadd.f32 %v3128, %v3170
    %3172 = vdwg.mxu0
    %3173 = vmatprep.subr.bf16.mxu0 %v2409
    %3174 = vmatpush1.bf16.msra.mxu0 %v2408
    %3175 = vmatprep.subr.bf16.mxu0 %v2406
    %3176 = vmatpush1.bf16.msra.mxu0 %v2405
    %3177 = vmatprep.subr.bf16.mxu0 %v2403
    %3178 = vmatpush1.bf16.msra.mxu0 %v2402
    %3179 = vmatprep.subr.bf16.mxu0 %v2400
    %3180 = vmatpush1.bf16.msra.mxu0 %v2399
    %3181 = vmatprep.subr.bf16.mxu0 %v2397
    %3182 = vmatpush1.bf16.msra.mxu0 %v2396
    %3183 = vmatprep.subr.bf16.mxu0 %v2394
    %3184 = vmatpush1.bf16.msra.mxu0 %v2393
    %3185 = vmatprep.subr.bf16.mxu0 %v2391
    %3186 = vmatpush1.bf16.msra.mxu0 %v2390
    %3187 = vmatprep.subr.bf16.mxu0 %v2388
    %3188 = vmatpush1.bf16.msra.mxu0 %v2387
    %3189 = vmatprep.subr.bf16.mxu0 %v2433
    %3190 = vmatpush2.bf16.msra.mxu0 %v2432
    %3191 = vmatprep.subr.bf16.mxu0 %v2430
    %3192 = vmatpush2.bf16.msra.mxu0 %v2429
    %3193 = vmatprep.subr.bf16.mxu0 %v2427
    %3194 = vmatpush2.bf16.msra.mxu0 %v2426
    %3195 = vmatprep.subr.bf16.mxu0 %v2424
    %3196 = vmatpush2.bf16.msra.mxu0 %v2423
    %3197 = vmatprep.subr.bf16.mxu0 %v2421
    %3198 = vmatpush2.bf16.msra.mxu0 %v2420
    %3199 = vmatprep.subr.bf16.mxu0 %v2418
    %3200 = vmatpush2.bf16.msra.mxu0 %v2417
    %3201 = vmatprep.subr.bf16.mxu0 %v2415
    %3202 = vmatpush2.bf16.msra.mxu0 %v2414
    %3203 = vmatprep.subr.bf16.mxu0 %v2412
    %3204 = vmatpush2.bf16.msra.mxu0 %v2411
    %3205 = vmatprep.mubr.bf16.mxu0 %v718
    %3206 = vmatmul.mubr.bf16.gmra.mxu0 %v717
    %v3207 = vpop.f32.mrf.mxu0
    %v3208 = vadd.f32 %v3165, %v3207
    %v3209 = vpop.f32.mrf.mxu0
    %v3210 = vadd.f32 %v3167, %v3209
    %v3211 = vpop.f32.mrf.mxu0
    %v3212 = vadd.f32 %v3169, %v3211
    %v3213 = vpop.f32.mrf.mxu0
    %v3214 = vadd.f32 %v3171, %v3213
    %3215 = vdwg.mxu0
    %3216 = vmatprep.subr.bf16.mxu0 %v2457
    %3217 = vmatpush1.bf16.msra.mxu0 %v2456
    %3218 = vmatprep.subr.bf16.mxu0 %v2454
    %3219 = vmatpush1.bf16.msra.mxu0 %v2453
    %3220 = vmatprep.subr.bf16.mxu0 %v2451
    %3221 = vmatpush1.bf16.msra.mxu0 %v2450
    %3222 = vmatprep.subr.bf16.mxu0 %v2448
    %3223 = vmatpush1.bf16.msra.mxu0 %v2447
    %3224 = vmatprep.subr.bf16.mxu0 %v2445
    %3225 = vmatpush1.bf16.msra.mxu0 %v2444
    %3226 = vmatprep.subr.bf16.mxu0 %v2442
    %3227 = vmatpush1.bf16.msra.mxu0 %v2441
    %3228 = vmatprep.subr.bf16.mxu0 %v2439
    %3229 = vmatpush1.bf16.msra.mxu0 %v2438
    %3230 = vmatprep.subr.bf16.mxu0 %v2436
    %3231 = vmatpush1.bf16.msra.mxu0 %v2435
    %3232 = vmatprep.subr.bf16.mxu0 %v2481
    %3233 = vmatpush2.bf16.msra.mxu0 %v2480
    %3234 = vmatprep.subr.bf16.mxu0 %v2478
    %3235 = vmatpush2.bf16.msra.mxu0 %v2477
    %3236 = vmatprep.subr.bf16.mxu0 %v2475
    %3237 = vmatpush2.bf16.msra.mxu0 %v2474
    %3238 = vmatprep.subr.bf16.mxu0 %v2472
    %3239 = vmatpush2.bf16.msra.mxu0 %v2471
    %3240 = vmatprep.subr.bf16.mxu0 %v2469
    %3241 = vmatpush2.bf16.msra.mxu0 %v2468
    %3242 = vmatprep.subr.bf16.mxu0 %v2466
    %3243 = vmatpush2.bf16.msra.mxu0 %v2465
    %3244 = vmatprep.subr.bf16.mxu0 %v2463
    %3245 = vmatpush2.bf16.msra.mxu0 %v2462
    %3246 = vmatprep.subr.bf16.mxu0 %v2460
    %3247 = vmatpush2.bf16.msra.mxu0 %v2459
    %3248 = vmatprep.mubr.bf16.mxu0 %v720
    %3249 = vmatmul.mubr.bf16.gmra.mxu0 %v719
    %v3250 = vpop.f32.mrf.mxu0
    %v3251 = vadd.f32 %v3208, %v3250
    %v3252 = vpop.f32.mrf.mxu0
    %v3253 = vadd.f32 %v3210, %v3252
    %v3254 = vpop.f32.mrf.mxu0
    %v3255 = vadd.f32 %v3212, %v3254
    %v3256 = vpop.f32.mrf.mxu0
    %v3257 = vadd.f32 %v3214, %v3256
    %3258 = vdwg.mxu0
    %3259 = vmatprep.subr.bf16.mxu0 %v2505
    %3260 = vmatpush1.bf16.msra.mxu0 %v2504
    %3261 = vmatprep.subr.bf16.mxu0 %v2502
    %3262 = vmatpush1.bf16.msra.mxu0 %v2501
    %3263 = vmatprep.subr.bf16.mxu0 %v2499
    %3264 = vmatpush1.bf16.msra.mxu0 %v2498
    %3265 = vmatprep.subr.bf16.mxu0 %v2496
    %3266 = vmatpush1.bf16.msra.mxu0 %v2495
    %3267 = vmatprep.subr.bf16.mxu0 %v2493
    %3268 = vmatpush1.bf16.msra.mxu0 %v2492
    %3269 = vmatprep.subr.bf16.mxu0 %v2490
    %3270 = vmatpush1.bf16.msra.mxu0 %v2489
    %3271 = vmatprep.subr.bf16.mxu0 %v2487
    %3272 = vmatpush1.bf16.msra.mxu0 %v2486
    %3273 = vmatprep.subr.bf16.mxu0 %v2484
    %3274 = vmatpush1.bf16.msra.mxu0 %v2483
    %3275 = vmatprep.subr.bf16.mxu0 0
    %3276 = vmatpush2.bf16.msra.mxu0 0
    %3277 = vmatprep.subr.bf16.mxu0 0
    %3278 = vmatpush2.bf16.msra.mxu0 0
    %3279 = vmatprep.subr.bf16.mxu0 0
    %3280 = vmatpush2.bf16.msra.mxu0 0
    %3281 = vmatprep.subr.bf16.mxu0 0
    %3282 = vmatpush2.bf16.msra.mxu0 0
    %3283 = vmatprep.subr.bf16.mxu0 0
    %3284 = vmatpush2.bf16.msra.mxu0 0
    %3285 = vmatprep.subr.bf16.mxu0 0
    %3286 = vmatpush2.bf16.msra.mxu0 0
    %3287 = vmatprep.subr.bf16.mxu0 0
    %3288 = vmatpush2.bf16.msra.mxu0 0
    %3289 = vmatprep.subr.bf16.mxu0 0
    %3290 = vmatpush2.bf16.msra.mxu0 0
    %3291 = vmatprep.mubr.bf16.mxu0 0
    %3292 = vmatmul.mubr.bf16.gmra.mxu0 %v721
    %v3293 = vpop.f32.mrf.mxu0
    %v3294 = vadd.f32 %v3251, %v3293
    %v3295 = vpop.f32.mrf.mxu0
    %v3296 = vadd.f32 %v3253, %v3295
    %v3297 = vpop.f32.mrf.mxu0
    %v3298 = vadd.f32 %v3255, %v3297
    %v3299 = vpop.f32.mrf.mxu0
    %v3300 = vadd.f32 %v3257, %v3299
    %3301 = vdwg.mxu0
    %3302 = vmatprep.subr.bf16.mxu0 0
    %3303 = vmatpush1.bf16.msra.mxu0 %v2122
    %3304 = vmatprep.subr.bf16.mxu0 0
    %3305 = vmatpush1.bf16.msra.mxu0 %v2119
    %3306 = vmatprep.subr.bf16.mxu0 0
    %3307 = vmatpush1.bf16.msra.mxu0 %v2116
    %3308 = vmatprep.subr.bf16.mxu0 0
    %3309 = vmatpush1.bf16.msra.mxu0 %v2113
    %3310 = vmatprep.subr.bf16.mxu0 0
    %3311 = vmatpush1.bf16.msra.mxu0 %v2110
    %3312 = vmatprep.subr.bf16.mxu0 0
    %3313 = vmatpush1.bf16.msra.mxu0 %v2107
    %3314 = vmatprep.subr.bf16.mxu0 0
    %3315 = vmatpush1.bf16.msra.mxu0 %v2104
    %3316 = vmatprep.subr.bf16.mxu0 0
    %3317 = vmatpush1.bf16.msra.mxu0 %v2101
    %3318 = vmatprep.subr.bf16.mxu0 0
    %3319 = vmatpush2.bf16.msra.mxu0 %v2146
    %3320 = vmatprep.subr.bf16.mxu0 0
    %3321 = vmatpush2.bf16.msra.mxu0 %v2143
    %3322 = vmatprep.subr.bf16.mxu0 0
    %3323 = vmatpush2.bf16.msra.mxu0 %v2140
    %3324 = vmatprep.subr.bf16.mxu0 0
    %3325 = vmatpush2.bf16.msra.mxu0 %v2137
    %3326 = vmatprep.subr.bf16.mxu0 0
    %3327 = vmatpush2.bf16.msra.mxu0 %v2134
    %3328 = vmatprep.subr.bf16.mxu0 0
    %3329 = vmatpush2.bf16.msra.mxu0 %v2131
    %3330 = vmatprep.subr.bf16.mxu0 0
    %3331 = vmatpush2.bf16.msra.mxu0 %v2128
    %3332 = vmatprep.subr.bf16.mxu0 0
    %3333 = vmatpush2.bf16.msra.mxu0 %v2125
    %3334 = vmatprep.mubr.bf16.mxu0 %v706
    %3335 = vmatmul.mubr.bf16.gmra.mxu0 %v705
    %v3336 = vpop.f32.mrf.mxu0
    %v3337 = vadd.f32 %v649, %v3336
    %v3338 = vpop.f32.mrf.mxu0
    %v3339 = vpop.f32.mrf.mxu0
    %v3340 = vadd.f32 %v649, %v3339
    %v3341 = vpop.f32.mrf.mxu0
    %3342 = vdwg.mxu0
    %3343 = vmatprep.subr.bf16.mxu0 0
    %3344 = vmatpush1.bf16.msra.mxu0 %v2170
    %3345 = vmatprep.subr.bf16.mxu0 0
    %3346 = vmatpush1.bf16.msra.mxu0 %v2167
    %3347 = vmatprep.subr.bf16.mxu0 0
    %3348 = vmatpush1.bf16.msra.mxu0 %v2164
    %3349 = vmatprep.subr.bf16.mxu0 0
    %3350 = vmatpush1.bf16.msra.mxu0 %v2161
    %3351 = vmatprep.subr.bf16.mxu0 0
    %3352 = vmatpush1.bf16.msra.mxu0 %v2158
    %3353 = vmatprep.subr.bf16.mxu0 0
    %3354 = vmatpush1.bf16.msra.mxu0 %v2155
    %3355 = vmatprep.subr.bf16.mxu0 0
    %3356 = vmatpush1.bf16.msra.mxu0 %v2152
    %3357 = vmatprep.subr.bf16.mxu0 0
    %3358 = vmatpush1.bf16.msra.mxu0 %v2149
    %3359 = vmatprep.subr.bf16.mxu0 0
    %3360 = vmatpush2.bf16.msra.mxu0 %v2194
    %3361 = vmatprep.subr.bf16.mxu0 0
    %3362 = vmatpush2.bf16.msra.mxu0 %v2191
    %3363 = vmatprep.subr.bf16.mxu0 0
    %3364 = vmatpush2.bf16.msra.mxu0 %v2188
    %3365 = vmatprep.subr.bf16.mxu0 0
    %3366 = vmatpush2.bf16.msra.mxu0 %v2185
    %3367 = vmatprep.subr.bf16.mxu0 0
    %3368 = vmatpush2.bf16.msra.mxu0 %v2182
    %3369 = vmatprep.subr.bf16.mxu0 0
    %3370 = vmatpush2.bf16.msra.mxu0 %v2179
    %3371 = vmatprep.subr.bf16.mxu0 0
    %3372 = vmatpush2.bf16.msra.mxu0 %v2176
    %3373 = vmatprep.subr.bf16.mxu0 0
    %3374 = vmatpush2.bf16.msra.mxu0 %v2173
    %3375 = vmatprep.mubr.bf16.mxu0 %v708
    %3376 = vmatmul.mubr.bf16.gmra.mxu0 %v707
    %v3377 = vpop.f32.mrf.mxu0
    %v3378 = vadd.f32 %v3337, %v3377
    %v3379 = vpop.f32.mrf.mxu0
    %v3380 = vpop.f32.mrf.mxu0
    %v3381 = vadd.f32 %v3340, %v3380
    %v3382 = vpop.f32.mrf.mxu0
    %3383 = vdwg.mxu0
    %3384 = vmatprep.subr.bf16.mxu0 0
    %3385 = vmatpush1.bf16.msra.mxu0 %v2218
    %3386 = vmatprep.subr.bf16.mxu0 0
    %3387 = vmatpush1.bf16.msra.mxu0 %v2215
    %3388 = vmatprep.subr.bf16.mxu0 0
    %3389 = vmatpush1.bf16.msra.mxu0 %v2212
    %3390 = vmatprep.subr.bf16.mxu0 0
    %3391 = vmatpush1.bf16.msra.mxu0 %v2209
    %3392 = vmatprep.subr.bf16.mxu0 0
    %3393 = vmatpush1.bf16.msra.mxu0 %v2206
    %3394 = vmatprep.subr.bf16.mxu0 0
    %3395 = vmatpush1.bf16.msra.mxu0 %v2203
    %3396 = vmatprep.subr.bf16.mxu0 0
    %3397 = vmatpush1.bf16.msra.mxu0 %v2200
    %3398 = vmatprep.subr.bf16.mxu0 0
    %3399 = vmatpush1.bf16.msra.mxu0 %v2197
    %3400 = vmatprep.subr.bf16.mxu0 0
    %3401 = vmatpush2.bf16.msra.mxu0 %v2242
    %3402 = vmatprep.subr.bf16.mxu0 0
    %3403 = vmatpush2.bf16.msra.mxu0 %v2239
    %3404 = vmatprep.subr.bf16.mxu0 0
    %3405 = vmatpush2.bf16.msra.mxu0 %v2236
    %3406 = vmatprep.subr.bf16.mxu0 0
    %3407 = vmatpush2.bf16.msra.mxu0 %v2233
    %3408 = vmatprep.subr.bf16.mxu0 0
    %3409 = vmatpush2.bf16.msra.mxu0 %v2230
    %3410 = vmatprep.subr.bf16.mxu0 0
    %3411 = vmatpush2.bf16.msra.mxu0 %v2227
    %3412 = vmatprep.subr.bf16.mxu0 0
    %3413 = vmatpush2.bf16.msra.mxu0 %v2224
    %3414 = vmatprep.subr.bf16.mxu0 0
    %3415 = vmatpush2.bf16.msra.mxu0 %v2221
    %3416 = vmatprep.mubr.bf16.mxu0 %v710
    %3417 = vmatmul.mubr.bf16.gmra.mxu0 %v709
    %v3418 = vpop.f32.mrf.mxu0
    %v3419 = vadd.f32 %v3378, %v3418
    %v3420 = vpop.f32.mrf.mxu0
    %v3421 = vpop.f32.mrf.mxu0
    %v3422 = vadd.f32 %v3381, %v3421
    %v3423 = vpop.f32.mrf.mxu0
    %3424 = vdwg.mxu0
    %3425 = vmatprep.subr.bf16.mxu0 0
    %3426 = vmatpush1.bf16.msra.mxu0 %v2266
    %3427 = vmatprep.subr.bf16.mxu0 0
    %3428 = vmatpush1.bf16.msra.mxu0 %v2263
    %3429 = vmatprep.subr.bf16.mxu0 0
    %3430 = vmatpush1.bf16.msra.mxu0 %v2260
    %3431 = vmatprep.subr.bf16.mxu0 0
    %3432 = vmatpush1.bf16.msra.mxu0 %v2257
    %3433 = vmatprep.subr.bf16.mxu0 0
    %3434 = vmatpush1.bf16.msra.mxu0 %v2254
    %3435 = vmatprep.subr.bf16.mxu0 0
    %3436 = vmatpush1.bf16.msra.mxu0 %v2251
    %3437 = vmatprep.subr.bf16.mxu0 0
    %3438 = vmatpush1.bf16.msra.mxu0 %v2248
    %3439 = vmatprep.subr.bf16.mxu0 0
    %3440 = vmatpush1.bf16.msra.mxu0 %v2245
    %3441 = vmatprep.subr.bf16.mxu0 0
    %3442 = vmatpush2.bf16.msra.mxu0 %v2290
    %3443 = vmatprep.subr.bf16.mxu0 0
    %3444 = vmatpush2.bf16.msra.mxu0 %v2287
    %3445 = vmatprep.subr.bf16.mxu0 0
    %3446 = vmatpush2.bf16.msra.mxu0 %v2284
    %3447 = vmatprep.subr.bf16.mxu0 0
    %3448 = vmatpush2.bf16.msra.mxu0 %v2281
    %3449 = vmatprep.subr.bf16.mxu0 0
    %3450 = vmatpush2.bf16.msra.mxu0 %v2278
    %3451 = vmatprep.subr.bf16.mxu0 0
    %3452 = vmatpush2.bf16.msra.mxu0 %v2275
    %3453 = vmatprep.subr.bf16.mxu0 0
    %3454 = vmatpush2.bf16.msra.mxu0 %v2272
    %3455 = vmatprep.subr.bf16.mxu0 0
    %3456 = vmatpush2.bf16.msra.mxu0 %v2269
    %3457 = vmatprep.mubr.bf16.mxu0 %v712
    %3458 = vmatmul.mubr.bf16.gmra.mxu0 %v711
    %v3459 = vpop.f32.mrf.mxu0
    %v3460 = vadd.f32 %v3419, %v3459
    %v3461 = vpop.f32.mrf.mxu0
    %v3462 = vpop.f32.mrf.mxu0
    %v3463 = vadd.f32 %v3422, %v3462
    %v3464 = vpop.f32.mrf.mxu0
    %3465 = vdwg.mxu0
    %3466 = vmatprep.subr.bf16.mxu0 0
    %3467 = vmatpush1.bf16.msra.mxu0 %v2314
    %3468 = vmatprep.subr.bf16.mxu0 0
    %3469 = vmatpush1.bf16.msra.mxu0 %v2311
    %3470 = vmatprep.subr.bf16.mxu0 0
    %3471 = vmatpush1.bf16.msra.mxu0 %v2308
    %3472 = vmatprep.subr.bf16.mxu0 0
    %3473 = vmatpush1.bf16.msra.mxu0 %v2305
    %3474 = vmatprep.subr.bf16.mxu0 0
    %3475 = vmatpush1.bf16.msra.mxu0 %v2302
    %3476 = vmatprep.subr.bf16.mxu0 0
    %3477 = vmatpush1.bf16.msra.mxu0 %v2299
    %3478 = vmatprep.subr.bf16.mxu0 0
    %3479 = vmatpush1.bf16.msra.mxu0 %v2296
    %3480 = vmatprep.subr.bf16.mxu0 0
    %3481 = vmatpush1.bf16.msra.mxu0 %v2293
    %3482 = vmatprep.subr.bf16.mxu0 0
    %3483 = vmatpush2.bf16.msra.mxu0 %v2338
    %3484 = vmatprep.subr.bf16.mxu0 0
    %3485 = vmatpush2.bf16.msra.mxu0 %v2335
    %3486 = vmatprep.subr.bf16.mxu0 0
    %3487 = vmatpush2.bf16.msra.mxu0 %v2332
    %3488 = vmatprep.subr.bf16.mxu0 0
    %3489 = vmatpush2.bf16.msra.mxu0 %v2329
    %3490 = vmatprep.subr.bf16.mxu0 0
    %3491 = vmatpush2.bf16.msra.mxu0 %v2326
    %3492 = vmatprep.subr.bf16.mxu0 0
    %3493 = vmatpush2.bf16.msra.mxu0 %v2323
    %3494 = vmatprep.subr.bf16.mxu0 0
    %3495 = vmatpush2.bf16.msra.mxu0 %v2320
    %3496 = vmatprep.subr.bf16.mxu0 0
    %3497 = vmatpush2.bf16.msra.mxu0 %v2317
    %3498 = vmatprep.mubr.bf16.mxu0 %v714
    %3499 = vmatmul.mubr.bf16.gmra.mxu0 %v713
    %v3500 = vpop.f32.mrf.mxu0
    %v3501 = vadd.f32 %v3460, %v3500
    %v3502 = vpop.f32.mrf.mxu0
    %v3503 = vpop.f32.mrf.mxu0
    %v3504 = vadd.f32 %v3463, %v3503
    %v3505 = vpop.f32.mrf.mxu0
    %3506 = vdwg.mxu0
    %3507 = vmatprep.subr.bf16.mxu0 0
    %3508 = vmatpush1.bf16.msra.mxu0 %v2362
    %3509 = vmatprep.subr.bf16.mxu0 0
    %3510 = vmatpush1.bf16.msra.mxu0 %v2359
    %3511 = vmatprep.subr.bf16.mxu0 0
    %3512 = vmatpush1.bf16.msra.mxu0 %v2356
    %3513 = vmatprep.subr.bf16.mxu0 0
    %3514 = vmatpush1.bf16.msra.mxu0 %v2353
    %3515 = vmatprep.subr.bf16.mxu0 0
    %3516 = vmatpush1.bf16.msra.mxu0 %v2350
    %3517 = vmatprep.subr.bf16.mxu0 0
    %3518 = vmatpush1.bf16.msra.mxu0 %v2347
    %3519 = vmatprep.subr.bf16.mxu0 0
    %3520 = vmatpush1.bf16.msra.mxu0 %v2344
    %3521 = vmatprep.subr.bf16.mxu0 0
    %3522 = vmatpush1.bf16.msra.mxu0 %v2341
    %3523 = vmatprep.subr.bf16.mxu0 0
    %3524 = vmatpush2.bf16.msra.mxu0 %v2386
    %3525 = vmatprep.subr.bf16.mxu0 0
    %3526 = vmatpush2.bf16.msra.mxu0 %v2383
    %3527 = vmatprep.subr.bf16.mxu0 0
    %3528 = vmatpush2.bf16.msra.mxu0 %v2380
    %3529 = vmatprep.subr.bf16.mxu0 0
    %3530 = vmatpush2.bf16.msra.mxu0 %v2377
    %3531 = vmatprep.subr.bf16.mxu0 0
    %3532 = vmatpush2.bf16.msra.mxu0 %v2374
    %3533 = vmatprep.subr.bf16.mxu0 0
    %3534 = vmatpush2.bf16.msra.mxu0 %v2371
    %3535 = vmatprep.subr.bf16.mxu0 0
    %3536 = vmatpush2.bf16.msra.mxu0 %v2368
    %3537 = vmatprep.subr.bf16.mxu0 0
    %3538 = vmatpush2.bf16.msra.mxu0 %v2365
    %3539 = vmatprep.mubr.bf16.mxu0 %v716
    %3540 = vmatmul.mubr.bf16.gmra.mxu0 %v715
    %v3541 = vpop.f32.mrf.mxu0
    %v3542 = vadd.f32 %v3501, %v3541
    %v3543 = vpop.f32.mrf.mxu0
    %v3544 = vpop.f32.mrf.mxu0
    %v3545 = vadd.f32 %v3504, %v3544
    %v3546 = vpop.f32.mrf.mxu0
    %3547 = vdwg.mxu0
    %3548 = vmatprep.subr.bf16.mxu0 0
    %3549 = vmatpush1.bf16.msra.mxu0 %v2410
    %3550 = vmatprep.subr.bf16.mxu0 0
    %3551 = vmatpush1.bf16.msra.mxu0 %v2407
    %3552 = vmatprep.subr.bf16.mxu0 0
    %3553 = vmatpush1.bf16.msra.mxu0 %v2404
    %3554 = vmatprep.subr.bf16.mxu0 0
    %3555 = vmatpush1.bf16.msra.mxu0 %v2401
    %3556 = vmatprep.subr.bf16.mxu0 0
    %3557 = vmatpush1.bf16.msra.mxu0 %v2398
    %3558 = vmatprep.subr.bf16.mxu0 0
    %3559 = vmatpush1.bf16.msra.mxu0 %v2395
    %3560 = vmatprep.subr.bf16.mxu0 0
    %3561 = vmatpush1.bf16.msra.mxu0 %v2392
    %3562 = vmatprep.subr.bf16.mxu0 0
    %3563 = vmatpush1.bf16.msra.mxu0 %v2389
    %3564 = vmatprep.subr.bf16.mxu0 0
    %3565 = vmatpush2.bf16.msra.mxu0 %v2434
    %3566 = vmatprep.subr.bf16.mxu0 0
    %3567 = vmatpush2.bf16.msra.mxu0 %v2431
    %3568 = vmatprep.subr.bf16.mxu0 0
    %3569 = vmatpush2.bf16.msra.mxu0 %v2428
    %3570 = vmatprep.subr.bf16.mxu0 0
    %3571 = vmatpush2.bf16.msra.mxu0 %v2425
    %3572 = vmatprep.subr.bf16.mxu0 0
    %3573 = vmatpush2.bf16.msra.mxu0 %v2422
    %3574 = vmatprep.subr.bf16.mxu0 0
    %3575 = vmatpush2.bf16.msra.mxu0 %v2419
    %3576 = vmatprep.subr.bf16.mxu0 0
    %3577 = vmatpush2.bf16.msra.mxu0 %v2416
    %3578 = vmatprep.subr.bf16.mxu0 0
    %3579 = vmatpush2.bf16.msra.mxu0 %v2413
    %3580 = vmatprep.mubr.bf16.mxu0 %v718
    %3581 = vmatmul.mubr.bf16.gmra.mxu0 %v717
    %v3582 = vpop.f32.mrf.mxu0
    %v3583 = vadd.f32 %v3542, %v3582
    %v3584 = vpop.f32.mrf.mxu0
    %v3585 = vpop.f32.mrf.mxu0
    %v3586 = vadd.f32 %v3545, %v3585
    %v3587 = vpop.f32.mrf.mxu0
    %3588 = vdwg.mxu0
    %3589 = vmatprep.subr.bf16.mxu0 0
    %3590 = vmatpush1.bf16.msra.mxu0 %v2458
    %3591 = vmatprep.subr.bf16.mxu0 0
    %3592 = vmatpush1.bf16.msra.mxu0 %v2455
    %3593 = vmatprep.subr.bf16.mxu0 0
    %3594 = vmatpush1.bf16.msra.mxu0 %v2452
    %3595 = vmatprep.subr.bf16.mxu0 0
    %3596 = vmatpush1.bf16.msra.mxu0 %v2449
    %3597 = vmatprep.subr.bf16.mxu0 0
    %3598 = vmatpush1.bf16.msra.mxu0 %v2446
    %3599 = vmatprep.subr.bf16.mxu0 0
    %3600 = vmatpush1.bf16.msra.mxu0 %v2443
    %3601 = vmatprep.subr.bf16.mxu0 0
    %3602 = vmatpush1.bf16.msra.mxu0 %v2440
    %3603 = vmatprep.subr.bf16.mxu0 0
    %3604 = vmatpush1.bf16.msra.mxu0 %v2437
    %3605 = vmatprep.subr.bf16.mxu0 0
    %3606 = vmatpush2.bf16.msra.mxu0 %v2482
    %3607 = vmatprep.subr.bf16.mxu0 0
    %3608 = vmatpush2.bf16.msra.mxu0 %v2479
    %3609 = vmatprep.subr.bf16.mxu0 0
    %3610 = vmatpush2.bf16.msra.mxu0 %v2476
    %3611 = vmatprep.subr.bf16.mxu0 0
    %3612 = vmatpush2.bf16.msra.mxu0 %v2473
    %3613 = vmatprep.subr.bf16.mxu0 0
    %3614 = vmatpush2.bf16.msra.mxu0 %v2470
    %3615 = vmatprep.subr.bf16.mxu0 0
    %3616 = vmatpush2.bf16.msra.mxu0 %v2467
    %3617 = vmatprep.subr.bf16.mxu0 0
    %3618 = vmatpush2.bf16.msra.mxu0 %v2464
    %3619 = vmatprep.subr.bf16.mxu0 0
    %3620 = vmatpush2.bf16.msra.mxu0 %v2461
    %3621 = vmatprep.mubr.bf16.mxu0 %v720
    %3622 = vmatmul.mubr.bf16.gmra.mxu0 %v719
    %v3623 = vpop.f32.mrf.mxu0
    %v3624 = vadd.f32 %v3583, %v3623
    %v3625 = vpop.f32.mrf.mxu0
    %v3626 = vpop.f32.mrf.mxu0
    %v3627 = vadd.f32 %v3586, %v3626
    %v3628 = vpop.f32.mrf.mxu0
    %3629 = vdwg.mxu0
    %3630 = vmatprep.subr.bf16.mxu0 0
    %3631 = vmatpush1.bf16.msra.mxu0 %v2506
    %3632 = vmatprep.subr.bf16.mxu0 0
    %3633 = vmatpush1.bf16.msra.mxu0 %v2503
    %3634 = vmatprep.subr.bf16.mxu0 0
    %3635 = vmatpush1.bf16.msra.mxu0 %v2500
    %3636 = vmatprep.subr.bf16.mxu0 0
    %3637 = vmatpush1.bf16.msra.mxu0 %v2497
    %3638 = vmatprep.subr.bf16.mxu0 0
    %3639 = vmatpush1.bf16.msra.mxu0 %v2494
    %3640 = vmatprep.subr.bf16.mxu0 0
    %3641 = vmatpush1.bf16.msra.mxu0 %v2491
    %3642 = vmatprep.subr.bf16.mxu0 0
    %3643 = vmatpush1.bf16.msra.mxu0 %v2488
    %3644 = vmatprep.subr.bf16.mxu0 0
    %3645 = vmatpush1.bf16.msra.mxu0 %v2485
    %3646 = vmatprep.subr.bf16.mxu0 0
    %3647 = vmatpush2.bf16.msra.mxu0 0
    %3648 = vmatprep.subr.bf16.mxu0 0
    %3649 = vmatpush2.bf16.msra.mxu0 0
    %3650 = vmatprep.subr.bf16.mxu0 0
    %3651 = vmatpush2.bf16.msra.mxu0 0
    %3652 = vmatprep.subr.bf16.mxu0 0
    %3653 = vmatpush2.bf16.msra.mxu0 0
    %3654 = vmatprep.subr.bf16.mxu0 0
    %3655 = vmatpush2.bf16.msra.mxu0 0
    %3656 = vmatprep.subr.bf16.mxu0 0
    %3657 = vmatpush2.bf16.msra.mxu0 0
    %3658 = vmatprep.subr.bf16.mxu0 0
    %3659 = vmatpush2.bf16.msra.mxu0 0
    %3660 = vmatprep.subr.bf16.mxu0 0
    %3661 = vmatpush2.bf16.msra.mxu0 0
    %3662 = vmatprep.mubr.bf16.mxu0 0
    %3663 = vmatmul.mubr.bf16.gmra.mxu0 %v721
    %v3664 = vpop.f32.mrf.mxu0
    %v3665 = vadd.f32 %v3624, %v3664
    %v3666 = vpop.f32.mrf.mxu0
    %v3667 = vpop.f32.mrf.mxu0
    %v3668 = vadd.f32 %v3627, %v3667
    %v3669 = vpop.f32.mrf.mxu0
    %3670 = vdwg.mxu0
    %v3671 = vtanh.pop %v3294
    %v3672 = vtanh.pop %v3296
    %v3673 = vtanh.pop %v3665
    %v3674 = vtanh.pop %v3298
    %v3675 = vtanh.pop %v3300
    %v3676 = vtanh.pop %v3668
    %v3677 = vpack.c.bf16 %v3674, %v3671
    %v3678 = vpack.c.bf16 %v3675, %v3672
    %v3679 = vpack.c.bf16 %v3676, %v3673
    %v3680 = vld [vmem:[#allocation4] sm:$0xff]
    %v3681 = vld [vmem:[#allocation4 + $0x8] sm:$0xff]
    %v3682 = vld [vmem:[#allocation4 + $0x10] sm:$0xff]
    %v3683 = vld [vmem:[#allocation4 + $0x18] sm:$0xff]
    %v3684 = vld [vmem:[#allocation4 + $0x20] sm:$0xff]
    %v3685 = vld [vmem:[#allocation4 + $0x28] sm:$0xff]
    %v3686 = vld [vmem:[#allocation4 + $0x30] sm:$0xff]
    %v3687 = vld [vmem:[#allocation4 + $0x38] sm:$0xff]
    %v3688 = vld [vmem:[#allocation4 + $0x40] sm:$0xff]
    %v3689 = vld [vmem:[#allocation4 + $0x48] sm:$0xff]
    %v3690 = vld [vmem:[#allocation4 + $0x50] sm:$0xff]
    %v3691 = vld [vmem:[#allocation4 + $0x58] sm:$0xff]
    %v3692 = vld [vmem:[#allocation4 + $0x60] sm:$0xff]
    %v3693 = vld [vmem:[#allocation4 + $0x68] sm:$0xff]
    %v3694 = vld [vmem:[#allocation4 + $0x70] sm:$0xff]
    %v3695 = vld [vmem:[#allocation4 + $0x78] sm:$0xff]
    %v3696 = vld [vmem:[#allocation4 + $0x80] sm:$0xff]
    %v3697 = vld [vmem:[#allocation4 + $0x88] sm:$0xff]
    %v3698 = vld [vmem:[#allocation4 + $0x90] sm:$0xff]
    %v3699 = vld [vmem:[#allocation4 + $0x98] sm:$0xff]
    %v3700 = vld [vmem:[#allocation4 + $0xa0] sm:$0xff]
    %v3701 = vld [vmem:[#allocation4 + $0xa8] sm:$0xff]
    %v3702 = vld [vmem:[#allocation4 + $0xb0] sm:$0xff]
    %v3703 = vld [vmem:[#allocation4 + $0xb8] sm:$0xff]
    %v3704 = vld [vmem:[#allocation4 + $0xc0] sm:$0xff]
    %v3705 = vld [vmem:[#allocation4 + $0xc8] sm:$0xff]
    %v3706 = vld [vmem:[#allocation4 + $0xd0] sm:$0xff]
    %v3707 = vld [vmem:[#allocation4 + $0xd8] sm:$0xff]
    %v3708 = vld [vmem:[#allocation4 + $0xe0] sm:$0xff]
    %v3709 = vld [vmem:[#allocation4 + $0xe8] sm:$0xff]
    %v3710 = vld [vmem:[#allocation4 + $0xf0] sm:$0xff]
    %v3711 = vld [vmem:[#allocation4 + $0xf8] sm:$0xff]
    %v3712 = vld [vmem:[#allocation4 + $0x100] sm:$0xff]
    %v3713 = vld [vmem:[#allocation4 + $0x108] sm:$0xff]
    %v3714 = vld [vmem:[#allocation4 + $0x110] sm:$0xff]
    %v3715 = vld [vmem:[#allocation4 + $0x118] sm:$0xff]
    %v3716 = vld [vmem:[#allocation4 + $0x120] sm:$0xff]
    %v3717 = vld [vmem:[#allocation4 + $0x128] sm:$0xff]
    %v3718 = vld [vmem:[#allocation4 + $0x130] sm:$0xff]
    %v3719 = vld [vmem:[#allocation4 + $0x138] sm:$0xff]
    %v3720 = vld [vmem:[#allocation4 + $0x140] sm:$0xff]
    %v3721 = vld [vmem:[#allocation4 + $0x148] sm:$0xff]
    %v3722 = vld [vmem:[#allocation4 + $0x150] sm:$0xff]
    %v3723 = vld [vmem:[#allocation4 + $0x158] sm:$0xff]
    %v3724 = vld [vmem:[#allocation4 + $0x160] sm:$0xff]
    %v3725 = vld [vmem:[#allocation4 + $0x168] sm:$0xff]
    %v3726 = vld [vmem:[#allocation4 + $0x170] sm:$0xff]
    %v3727 = vld [vmem:[#allocation4 + $0x178] sm:$0xff]
    %v3728 = vld [vmem:[#allocation7 + $0x3] sm:$0x3]
    %v3730 = vlaneseq
    %v3731 = vshrl.u32 %v3730, 7
    %v3732 = vsub.s32 0, %v3731
    %v3733 = vrot.slane %v3728, %v3732
    %v3734 = vlaneseq
    %v3735 = vshrl.u32 %v3734, 7
    %v3736 = vsub.s32 1, %v3735
    %v3737 = vrot.slane %v3728, %v3736
    %v3788 = vunpack.c.l.b16 %v3680
    %v3789 = vunpack.c.h.b16 %v3680
    %v3790 = vunpack.c.l.b16 %v3681
    %v3791 = vunpack.c.h.b16 %v3681
    %v3792 = vunpack.c.l.b16 %v3682
    %v3793 = vunpack.c.h.b16 %v3682
    %v3794 = vunpack.c.l.b16 %v3683
    %v3795 = vunpack.c.h.b16 %v3683
    %v3796 = vunpack.c.l.b16 %v3684
    %v3797 = vunpack.c.h.b16 %v3684
    %v3798 = vunpack.c.l.b16 %v3685
    %v3799 = vunpack.c.h.b16 %v3685
    %v3800 = vunpack.c.l.b16 %v3686
    %v3801 = vunpack.c.h.b16 %v3686
    %v3802 = vunpack.c.l.b16 %v3687
    %v3803 = vunpack.c.h.b16 %v3687
    %v3804 = vunpack.c.l.b16 %v3688
    %v3805 = vunpack.c.h.b16 %v3688
    %v3806 = vunpack.c.l.b16 %v3689
    %v3807 = vunpack.c.h.b16 %v3689
    %v3808 = vunpack.c.l.b16 %v3690
    %v3809 = vunpack.c.h.b16 %v3690
    %v3810 = vunpack.c.l.b16 %v3691
    %v3811 = vunpack.c.h.b16 %v3691
    %v3812 = vunpack.c.l.b16 %v3692
    %v3813 = vunpack.c.h.b16 %v3692
    %v3814 = vunpack.c.l.b16 %v3693
    %v3815 = vunpack.c.h.b16 %v3693
    %v3816 = vunpack.c.l.b16 %v3694
    %v3817 = vunpack.c.h.b16 %v3694
    %v3818 = vunpack.c.l.b16 %v3695
    %v3819 = vunpack.c.h.b16 %v3695
    %v3820 = vunpack.c.l.b16 %v3696
    %v3821 = vunpack.c.h.b16 %v3696
    %v3822 = vunpack.c.l.b16 %v3697
    %v3823 = vunpack.c.h.b16 %v3697
    %v3824 = vunpack.c.l.b16 %v3698
    %v3825 = vunpack.c.h.b16 %v3698
    %v3826 = vunpack.c.l.b16 %v3699
    %v3827 = vunpack.c.h.b16 %v3699
    %v3828 = vunpack.c.l.b16 %v3700
    %v3829 = vunpack.c.h.b16 %v3700
    %v3830 = vunpack.c.l.b16 %v3701
    %v3831 = vunpack.c.h.b16 %v3701
    %v3832 = vunpack.c.l.b16 %v3702
    %v3833 = vunpack.c.h.b16 %v3702
    %v3834 = vunpack.c.l.b16 %v3703
    %v3835 = vunpack.c.h.b16 %v3703
    %v3836 = vunpack.c.l.b16 %v3704
    %v3837 = vunpack.c.h.b16 %v3704
    %v3838 = vunpack.c.l.b16 %v3705
    %v3839 = vunpack.c.h.b16 %v3705
    %v3840 = vunpack.c.l.b16 %v3706
    %v3841 = vunpack.c.h.b16 %v3706
    %v3842 = vunpack.c.l.b16 %v3707
    %v3843 = vunpack.c.h.b16 %v3707
    %v3844 = vunpack.c.l.b16 %v3708
    %v3845 = vunpack.c.h.b16 %v3708
    %v3846 = vunpack.c.l.b16 %v3709
    %v3847 = vunpack.c.h.b16 %v3709
    %v3848 = vunpack.c.l.b16 %v3710
    %v3849 = vunpack.c.h.b16 %v3710
    %v3850 = vunpack.c.l.b16 %v3711
    %v3851 = vunpack.c.h.b16 %v3711
    %v3852 = vunpack.c.l.b16 %v3712
    %v3853 = vunpack.c.h.b16 %v3712
    %v3854 = vunpack.c.l.b16 %v3713
    %v3855 = vunpack.c.h.b16 %v3713
    %v3856 = vunpack.c.l.b16 %v3714
    %v3857 = vunpack.c.h.b16 %v3714
    %v3858 = vunpack.c.l.b16 %v3715
    %v3859 = vunpack.c.h.b16 %v3715
    %v3860 = vunpack.c.l.b16 %v3716
    %v3861 = vunpack.c.h.b16 %v3716
    %v3862 = vunpack.c.l.b16 %v3717
    %v3863 = vunpack.c.h.b16 %v3717
    %v3864 = vunpack.c.l.b16 %v3718
    %v3865 = vunpack.c.h.b16 %v3718
    %v3866 = vunpack.c.l.b16 %v3719
    %v3867 = vunpack.c.h.b16 %v3719
    %v3868 = vunpack.c.l.b16 %v3720
    %v3869 = vunpack.c.h.b16 %v3720
    %v3870 = vunpack.c.l.b16 %v3721
    %v3871 = vunpack.c.h.b16 %v3721
    %v3872 = vunpack.c.l.b16 %v3722
    %v3873 = vunpack.c.h.b16 %v3722
    %v3874 = vunpack.c.l.b16 %v3723
    %v3875 = vunpack.c.h.b16 %v3723
    %v3876 = vunpack.c.l.b16 %v3724
    %v3877 = vunpack.c.h.b16 %v3724
    %v3878 = vunpack.c.l.b16 %v3725
    %v3879 = vunpack.c.h.b16 %v3725
    %v3880 = vunpack.c.l.b16 %v3726
    %v3881 = vunpack.c.h.b16 %v3726
    %v3882 = vunpack.c.l.b16 %v3727
    %v3883 = vunpack.c.h.b16 %v3727
    %v3884 = vpack.c.b16 %v3790, %v3788
    %v3885 = vpack.c.b16 %v3791, %v3789
    %v3886 = vpack.c.b16 %v3794, %v3792
    %v3887 = vpack.c.b16 %v3795, %v3793
    %v3888 = vpack.c.b16 %v3798, %v3796
    %v3889 = vpack.c.b16 %v3799, %v3797
    %v3890 = vpack.c.b16 %v3802, %v3800
    %v3891 = vpack.c.b16 %v3803, %v3801
    %v3892 = vpack.c.b16 %v3806, %v3804
    %v3893 = vpack.c.b16 %v3807, %v3805
    %v3894 = vpack.c.b16 %v3810, %v3808
    %v3895 = vpack.c.b16 %v3811, %v3809
    %v3896 = vpack.c.b16 %v3814, %v3812
    %v3897 = vpack.c.b16 %v3815, %v3813
    %v3898 = vpack.c.b16 %v3818, %v3816
    %v3899 = vpack.c.b16 %v3819, %v3817
    %v3900 = vpack.c.b16 %v3822, %v3820
    %v3901 = vpack.c.b16 %v3823, %v3821
    %v3902 = vpack.c.b16 %v3826, %v3824
    %v3903 = vpack.c.b16 %v3827, %v3825
    %v3904 = vpack.c.b16 %v3830, %v3828
    %v3905 = vpack.c.b16 %v3831, %v3829
    %v3906 = vpack.c.b16 %v3834, %v3832
    %v3907 = vpack.c.b16 %v3835, %v3833
    %v3908 = vpack.c.b16 %v3838, %v3836
    %v3909 = vpack.c.b16 %v3839, %v3837
    %v3910 = vpack.c.b16 %v3842, %v3840
    %v3911 = vpack.c.b16 %v3843, %v3841
    %v3912 = vpack.c.b16 %v3846, %v3844
    %v3913 = vpack.c.b16 %v3847, %v3845
    %v3914 = vpack.c.b16 %v3850, %v3848
    %v3915 = vpack.c.b16 %v3851, %v3849
    %v3916 = vpack.c.b16 %v3854, %v3852
    %v3917 = vpack.c.b16 %v3855, %v3853
    %v3918 = vpack.c.b16 %v3858, %v3856
    %v3919 = vpack.c.b16 %v3859, %v3857
    %v3920 = vpack.c.b16 %v3862, %v3860
    %v3921 = vpack.c.b16 %v3863, %v3861
    %v3922 = vpack.c.b16 %v3866, %v3864
    %v3923 = vpack.c.b16 %v3867, %v3865
    %v3924 = vpack.c.b16 %v3870, %v3868
    %v3925 = vpack.c.b16 %v3871, %v3869
    %v3926 = vpack.c.b16 %v3874, %v3872
    %v3927 = vpack.c.b16 %v3875, %v3873
    %v3928 = vpack.c.b16 %v3878, %v3876
    %v3929 = vpack.c.b16 %v3879, %v3877
    %v3930 = vpack.c.b16 %v3882, %v3880
    %v3931 = vpack.c.b16 %v3883, %v3881
    %3980 = vmatprep.subr.bf16.mxu0 %v3899
    %3981 = vmatpush1.bf16.msra.mxu0 %v3898
    %3982 = vmatprep.subr.bf16.mxu0 %v3897
    %3983 = vmatpush1.bf16.msra.mxu0 %v3896
    %3984 = vmatprep.subr.bf16.mxu0 %v3895
    %3985 = vmatpush1.bf16.msra.mxu0 %v3894
    %3986 = vmatprep.subr.bf16.mxu0 %v3893
    %3987 = vmatpush1.bf16.msra.mxu0 %v3892
    %3988 = vmatprep.subr.bf16.mxu0 %v3891
    %3989 = vmatpush1.bf16.msra.mxu0 %v3890
    %3990 = vmatprep.subr.bf16.mxu0 %v3889
    %3991 = vmatpush1.bf16.msra.mxu0 %v3888
    %3992 = vmatprep.subr.bf16.mxu0 %v3887
    %3993 = vmatpush1.bf16.msra.mxu0 %v3886
    %3994 = vmatprep.subr.bf16.mxu0 %v3885
    %3995 = vmatpush1.bf16.msra.mxu0 %v3884
    %3996 = vmatprep.subr.bf16.mxu0 %v3915
    %3997 = vmatpush2.bf16.msra.mxu0 %v3914
    %3998 = vmatprep.subr.bf16.mxu0 %v3913
    %3999 = vmatpush2.bf16.msra.mxu0 %v3912
    %4000 = vmatprep.subr.bf16.mxu0 %v3911
    %4001 = vmatpush2.bf16.msra.mxu0 %v3910
    %4002 = vmatprep.subr.bf16.mxu0 %v3909
    %4003 = vmatpush2.bf16.msra.mxu0 %v3908
    %4004 = vmatprep.subr.bf16.mxu0 %v3907
    %4005 = vmatpush2.bf16.msra.mxu0 %v3906
    %4006 = vmatprep.subr.bf16.mxu0 %v3905
    %4007 = vmatpush2.bf16.msra.mxu0 %v3904
    %4008 = vmatprep.subr.bf16.mxu0 %v3903
    %4009 = vmatpush2.bf16.msra.mxu0 %v3902
    %4010 = vmatprep.subr.bf16.mxu0 %v3901
    %4011 = vmatpush2.bf16.msra.mxu0 %v3900
    %4012 = vmatprep.mubr.bf16.mxu0 %v3678
    %4013 = vmatmul.mubr.bf16.gmra.mxu0 %v3677
    %v4014 = vpop.f32.mrf.mxu0
    %v4015 = vadd.f32 %v3733, %v4014
    %v4016 = vpop.f32.mrf.mxu0
    %v4017 = vadd.f32 %v3737, %v4016
    %v4018 = vpop.f32.mrf.mxu0
    %v4019 = vadd.f32 %v3733, %v4018
    %v4020 = vpop.f32.mrf.mxu0
    %v4021 = vadd.f32 %v3737, %v4020
    %4022 = vdwg.mxu0
    %4023 = vmatprep.subr.bf16.mxu0 %v3931
    %4024 = vmatpush1.bf16.msra.mxu0 %v3930
    %4025 = vmatprep.subr.bf16.mxu0 %v3929
    %4026 = vmatpush1.bf16.msra.mxu0 %v3928
    %4027 = vmatprep.subr.bf16.mxu0 %v3927
    %4028 = vmatpush1.bf16.msra.mxu0 %v3926
    %4029 = vmatprep.subr.bf16.mxu0 %v3925
    %4030 = vmatpush1.bf16.msra.mxu0 %v3924
    %4031 = vmatprep.subr.bf16.mxu0 %v3923
    %4032 = vmatpush1.bf16.msra.mxu0 %v3922
    %4033 = vmatprep.subr.bf16.mxu0 %v3921
    %4034 = vmatpush1.bf16.msra.mxu0 %v3920
    %4035 = vmatprep.subr.bf16.mxu0 %v3919
    %4036 = vmatpush1.bf16.msra.mxu0 %v3918
    %4037 = vmatprep.subr.bf16.mxu0 %v3917
    %4038 = vmatpush1.bf16.msra.mxu0 %v3916
    %4039 = vmatprep.subr.bf16.mxu0 0
    %4040 = vmatpush2.bf16.msra.mxu0 0
    %4041 = vmatprep.subr.bf16.mxu0 0
    %4042 = vmatpush2.bf16.msra.mxu0 0
    %4043 = vmatprep.subr.bf16.mxu0 0
    %4044 = vmatpush2.bf16.msra.mxu0 0
    %4045 = vmatprep.subr.bf16.mxu0 0
    %4046 = vmatpush2.bf16.msra.mxu0 0
    %4047 = vmatprep.subr.bf16.mxu0 0
    %4048 = vmatpush2.bf16.msra.mxu0 0
    %4049 = vmatprep.subr.bf16.mxu0 0
    %4050 = vmatpush2.bf16.msra.mxu0 0
    %4051 = vmatprep.subr.bf16.mxu0 0
    %4052 = vmatpush2.bf16.msra.mxu0 0
    %4053 = vmatprep.subr.bf16.mxu0 0
    %4054 = vmatpush2.bf16.msra.mxu0 0
    %4055 = vmatprep.mubr.bf16.mxu0 0
    %4056 = vmatmul.mubr.bf16.gmra.mxu0 %v3679
    %v4057 = vpop.f32.mrf.mxu0
    %v4058 = vadd.f32 %v4015, %v4057
    %v4059 = vpop.f32.mrf.mxu0
    %v4060 = vadd.f32 %v4017, %v4059
    %v4061 = vpop.f32.mrf.mxu0
    %v4062 = vadd.f32 %v4019, %v4061
    %v4063 = vpop.f32.mrf.mxu0
    %v4064 = vadd.f32 %v4021, %v4063
    %4065 = vdwg.mxu0
    %v4066 = vtanh.pop %v4058
    %v4067 = vtanh.pop %v4060
    %v4068 = vtanh.pop %v4062
    %v4069 = vtanh.pop %v4064
    %v4070 = vpack.c.bf16 %v4068, %v4066
    %v4071 = vpack.c.bf16 %v4069, %v4067
    %v4072 = vld [vmem:[#allocation4 + $0x180] sm:$0xff]
    %v4073 = vld [vmem:[#allocation4 + $0x188] sm:$0xff]
    %v4074 = vld [vmem:[#allocation4 + $0x190] sm:$0xff]
    %v4075 = vld [vmem:[#allocation4 + $0x198] sm:$0xff]
    %v4076 = vld [vmem:[#allocation4 + $0x1a0] sm:$0xff]
    %v4077 = vld [vmem:[#allocation4 + $0x1a8] sm:$0xff]
    %v4078 = vld [vmem:[#allocation4 + $0x1b0] sm:$0xff]
    %v4079 = vld [vmem:[#allocation4 + $0x1b8] sm:$0xff]
    %v4080 = vld [vmem:[#allocation4 + $0x1c0] sm:$0xff]
    %v4081 = vld [vmem:[#allocation4 + $0x1c8] sm:$0xff]
    %v4082 = vld [vmem:[#allocation4 + $0x1d0] sm:$0xff]
    %v4083 = vld [vmem:[#allocation4 + $0x1d8] sm:$0xff]
    %v4084 = vld [vmem:[#allocation4 + $0x1e0] sm:$0xff]
    %v4085 = vld [vmem:[#allocation4 + $0x1e8] sm:$0xff]
    %v4086 = vld [vmem:[#allocation4 + $0x1f0] sm:$0xff]
    %v4087 = vld [vmem:[#allocation4 + $0x1f8] sm:$0xff]
    %v4088 = vld [vmem:[#allocation4 + $0x200] sm:$0xff]
    %v4089 = vld [vmem:[#allocation4 + $0x208] sm:$0xff]
    %v4090 = vld [vmem:[#allocation4 + $0x210] sm:$0xff]
    %v4091 = vld [vmem:[#allocation4 + $0x218] sm:$0xff]
    %v4092 = vld [vmem:[#allocation4 + $0x220] sm:$0xff]
    %v4093 = vld [vmem:[#allocation4 + $0x228] sm:$0xff]
    %v4094 = vld [vmem:[#allocation4 + $0x230] sm:$0xff]
    %v4095 = vld [vmem:[#allocation4 + $0x238] sm:$0xff]
    %v4096 = vld [vmem:[#allocation4 + $0x240] sm:$0xff]
    %v4097 = vld [vmem:[#allocation4 + $0x248] sm:$0xff]
    %v4098 = vld [vmem:[#allocation4 + $0x250] sm:$0xff]
    %v4099 = vld [vmem:[#allocation4 + $0x258] sm:$0xff]
    %v4100 = vld [vmem:[#allocation4 + $0x260] sm:$0xff]
    %v4101 = vld [vmem:[#allocation4 + $0x268] sm:$0xff]
    %v4102 = vld [vmem:[#allocation4 + $0x270] sm:$0xff]
    %v4103 = vld [vmem:[#allocation4 + $0x278] sm:$0xff]
    %v4104 = vld [vmem:[#allocation7 + $0x5] sm:$0x3]
    %v4106 = vlaneseq
    %v4107 = vshrl.u32 %v4106, 7
    %v4108 = vsub.s32 0, %v4107
    %v4109 = vrot.slane %v4104, %v4108
    %v4110 = vlaneseq
    %v4111 = vshrl.u32 %v4110, 7
    %v4112 = vsub.s32 1, %v4111
    %v4113 = vrot.slane %v4104, %v4112
    %v4148 = vunpack.c.l.b16 %v4072
    %v4149 = vunpack.c.h.b16 %v4072
    %v4150 = vunpack.c.l.b16 %v4073
    %v4151 = vunpack.c.h.b16 %v4073
    %v4152 = vunpack.c.l.b16 %v4074
    %v4153 = vunpack.c.h.b16 %v4074
    %v4154 = vunpack.c.l.b16 %v4075
    %v4155 = vunpack.c.h.b16 %v4075
    %v4156 = vunpack.c.l.b16 %v4076
    %v4157 = vunpack.c.h.b16 %v4076
    %v4158 = vunpack.c.l.b16 %v4077
    %v4159 = vunpack.c.h.b16 %v4077
    %v4160 = vunpack.c.l.b16 %v4078
    %v4161 = vunpack.c.h.b16 %v4078
    %v4162 = vunpack.c.l.b16 %v4079
    %v4163 = vunpack.c.h.b16 %v4079
    %v4164 = vunpack.c.l.b16 %v4080
    %v4165 = vunpack.c.h.b16 %v4080
    %v4166 = vunpack.c.l.b16 %v4081
    %v4167 = vunpack.c.h.b16 %v4081
    %v4168 = vunpack.c.l.b16 %v4082
    %v4169 = vunpack.c.h.b16 %v4082
    %v4170 = vunpack.c.l.b16 %v4083
    %v4171 = vunpack.c.h.b16 %v4083
    %v4172 = vunpack.c.l.b16 %v4084
    %v4173 = vunpack.c.h.b16 %v4084
    %v4174 = vunpack.c.l.b16 %v4085
    %v4175 = vunpack.c.h.b16 %v4085
    %v4176 = vunpack.c.l.b16 %v4086
    %v4177 = vunpack.c.h.b16 %v4086
    %v4178 = vunpack.c.l.b16 %v4087
    %v4179 = vunpack.c.h.b16 %v4087
    %v4180 = vunpack.c.l.b16 %v4088
    %v4181 = vunpack.c.h.b16 %v4088
    %v4182 = vunpack.c.l.b16 %v4089
    %v4183 = vunpack.c.h.b16 %v4089
    %v4184 = vunpack.c.l.b16 %v4090
    %v4185 = vunpack.c.h.b16 %v4090
    %v4186 = vunpack.c.l.b16 %v4091
    %v4187 = vunpack.c.h.b16 %v4091
    %v4188 = vunpack.c.l.b16 %v4092
    %v4189 = vunpack.c.h.b16 %v4092
    %v4190 = vunpack.c.l.b16 %v4093
    %v4191 = vunpack.c.h.b16 %v4093
    %v4192 = vunpack.c.l.b16 %v4094
    %v4193 = vunpack.c.h.b16 %v4094
    %v4194 = vunpack.c.l.b16 %v4095
    %v4195 = vunpack.c.h.b16 %v4095
    %v4196 = vunpack.c.l.b16 %v4096
    %v4197 = vunpack.c.h.b16 %v4096
    %v4198 = vunpack.c.l.b16 %v4097
    %v4199 = vunpack.c.h.b16 %v4097
    %v4200 = vunpack.c.l.b16 %v4098
    %v4201 = vunpack.c.h.b16 %v4098
    %v4202 = vunpack.c.l.b16 %v4099
    %v4203 = vunpack.c.h.b16 %v4099
    %v4204 = vunpack.c.l.b16 %v4100
    %v4205 = vunpack.c.h.b16 %v4100
    %v4206 = vunpack.c.l.b16 %v4101
    %v4207 = vunpack.c.h.b16 %v4101
    %v4208 = vunpack.c.l.b16 %v4102
    %v4209 = vunpack.c.h.b16 %v4102
    %v4210 = vunpack.c.l.b16 %v4103
    %v4211 = vunpack.c.h.b16 %v4103
    %v4212 = vpack.c.b16 %v4150, %v4148
    %v4213 = vpack.c.b16 %v4151, %v4149
    %v4214 = vpack.c.b16 %v4154, %v4152
    %v4215 = vpack.c.b16 %v4155, %v4153
    %v4216 = vpack.c.b16 %v4158, %v4156
    %v4217 = vpack.c.b16 %v4159, %v4157
    %v4218 = vpack.c.b16 %v4162, %v4160
    %v4219 = vpack.c.b16 %v4163, %v4161
    %v4220 = vpack.c.b16 %v4166, %v4164
    %v4221 = vpack.c.b16 %v4167, %v4165
    %v4222 = vpack.c.b16 %v4170, %v4168
    %v4223 = vpack.c.b16 %v4171, %v4169
    %v4224 = vpack.c.b16 %v4174, %v4172
    %v4225 = vpack.c.b16 %v4175, %v4173
    %v4226 = vpack.c.b16 %v4178, %v4176
    %v4227 = vpack.c.b16 %v4179, %v4177
    %v4228 = vpack.c.b16 %v4182, %v4180
    %v4229 = vpack.c.b16 %v4183, %v4181
    %v4230 = vpack.c.b16 %v4186, %v4184
    %v4231 = vpack.c.b16 %v4187, %v4185
    %v4232 = vpack.c.b16 %v4190, %v4188
    %v4233 = vpack.c.b16 %v4191, %v4189
    %v4234 = vpack.c.b16 %v4194, %v4192
    %v4235 = vpack.c.b16 %v4195, %v4193
    %v4236 = vpack.c.b16 %v4198, %v4196
    %v4237 = vpack.c.b16 %v4199, %v4197
    %v4238 = vpack.c.b16 %v4202, %v4200
    %v4239 = vpack.c.b16 %v4203, %v4201
    %v4240 = vpack.c.b16 %v4206, %v4204
    %v4241 = vpack.c.b16 %v4207, %v4205
    %v4242 = vpack.c.b16 %v4210, %v4208
    %v4243 = vpack.c.b16 %v4211, %v4209
    %4276 = vmatprep.subr.bf16.mxu0 %v4227
    %4277 = vmatpush1.bf16.msra.mxu0 %v4226
    %4278 = vmatprep.subr.bf16.mxu0 %v4225
    %4279 = vmatpush1.bf16.msra.mxu0 %v4224
    %4280 = vmatprep.subr.bf16.mxu0 %v4223
    %4281 = vmatpush1.bf16.msra.mxu0 %v4222
    %4282 = vmatprep.subr.bf16.mxu0 %v4221
    %4283 = vmatpush1.bf16.msra.mxu0 %v4220
    %4284 = vmatprep.subr.bf16.mxu0 %v4219
    %4285 = vmatpush1.bf16.msra.mxu0 %v4218
    %4286 = vmatprep.subr.bf16.mxu0 %v4217
    %4287 = vmatpush1.bf16.msra.mxu0 %v4216
    %4288 = vmatprep.subr.bf16.mxu0 %v4215
    %4289 = vmatpush1.bf16.msra.mxu0 %v4214
    %4290 = vmatprep.subr.bf16.mxu0 %v4213
    %4291 = vmatpush1.bf16.msra.mxu0 %v4212
    %4292 = vmatprep.subr.bf16.mxu0 %v4243
    %4293 = vmatpush2.bf16.msra.mxu0 %v4242
    %4294 = vmatprep.subr.bf16.mxu0 %v4241
    %4295 = vmatpush2.bf16.msra.mxu0 %v4240
    %4296 = vmatprep.subr.bf16.mxu0 %v4239
    %4297 = vmatpush2.bf16.msra.mxu0 %v4238
    %4298 = vmatprep.subr.bf16.mxu0 %v4237
    %4299 = vmatpush2.bf16.msra.mxu0 %v4236
    %4300 = vmatprep.subr.bf16.mxu0 %v4235
    %4301 = vmatpush2.bf16.msra.mxu0 %v4234
    %4302 = vmatprep.subr.bf16.mxu0 %v4233
    %4303 = vmatpush2.bf16.msra.mxu0 %v4232
    %4304 = vmatprep.subr.bf16.mxu0 %v4231
    %4305 = vmatpush2.bf16.msra.mxu0 %v4230
    %4306 = vmatprep.subr.bf16.mxu0 %v4229
    %4307 = vmatpush2.bf16.msra.mxu0 %v4228
    %4308 = vmatprep.mubr.bf16.mxu0 %v4071
    %4309 = vmatmul.mubr.bf16.gmra.mxu0 %v4070
    %v4310 = vpop.f32.mrf.mxu0
    %v4311 = vadd.f32 %v4109, %v4310
    %v4312 = vpop.f32.mrf.mxu0
    %v4313 = vadd.f32 %v4113, %v4312
    %v4314 = vpop.f32.mrf.mxu0
    %v4315 = vadd.f32 %v4109, %v4314
    %v4316 = vpop.f32.mrf.mxu0
    %v4317 = vadd.f32 %v4113, %v4316
    %4318 = vdwg.mxu0
    %v4319 = vtanh.pop %v4311
    %v4320 = vtanh.pop %v4313
    %v4321 = vtanh.pop %v4315
    %v4322 = vtanh.pop %v4317
    %v4323 = vpack.c.bf16 %v4321, %v4319
    %v4324 = vpack.c.bf16 %v4322, %v4320
    %v4325 = vld [vmem:[#allocation6] sm:$0xf]
    %v4326 = vld [vmem:[#allocation6 + $0x4] sm:$0xf]
    %v4327 = vld [vmem:[#allocation6 + $0x8] sm:$0xf]
    %v4328 = vld [vmem:[#allocation6 + $0xc] sm:$0xf]
    %v4329 = vld [vmem:[#allocation6 + $0x10] sm:$0xf]
    %v4330 = vld [vmem:[#allocation6 + $0x14] sm:$0xf]
    %v4331 = vld [vmem:[#allocation6 + $0x18] sm:$0xf]
    %v4332 = vld [vmem:[#allocation6 + $0x1c] sm:$0xf]
    %v4333 = vld [vmem:[#allocation6 + $0x20] sm:$0xf]
    %v4334 = vld [vmem:[#allocation6 + $0x24] sm:$0xf]
    %v4335 = vld [vmem:[#allocation6 + $0x28] sm:$0xf]
    %v4336 = vld [vmem:[#allocation6 + $0x2c] sm:$0xf]
    %v4337 = vld [vmem:[#allocation6 + $0x30] sm:$0xf]
    %v4338 = vld [vmem:[#allocation6 + $0x34] sm:$0xf]
    %v4339 = vld [vmem:[#allocation6 + $0x38] sm:$0xf]
    %v4340 = vld [vmem:[#allocation6 + $0x3c] sm:$0xf]
    %v4341 = vld [vmem:[#allocation6 + $0x40] sm:$0xf]
    %v4342 = vld [vmem:[#allocation6 + $0x44] sm:$0xf]
    %v4343 = vld [vmem:[#allocation6 + $0x48] sm:$0xf]
    %v4344 = vld [vmem:[#allocation6 + $0x4c] sm:$0xf]
    %v4345 = vld [vmem:[#allocation6 + $0x50] sm:$0xf]
    %v4346 = vld [vmem:[#allocation6 + $0x54] sm:$0xf]
    %v4347 = vld [vmem:[#allocation6 + $0x58] sm:$0xf]
    %v4348 = vld [vmem:[#allocation6 + $0x5c] sm:$0xf]
    %v4349 = vld [vmem:[#allocation6 + $0x60] sm:$0xf]
    %v4350 = vld [vmem:[#allocation6 + $0x64] sm:$0xf]
    %v4351 = vld [vmem:[#allocation6 + $0x68] sm:$0xf]
    %v4352 = vld [vmem:[#allocation6 + $0x6c] sm:$0xf]
    %v4353 = vld [vmem:[#allocation6 + $0x70] sm:$0xf]
    %v4354 = vld [vmem:[#allocation6 + $0x74] sm:$0xf]
    %v4355 = vld [vmem:[#allocation6 + $0x78] sm:$0xf]
    %v4356 = vld [vmem:[#allocation6 + $0x7c] sm:$0xf]
    %v4357 = vld [vmem:[#allocation7 + $0x7] sm:$0x1]
    %v4359 = vlaneseq
    %v4360 = vshrl.u32 %v4359, 7
    %v4361 = vsub.s32 0, %v4360
    %v4362 = vrot.slane %v4357, %v4361
    %v4396 = vunpack.c.l.b16 %v4325
    %v4397 = vunpack.c.l.b16 %v4326
    %v4398 = vunpack.c.l.b16 %v4327
    %v4399 = vunpack.c.l.b16 %v4328
    %v4400 = vunpack.c.l.b16 %v4329
    %v4401 = vunpack.c.l.b16 %v4330
    %v4402 = vunpack.c.l.b16 %v4331
    %v4403 = vunpack.c.l.b16 %v4332
    %v4404 = vunpack.c.l.b16 %v4333
    %v4405 = vunpack.c.l.b16 %v4334
    %v4406 = vunpack.c.l.b16 %v4335
    %v4407 = vunpack.c.l.b16 %v4336
    %v4408 = vunpack.c.l.b16 %v4337
    %v4409 = vunpack.c.l.b16 %v4338
    %v4410 = vunpack.c.l.b16 %v4339
    %v4411 = vunpack.c.l.b16 %v4340
    %v4412 = vunpack.c.l.b16 %v4341
    %v4413 = vunpack.c.l.b16 %v4342
    %v4414 = vunpack.c.l.b16 %v4343
    %v4415 = vunpack.c.l.b16 %v4344
    %v4416 = vunpack.c.l.b16 %v4345
    %v4417 = vunpack.c.l.b16 %v4346
    %v4418 = vunpack.c.l.b16 %v4347
    %v4419 = vunpack.c.l.b16 %v4348
    %v4420 = vunpack.c.l.b16 %v4349
    %v4421 = vunpack.c.l.b16 %v4350
    %v4422 = vunpack.c.l.b16 %v4351
    %v4423 = vunpack.c.l.b16 %v4352
    %v4424 = vunpack.c.l.b16 %v4353
    %v4425 = vunpack.c.l.b16 %v4354
    %v4426 = vunpack.c.l.b16 %v4355
    %v4427 = vunpack.c.l.b16 %v4356
    %v4428 = vpack.c.b16 %v4397, %v4396
    %v4429 = vpack.c.b16 %v4399, %v4398
    %v4430 = vpack.c.b16 %v4401, %v4400
    %v4431 = vpack.c.b16 %v4403, %v4402
    %v4432 = vpack.c.b16 %v4405, %v4404
    %v4433 = vpack.c.b16 %v4407, %v4406
    %v4434 = vpack.c.b16 %v4409, %v4408
    %v4435 = vpack.c.b16 %v4411, %v4410
    %v4436 = vpack.c.b16 %v4413, %v4412
    %v4437 = vpack.c.b16 %v4415, %v4414
    %v4438 = vpack.c.b16 %v4417, %v4416
    %v4439 = vpack.c.b16 %v4419, %v4418
    %v4440 = vpack.c.b16 %v4421, %v4420
    %v4441 = vpack.c.b16 %v4423, %v4422
    %v4442 = vpack.c.b16 %v4425, %v4424
    %v4443 = vpack.c.b16 %v4427, %v4426
    %4460 = vmatprep.subr.bf16.mxu0 0
    %4461 = vmatpush1.bf16.msra.mxu0 %v4435
    %4462 = vmatprep.subr.bf16.mxu0 0
    %4463 = vmatpush1.bf16.msra.mxu0 %v4434
    %4464 = vmatprep.subr.bf16.mxu0 0
    %4465 = vmatpush1.bf16.msra.mxu0 %v4433
    %4466 = vmatprep.subr.bf16.mxu0 0
    %4467 = vmatpush1.bf16.msra.mxu0 %v4432
    %4468 = vmatprep.subr.bf16.mxu0 0
    %4469 = vmatpush1.bf16.msra.mxu0 %v4431
    %4470 = vmatprep.subr.bf16.mxu0 0
    %4471 = vmatpush1.bf16.msra.mxu0 %v4430
    %4472 = vmatprep.subr.bf16.mxu0 0
    %4473 = vmatpush1.bf16.msra.mxu0 %v4429
    %4474 = vmatprep.subr.bf16.mxu0 0
    %4475 = vmatpush1.bf16.msra.mxu0 %v4428
    %4476 = vmatprep.subr.bf16.mxu0 0
    %4477 = vmatpush2.bf16.msra.mxu0 %v4443
    %4478 = vmatprep.subr.bf16.mxu0 0
    %4479 = vmatpush2.bf16.msra.mxu0 %v4442
    %4480 = vmatprep.subr.bf16.mxu0 0
    %4481 = vmatpush2.bf16.msra.mxu0 %v4441
    %4482 = vmatprep.subr.bf16.mxu0 0
    %4483 = vmatpush2.bf16.msra.mxu0 %v4440
    %4484 = vmatprep.subr.bf16.mxu0 0
    %4485 = vmatpush2.bf16.msra.mxu0 %v4439
    %4486 = vmatprep.subr.bf16.mxu0 0
    %4487 = vmatpush2.bf16.msra.mxu0 %v4438
    %4488 = vmatprep.subr.bf16.mxu0 0
    %4489 = vmatpush2.bf16.msra.mxu0 %v4437
    %4490 = vmatprep.subr.bf16.mxu0 0
    %4491 = vmatpush2.bf16.msra.mxu0 %v4436
    %4492 = vmatprep.mubr.bf16.mxu0 %v4324
    %4493 = vmatmul.mubr.bf16.gmra.mxu0 %v4323
    %v4494 = vpop.f32.mrf.mxu0
    %v4495 = vadd.f32 %v4362, %v4494
    %v4496 = vpop.f32.mrf.mxu0
    %v4497 = vpop.f32.mrf.mxu0
    %v4498 = vadd.f32 %v4362, %v4497
    %v4499 = vpop.f32.mrf.mxu0
    %4500 = vdwg.mxu0
    %4501 = vst [vmem:[%s5] sm:$0xff] %v4495
    %4502 = vst [vmem:[%s5 + $0x8] sm:$0xff] %v4498
    // Predicated region
    $region38: #{actor_critic_forward.1} parent=1 // pred_check
      _
    $region39: #{actor_critic_forward.1} parent=1 // pred_check_branch
      %4504 = sbr.rel (0) target = $region41
    $region40: #{actor_critic_forward.1} parent=1 // pred_region
      _
    $region41: #{actor_critic_forward.1} parent=1 // pred_fallthru
      _
    // Predicated region
    $region42: #{actor_critic_forward.1} parent=1 // pred_check
      _
    $region43: #{actor_critic_forward.1} parent=1 // pred_check_branch
      %4506 = sbr.rel (0) target = $region45
    $region44: #{actor_critic_forward.1} parent=1 // pred_region
      _
    $region45: #{actor_critic_forward.1} parent=1 // pred_fallthru
      _
    %4507 = vsyncpa [#allocation3], 1
    %4508 = vsyncpa [#allocation5], 1
    %4509 = vsyncpa [#allocation8], 1

</llo_original>
